<compile_context>
chip_gen: v6e
topology: v6e:2x2x1
jax: 0.10.0
libtpu: 0.0.40
codegen_flags: <defaults>
</compile_context>

<pallas_src>
import functools

import jax
import jax.numpy as jnp
from jax import lax
from jax.experimental import pallas as pl
from jax.experimental.pallas import tpu as pltpu

BN_EPS = 1e-5     # PyTorch BatchNorm2d default eps


# ------------------------------------------------------------------ tile picking

def _pick_row_tile(h, w, n=1, min_m=256, max_m=2048, min_steps=4):
    """Row tile th dividing h.  Prefer th*w in [min_m, max_m] so the matmul M dim
    fills the 256-wide MXU (v6e/v7x); among those prefer the biggest tile that
    still leaves n*(h//th) >= min_steps grid steps (pipelining / 2 TCs)."""
    divs = [t for t in range(1, h + 1) if h % t == 0]
    filled = [t for t in divs if min_m <= t * w <= max_m]
    if filled:
        with_steps = [t for t in filled if n * (h // t) >= min_steps]
        return max(with_steps) if with_steps else max(filled)
    small = [t for t in divs if t * w <= max_m]
    return max(small) if small else 1


def _pick_ew_tile(nrows, row_elems, max_elems=64 * 1024, min_steps=4):
    """Row tile for the elementwise residual kernel (arrays are (nrows, W, C))."""
    cands = [t for t in range(1, nrows + 1)
             if nrows % t == 0 and t * row_elems <= max_elems]
    if not cands:
        return 1
    good = [t for t in cands if nrows // t >= min_steps]
    return max(good) if good else max(cands)


# ---------------------------------------------------------------- Pallas kernels

def _conv_bn_stats_kernel(x_ref, w_ref, bias_ref, scale_ref, shift_ref, alpha_ref,
                          y_ref, st_ref, *, th, height, width, cin, cout):
    # x_ref    : (H, W, Cin)  raw producer activation, resident per image
    # w_ref    : (3, 3*Cin, Cout) bf16 weights, resident
    # bias_ref : (1, 1, Cout) f32 constant context-channel bias
    # scale/shift/alpha_ref: (1, 1, Cin) f32 fused prologue (BN-apply + PReLU of
    #            the producer; identity = (1, 0, 1) for a raw block input)
    # y_ref    : (1, th, W, Cout) bf16 conv output tile
    # st_ref   : (1, 1, 2, Cout) f32 per-tile [sum, sum_of_squares]
    i = pl.program_id(1)
    rstart = pl.multiple_of(i * th, th)

    # --- gather the (th+2)-row window with reflect padding along H ------------
    top_idx = jnp.abs(rstart - 1)                                  # reflect(-1)=1
    bot_idx = jnp.minimum(rstart + th, 2 * (height - 1) - (rstart + th))
    top = x_ref[pl.ds(top_idx, 1)]                                 # (1, W, C)
    mid = x_ref[pl.ds(rstart, th)]                                 # (th, W, C)
    bot = x_ref[pl.ds(bot_idx, 1)]                                 # (1, W, C)
    win = jnp.concatenate([top, mid, bot], axis=0).astype(jnp.float32)

    # --- fused producer BN-apply + PReLU (pointwise, so it commutes with pad) --
    t = win * scale_ref[...] + shift_ref[...]
    wn = jnp.where(t >= 0, t, alpha_ref[...] * t).astype(jnp.bfloat16)

    # --- reflect pad along W, expressed as kw-shifted views concat'd on channels
    left = jnp.concatenate([wn[:, 1:2, :], wn[:, :width - 1, :]], axis=1)
    right = jnp.concatenate([wn[:, 1:, :], wn[:, width - 2:width - 1, :]], axis=1)
    xcat = jnp.concatenate([left, wn, right], axis=-1)             # (th+2, W, 3C)

    # --- 3 MXU dots (K = 3*C each); kh row-slices of xcat are cheap major slices
    acc = jnp.zeros((th * width, cout), jnp.float32)
    for kh in range(3):
        a = xcat[kh:kh + th].reshape(th * width, 3 * cin)
        acc = acc + jnp.dot(a, w_ref[kh], preferred_element_type=jnp.float32)
    acc = acc + bias_ref[0]                                        # context bias

    y_ref[...] = acc.reshape(1, th, width, cout).astype(y_ref.dtype)
    ssum = jnp.sum(acc, axis=0, keepdims=True)
    ssq = jnp.sum(acc * acc, axis=0, keepdims=True)
    st_ref[...] = jnp.concatenate([ssum, ssq], axis=0).reshape(1, 1, 2, cout)


def _bn_residual_kernel(y_ref, scale_ref, shift_ref, res_ref, o_ref):
    t = y_ref[...].astype(jnp.float32) * scale_ref[...] + shift_ref[...]
    o_ref[...] = (t + res_ref[...].astype(jnp.float32)).astype(o_ref.dtype)


# ---------------------------------------------------------------- kernel wrappers

def conv3x3_ctx_bn(x_nhwc, wmat, bias_row, scale_row, shift_row, alpha_row, th):
    """[BN-apply + PReLU prologue] + ReflectionPad(1) + Conv2d(C+nd, C, 3,
    bias=False) with the constant context channels folded into `bias_row`,
    fused with BatchNorm batch-statistic accumulation.  Output is bf16."""
    N, H, W, C = x_nhwc.shape
    COUT = wmat.shape[-1]
    assert H % th == 0
    T = H // th

    # Honest VMEM budget: 2x for double-buffered specs; must stay well under
    # v5e's 16 MiB default scoped VMEM (and v7x's 64 MiB physical VMEM).
    est = 2 * (H * W * C * x_nhwc.dtype.itemsize       # resident activation
               + wmat.size * 2                         # bf16 weights
               + th * W * COUT * 2                     # y block (bf16)
               + 2 * COUT * 4 + 4 * C * 4)             # stats + small rows
    assert est <= 12 * 1024 * 1024, "feature map too large for resident-activation conv"
    # TODO(synk): for larger feature maps switch to a manually double-buffered
    # (th+2)-row halo window (memory_space=pl.ANY + pltpu.make_async_copy)
    # instead of whole-image residency.

    kern = functools.partial(_conv_bn_stats_kernel, th=th, height=H, width=W,
                             cin=C, cout=COUT)
    y, stats = pl.pallas_call(
        kern,
        out_shape=(jax.ShapeDtypeStruct((N, H, W, COUT), jnp.bfloat16),
                   jax.ShapeDtypeStruct((N, T, 2, COUT), jnp.float32)),
        grid=(N, T),
        in_specs=[
            pl.BlockSpec((pl.Squeezed(), H, W, C), lambda n, i: (n, 0, 0, 0)),
            pl.BlockSpec((3, 3 * C, COUT), lambda n, i: (0, 0, 0)),
            pl.BlockSpec((1, 1, COUT), lambda n, i: (0, 0, 0)),
            pl.BlockSpec((1, 1, C), lambda n, i: (0, 0, 0)),
            pl.BlockSpec((1, 1, C), lambda n, i: (0, 0, 0)),
            pl.BlockSpec((1, 1, C), lambda n, i: (0, 0, 0)),
        ],
        out_specs=(
            pl.BlockSpec((1, th, W, COUT), lambda n, i: (n, i, 0, 0)),
            pl.BlockSpec((1, 1, 2, COUT), lambda n, i: (n, i, 0, 0)),
        ),
        compiler_params=pltpu.CompilerParams(
            dimension_semantics=("parallel", "parallel")),
    )(x_nhwc, wmat, bias_row, scale_row, shift_row, alpha_row)
    return y, stats


def bn_residual(y, scale, shift, res, tr, out_dtype):
    # y, res: (N*H, W, C); scale/shift: (1, 1, C)
    NH, W, C = y.shape
    assert NH % tr == 0
    return pl.pallas_call(
        _bn_residual_kernel,
        out_shape=jax.ShapeDtypeStruct((NH, W, C), out_dtype),
        grid=(NH // tr,),
        in_specs=[pl.BlockSpec((tr, W, C), lambda i: (i, 0, 0)),
                  pl.BlockSpec((1, 1, C), lambda i: (0, 0, 0)),
                  pl.BlockSpec((1, 1, C), lambda i: (0, 0, 0)),
                  pl.BlockSpec((tr, W, C), lambda i: (i, 0, 0))],
        out_specs=pl.BlockSpec((tr, W, C), lambda i: (i, 0, 0)),
        compiler_params=pltpu.CompilerParams(dimension_semantics=("parallel",)),
    )(y, scale, shift, res)


# ---------------------------------------------------------------- JAX glue

def _bn_scale_shift(stats, m, gamma, beta):
    # BatchNorm2d in training mode: batch statistics, biased variance.
    # Note: E[x^2]-E[x]^2 in f32 (sums accumulated in-kernel from the f32 conv
    # accumulator); adequate at these activation scales, clamped at 0.
    ssum = jnp.sum(stats[:, :, 0, :], axis=(0, 1))
    ssq = jnp.sum(stats[:, :, 1, :], axis=(0, 1))
    mean = ssum / m
    var = jnp.maximum(ssq / m - mean * mean, 0.0)
    invstd = lax.rsqrt(var + BN_EPS)
    scale = gamma * invstd
    shift = beta - mean * scale
    return scale.reshape(1, 1, -1), shift.reshape(1, 1, -1)


def resnet_block(x_nhwc, ctx, p, th, tr, final):
    N, H, W, C = x_nhwc.shape
    M = N * H * W
    ident = jnp.ones((1, 1, C), jnp.float32)      # identity prologue rows
    zero = jnp.zeros((1, 1, C), jnp.float32)

    # ReflectionPad -> Conv(dim+nd, dim, 3, bias=False) -> (BN stats)
    bias1 = (p["wctx1"] @ ctx).reshape(1, 1, -1)
    y1, st1 = conv3x3_ctx_bn(x_nhwc, p["wmat1"], bias1, ident, zero, ident, th)
    sc1, sh1 = _bn_scale_shift(st1, M, p["gamma1"], p["beta1"])

    # BN1-apply + PReLU fused into conv2's input path; conv2 + (BN stats)
    bias2 = (p["wctx2"] @ ctx).reshape(1, 1, -1)
    y2, st2 = conv3x3_ctx_bn(y1, p["wmat2"], bias2, sc1, sh1, p["alpha_row"], th)
    sc2, sh2 = _bn_scale_shift(st2, M, p["gamma2"], p["beta2"])

    # BN2-apply + residual add of the block input (bf16 between blocks).
    out = bn_residual(y2.reshape(N * H, W, C), sc2, sh2,
                      x_nhwc.reshape(N * H, W, C), tr,
                      jnp.float32 if final else jnp.bfloat16)
    return out.reshape(N, H, W, C)


def resnet_gen_shared(x_nchw, domain, params, n_domains):
    # TODO(synk): gpu_ids / nn.parallel.data_parallel dispatch has no Pallas
    # equivalent; single-device path only (use_dropout=False so no Dropout).
    x = jnp.transpose(x_nchw, (0, 2, 3, 1)).astype(jnp.float32)    # NCHW -> NHWC
    N, H, W, C = x.shape
    th = _pick_row_tile(H, W, N)
    tr = _pick_ew_tile(N * H, W * C)
    # SequentialContext.prepare_context: channels filled with -1, domain channel +1.
    ctx = 2.0 * jax.nn.one_hot(domain, n_domains, dtype=jnp.float32) - 1.0
    nb = len(params["blocks"])
    for bi, p in enumerate(params["blocks"]):
        x = resnet_block(x, ctx, p, th, tr, final=(bi == nb - 1))
    return jnp.transpose(x, (0, 3, 1, 2)).astype(jnp.float32)      # back to NCHW


def _prep_conv_weight(w_oihw, c):
    # PyTorch (Cout, Cin, 3, 3); activation part -> (kh, kw, C, Cout) -> (3, 3*C, Cout)
    # K ordered (kw, c) to match the in-kernel channel-concat of kw-shifted windows.
    wk = jnp.transpose(w_oihw[:, :c, :, :], (2, 3, 1, 0))
    return wk.reshape(3, 3 * c, w_oihw.shape[0]).astype(jnp.bfloat16)


def init_params(key, dim, n_domains, n_blocks):
    blocks = []
    cin = dim + n_domains
    for b in range(n_blocks):
        kb = jax.random.fold_in(key, b)
        k1, k2, k3, k4, k5, k6 = jax.random.split(kb, 6)
        w1 = 0.05 * jax.random.normal(k1, (dim, cin, 3, 3), jnp.float32)
        w2 = 0.05 * jax.random.normal(k4, (dim, cin, 3, 3), jnp.float32)
        blocks.append(dict(
            wmat1=_prep_conv_weight(w1, dim),
            wctx1=jnp.sum(w1[:, dim:, :, :], axis=(2, 3)),       # (Cout, nd)
            gamma1=1.0 + 0.1 * jax.random.normal(k2, (dim,), jnp.float32),
            beta1=0.1 * jax.random.normal(k3, (dim,), jnp.float32),
            wmat2=_prep_conv_weight(w2, dim),
            wctx2=jnp.sum(w2[:, dim:, :, :], axis=(2, 3)),
            gamma2=1.0 + 0.1 * jax.random.normal(k5, (dim,), jnp.float32),
            beta2=0.1 * jax.random.normal(k6, (dim,), jnp.float32),
            alpha_row=jnp.full((1, 1, dim), 0.25, jnp.float32),  # nn.PReLU() default
        ))
    return {"blocks": blocks}


if __name__ == "__main__":
    NGF = 32
    N_DOMAINS = 3
    N_BLOCKS = 2
    DIM = NGF * (2 ** 2)          # n_downsampling = 2 -> mult = 4 -> dim = ngf*4
    # batch must be 1: SequentialContext concatenates a batch-1 context tensor.
    N, H, W = 1, 16, 16

    key = jax.random.PRNGKey(0)
    kx, kp = jax.random.split(key)
    x = jax.random.normal(kx, (N, DIM, H, W), jnp.float32)   # NCHW, like PyTorch
    params = init_params(kp, DIM, N_DOMAINS, N_BLOCKS)
    domain = jnp.int32(1)

    fwd = jax.jit(functools.partial(resnet_gen_shared, n_domains=N_DOMAINS))
    out = fwd(x, domain, params)
    out = jax.block_until_ready(out)

    assert out.shape == (N, DIM, H, W)
    assert bool(jnp.all(jnp.isfinite(out)))
    print("KERNEL_OK")
</pallas_src>

<mosaic_0001>
module attributes {stable_mosaic.version = 11 : i64} {
  func.func @_conv_bn_stats_kernel(%arg0: i32, %arg1: i32, %arg2: memref<1x16x16x128xf32, #tpu.memory_space<vmem>>, %arg3: memref<3x384x128xbf16, #tpu.memory_space<vmem>>, %arg4: memref<1x1x128xf32, #tpu.memory_space<vmem>>, %arg5: memref<1x1x128xf32, #tpu.memory_space<vmem>>, %arg6: memref<1x1x128xf32, #tpu.memory_space<vmem>>, %arg7: memref<1x1x128xf32, #tpu.memory_space<vmem>>, %arg8: memref<1x16x16x128xbf16, #tpu.memory_space<vmem>>, %arg9: memref<1x1x2x128xf32, #tpu.memory_space<vmem>>) attributes {dimension_semantics = [#tpu.dimension_semantics<parallel>, #tpu.dimension_semantics<parallel>], iteration_bounds = array<i64: 1, 1>, scalar_prefetch = 0 : i64, scratch_operands = 0 : i64, tpu.core_type = #tpu.core_type<tc>, window_params = [{transform_indices = @transform_0, window_bounds = array<i64: 1, 16, 16, 128>}, {pipeline_mode = #tpu.pipeline_mode<synchronous>, transform_indices = @transform_1, window_bounds = array<i64: 3, 384, 128>}, {pipeline_mode = #tpu.pipeline_mode<synchronous>, transform_indices = @transform_2, window_bounds = array<i64: 1, 1, 128>}, {pipeline_mode = #tpu.pipeline_mode<synchronous>, transform_indices = @transform_3, window_bounds = array<i64: 1, 1, 128>}, {pipeline_mode = #tpu.pipeline_mode<synchronous>, transform_indices = @transform_4, window_bounds = array<i64: 1, 1, 128>}, {pipeline_mode = #tpu.pipeline_mode<synchronous>, transform_indices = @transform_5, window_bounds = array<i64: 1, 1, 128>}, {transform_indices = @transform_6, window_bounds = array<i64: 1, 16, 16, 128>}, {transform_indices = @transform_7, window_bounds = array<i64: 1, 1, 2, 128>}]} {
    %c16_i32 = arith.constant 16 : i32
    %0 = arith.muli %arg1, %c16_i32 : i32
    %1 = tpu.assume_multiple %0, 16 : i32
    %c1_i32 = arith.constant 1 : i32
    %2 = arith.subi %1, %c1_i32 : i32
    %3 = math.absi %2 : i32
    %c16_i32_0 = arith.constant 16 : i32
    %4 = arith.addi %1, %c16_i32_0 : i32
    %c16_i32_1 = arith.constant 16 : i32
    %5 = arith.addi %1, %c16_i32_1 : i32
    %c30_i32 = arith.constant 30 : i32
    %6 = arith.subi %c30_i32, %5 : i32
    %7 = arith.minsi %4, %6 : i32
    %c0 = arith.constant 0 : index
    %8 = arith.index_cast %3 : i32 to index
    %c0_2 = arith.constant 0 : index
    %c0_3 = arith.constant 0 : index
    %9 = vector.load %arg2[%c0, %8, %c0_2, %c0_3] : memref<1x16x16x128xf32, #tpu.memory_space<vmem>>, vector<1x1x16x128xf32>
    %10 = vector.shape_cast %9 : vector<1x1x16x128xf32> to vector<1x16x128xf32>
    %c0_4 = arith.constant 0 : index
    %11 = arith.index_cast %1 : i32 to index
    %c0_5 = arith.constant 0 : index
    %c0_6 = arith.constant 0 : index
    %12 = vector.load %arg2[%c0_4, %11, %c0_5, %c0_6] : memref<1x16x16x128xf32, #tpu.memory_space<vmem>>, vector<1x16x16x128xf32>
    %13 = vector.shape_cast %12 : vector<1x16x16x128xf32> to vector<16x16x128xf32>
    %c0_7 = arith.constant 0 : index
    %14 = arith.index_cast %7 : i32 to index
    %c0_8 = arith.constant 0 : index
    %c0_9 = arith.constant 0 : index
    %15 = vector.load %arg2[%c0_7, %14, %c0_8, %c0_9] : memref<1x16x16x128xf32, #tpu.memory_space<vmem>>, vector<1x1x16x128xf32>
    %16 = vector.shape_cast %15 : vector<1x1x16x128xf32> to vector<1x16x128xf32>
    %17 = tpu.concatenate %10, %13, %16 in 0 : vector<1x16x128xf32>, vector<16x16x128xf32>, vector<1x16x128xf32> -> vector<18x16x128xf32>
    %c0_10 = arith.constant 0 : index
    %c0_11 = arith.constant 0 : index
    %c0_12 = arith.constant 0 : index
    %18 = vector.load %arg5[%c0_10, %c0_11, %c0_12] : memref<1x1x128xf32, #tpu.memory_space<vmem>>, vector<1x1x128xf32>
    %19 = vector.broadcast %18 : vector<1x1x128xf32> to vector<18x16x128xf32>
    %20 = arith.mulf %17, %19 : vector<18x16x128xf32>
    %c0_13 = arith.constant 0 : index
    %c0_14 = arith.constant 0 : index
    %c0_15 = arith.constant 0 : index
    %21 = vector.load %arg6[%c0_13, %c0_14, %c0_15] : memref<1x1x128xf32, #tpu.memory_space<vmem>>, vector<1x1x128xf32>
    %22 = vector.broadcast %21 : vector<1x1x128xf32> to vector<18x16x128xf32>
    %23 = arith.addf %20, %22 : vector<18x16x128xf32>
    %cst = arith.constant 0.000000e+00 : f32
    %24 = vector.broadcast %cst : f32 to vector<18x16x128xf32>
    %25 = arith.cmpf oge, %23, %24 : vector<18x16x128xf32>
    %c0_16 = arith.constant 0 : index
    %c0_17 = arith.constant 0 : index
    %c0_18 = arith.constant 0 : index
    %26 = vector.load %arg7[%c0_16, %c0_17, %c0_18] : memref<1x1x128xf32, #tpu.memory_space<vmem>>, vector<1x1x128xf32>
    %27 = vector.broadcast %26 : vector<1x1x128xf32> to vector<18x16x128xf32>
    %28 = arith.mulf %27, %23 : vector<18x16x128xf32>
    %29 = arith.select %25, %23, %28 : vector<18x16x128xi1>, vector<18x16x128xf32>
    %30 = arith.truncf %29 : vector<18x16x128xf32> to vector<18x16x128xbf16>
    %31 = vector.extract_strided_slice %30 {offsets = [0, 1, 0], sizes = [18, 1, 128], strides = [1, 1, 1]} : vector<18x16x128xbf16> to vector<18x1x128xbf16>
    %32 = vector.extract_strided_slice %30 {offsets = [0, 0, 0], sizes = [18, 15, 128], strides = [1, 1, 1]} : vector<18x16x128xbf16> to vector<18x15x128xbf16>
    %33 = tpu.concatenate %31, %32 in 1 : vector<18x1x128xbf16>, vector<18x15x128xbf16> -> vector<18x16x128xbf16>
    %34 = vector.extract_strided_slice %30 {offsets = [0, 1, 0], sizes = [18, 15, 128], strides = [1, 1, 1]} : vector<18x16x128xbf16> to vector<18x15x128xbf16>
    %35 = vector.extract_strided_slice %30 {offsets = [0, 14, 0], sizes = [18, 1, 128], strides = [1, 1, 1]} : vector<18x16x128xbf16> to vector<18x1x128xbf16>
    %36 = tpu.concatenate %34, %35 in 1 : vector<18x15x128xbf16>, vector<18x1x128xbf16> -> vector<18x16x128xbf16>
    %37 = tpu.concatenate %33, %30, %36 in 2 : vector<18x16x128xbf16>, vector<18x16x128xbf16>, vector<18x16x128xbf16> -> vector<18x16x384xbf16>
    %cst_19 = arith.constant 0.000000e+00 : f32
    %38 = vector.broadcast %cst_19 : f32 to vector<256x128xf32>
    %39 = vector.extract_strided_slice %37 {offsets = [0, 0, 0], sizes = [16, 16, 384], strides = [1, 1, 1]} : vector<18x16x384xbf16> to vector<16x16x384xbf16>
    %40 = vector.shape_cast %39 : vector<16x16x384xbf16> to vector<256x384xbf16>
    %c0_20 = arith.constant 0 : index
    %c0_21 = arith.constant 0 : index
    %c0_22 = arith.constant 0 : index
    %41 = vector.load %arg3[%c0_20, %c0_21, %c0_22] : memref<3x384x128xbf16, #tpu.memory_space<vmem>>, vector<1x384x128xbf16>
    %42 = vector.shape_cast %41 : vector<1x384x128xbf16> to vector<384x128xbf16>
    %cst_23 = arith.constant dense<0.000000e+00> : vector<256x128xf32>
    %43 = tpu.matmul %40, %42, %cst_23 {dimension_numbers = #tpu.dot_dimension_numbers<[1], [0], [0], [1], [0, 0, 1, 1], [], []>} : vector<256x384xbf16>, vector<384x128xbf16>, vector<256x128xf32> -> vector<256x128xf32>
    %44 = arith.addf %38, %43 : vector<256x128xf32>
    %45 = vector.extract_strided_slice %37 {offsets = [1, 0, 0], sizes = [16, 16, 384], strides = [1, 1, 1]} : vector<18x16x384xbf16> to vector<16x16x384xbf16>
    %46 = vector.shape_cast %45 : vector<16x16x384xbf16> to vector<256x384xbf16>
    %c1 = arith.constant 1 : index
    %c0_24 = arith.constant 0 : index
    %c0_25 = arith.constant 0 : index
    %47 = vector.load %arg3[%c1, %c0_24, %c0_25] : memref<3x384x128xbf16, #tpu.memory_space<vmem>>, vector<1x384x128xbf16>
    %48 = vector.shape_cast %47 : vector<1x384x128xbf16> to vector<384x128xbf16>
    %cst_26 = arith.constant dense<0.000000e+00> : vector<256x128xf32>
    %49 = tpu.matmul %46, %48, %cst_26 {dimension_numbers = #tpu.dot_dimension_numbers<[1], [0], [0], [1], [0, 0, 1, 1], [], []>} : vector<256x384xbf16>, vector<384x128xbf16>, vector<256x128xf32> -> vector<256x128xf32>
    %50 = arith.addf %44, %49 : vector<256x128xf32>
    %51 = vector.extract_strided_slice %37 {offsets = [2, 0, 0], sizes = [16, 16, 384], strides = [1, 1, 1]} : vector<18x16x384xbf16> to vector<16x16x384xbf16>
    %52 = vector.shape_cast %51 : vector<16x16x384xbf16> to vector<256x384xbf16>
    %c2 = arith.constant 2 : index
    %c0_27 = arith.constant 0 : index
    %c0_28 = arith.constant 0 : index
    %53 = vector.load %arg3[%c2, %c0_27, %c0_28] : memref<3x384x128xbf16, #tpu.memory_space<vmem>>, vector<1x384x128xbf16>
    %54 = vector.shape_cast %53 : vector<1x384x128xbf16> to vector<384x128xbf16>
    %cst_29 = arith.constant dense<0.000000e+00> : vector<256x128xf32>
    %55 = tpu.matmul %52, %54, %cst_29 {dimension_numbers = #tpu.dot_dimension_numbers<[1], [0], [0], [1], [0, 0, 1, 1], [], []>} : vector<256x384xbf16>, vector<384x128xbf16>, vector<256x128xf32> -> vector<256x128xf32>
    %56 = arith.addf %50, %55 : vector<256x128xf32>
    %c0_30 = arith.constant 0 : index
    %c0_31 = arith.constant 0 : index
    %c0_32 = arith.constant 0 : index
    %57 = vector.load %arg4[%c0_30, %c0_31, %c0_32] : memref<1x1x128xf32, #tpu.memory_space<vmem>>, vector<1x1x128xf32>
    %58 = vector.shape_cast %57 : vector<1x1x128xf32> to vector<1x128xf32>
    %59 = vector.broadcast %58 : vector<1x128xf32> to vector<256x128xf32>
    %60 = arith.addf %56, %59 : vector<256x128xf32>
    %61 = vector.shape_cast %60 : vector<256x128xf32> to vector<1x16x16x128xf32>
    %62 = arith.truncf %61 : vector<1x16x16x128xf32> to vector<1x16x16x128xbf16>
    %c0_33 = arith.constant 0 : index
    %c0_34 = arith.constant 0 : index
    %c0_35 = arith.constant 0 : index
    %c0_36 = arith.constant 0 : index
    %63 = vector.load %arg8[%c0_33, %c0_34, %c0_35, %c0_36] : memref<1x16x16x128xbf16, #tpu.memory_space<vmem>>, vector<1x16x16x128xbf16>
    tpu.vector_store %arg8[%c0_33, %c0_34, %c0_35, %c0_36], %62 {strides = array<i32>} : memref<1x16x16x128xbf16, #tpu.memory_space<vmem>>, vector<1x16x16x128xbf16>,
    %cst_37 = arith.constant dense<0.000000e+00> : vector<128xf32>
    %64 = vector.multi_reduction <add>, %60, %cst_37 [0] : vector<256x128xf32> to vector<128xf32>
    %65 = vector.shape_cast %64 : vector<128xf32> to vector<1x128xf32>
    %66 = arith.mulf %60, %60 : vector<256x128xf32>
    %cst_38 = arith.constant dense<0.000000e+00> : vector<128xf32>
    %67 = vector.multi_reduction <add>, %66, %cst_38 [0] : vector<256x128xf32> to vector<128xf32>
    %68 = vector.shape_cast %67 : vector<128xf32> to vector<1x128xf32>
    %69 = tpu.concatenate %65, %68 in 0 : vector<1x128xf32>, vector<1x128xf32> -> vector<2x128xf32>
    %70 = vector.shape_cast %69 : vector<2x128xf32> to vector<1x1x2x128xf32>
    %c0_39 = arith.constant 0 : index
    %c0_40 = arith.constant 0 : index
    %c0_41 = arith.constant 0 : index
    %c0_42 = arith.constant 0 : index
    %71 = vector.load %arg9[%c0_39, %c0_40, %c0_41, %c0_42] : memref<1x1x2x128xf32, #tpu.memory_space<vmem>>, vector<1x1x2x128xf32>
    tpu.vector_store %arg9[%c0_39, %c0_40, %c0_41, %c0_42], %70 {strides = array<i32>} : memref<1x1x2x128xf32, #tpu.memory_space<vmem>>, vector<1x1x2x128xf32>,
    return
  }
  func.func @transform_0(%arg0: i32, %arg1: i32) -> (i32, i32, i32, i32) {
    %c0_i32 = arith.constant 0 : i32
    %c0_i32_0 = arith.constant 0 : i32
    %c0_i32_1 = arith.constant 0 : i32
    %c0_i32_2 = arith.constant 0 : i32
    return %arg0, %c0_i32, %c0_i32_0, %c0_i32_1 : i32, i32, i32, i32
  }
  func.func @transform_1(%arg0: i32, %arg1: i32) -> (i32, i32, i32) {
    %c0_i32 = arith.constant 0 : i32
    %c0_i32_0 = arith.constant 0 : i32
    %c0_i32_1 = arith.constant 0 : i32
    %c0_i32_2 = arith.constant 0 : i32
    return %c0_i32, %c0_i32_0, %c0_i32_1 : i32, i32, i32
  }
  func.func @transform_2(%arg0: i32, %arg1: i32) -> (i32, i32, i32) {
    %c0_i32 = arith.constant 0 : i32
    %c0_i32_0 = arith.constant 0 : i32
    %c0_i32_1 = arith.constant 0 : i32
    %c0_i32_2 = arith.constant 0 : i32
    return %c0_i32, %c0_i32_0, %c0_i32_1 : i32, i32, i32
  }
  func.func @transform_3(%arg0: i32, %arg1: i32) -> (i32, i32, i32) {
    %c0_i32 = arith.constant 0 : i32
    %c0_i32_0 = arith.constant 0 : i32
    %c0_i32_1 = arith.constant 0 : i32
    %c0_i32_2 = arith.constant 0 : i32
    return %c0_i32, %c0_i32_0, %c0_i32_1 : i32, i32, i32
  }
  func.func @transform_4(%arg0: i32, %arg1: i32) -> (i32, i32, i32) {
    %c0_i32 = arith.constant 0 : i32
    %c0_i32_0 = arith.constant 0 : i32
    %c0_i32_1 = arith.constant 0 : i32
    %c0_i32_2 = arith.constant 0 : i32
    return %c0_i32, %c0_i32_0, %c0_i32_1 : i32, i32, i32
  }
  func.func @transform_5(%arg0: i32, %arg1: i32) -> (i32, i32, i32) {
    %c0_i32 = arith.constant 0 : i32
    %c0_i32_0 = arith.constant 0 : i32
    %c0_i32_1 = arith.constant 0 : i32
    %c0_i32_2 = arith.constant 0 : i32
    return %c0_i32, %c0_i32_0, %c0_i32_1 : i32, i32, i32
  }
  func.func @transform_6(%arg0: i32, %arg1: i32) -> (i32, i32, i32, i32) {
    %c0_i32 = arith.constant 0 : i32
    %c0_i32_0 = arith.constant 0 : i32
    %c0_i32_1 = arith.constant 0 : i32
    return %arg0, %arg1, %c0_i32, %c0_i32_0 : i32, i32, i32, i32
  }
  func.func @transform_7(%arg0: i32, %arg1: i32) -> (i32, i32, i32, i32) {
    %c0_i32 = arith.constant 0 : i32
    %c0_i32_0 = arith.constant 0 : i32
    %c0_i32_1 = arith.constant 0 : i32
    return %arg0, %arg1, %c0_i32, %c0_i32_0 : i32, i32, i32, i32
  }
}

module attributes {stable_mosaic.version = 11 : i64} {
  func.func @_bn_residual_kernel(%arg0: i32, %arg1: memref<4x16x128xbf16, #tpu.memory_space<vmem>>, %arg2: memref<1x1x128xf32, #tpu.memory_space<vmem>>, %arg3: memref<1x1x128xf32, #tpu.memory_space<vmem>>, %arg4: memref<4x16x128xbf16, #tpu.memory_space<vmem>>, %arg5: memref<4x16x128xf32, #tpu.memory_space<vmem>>) attributes {dimension_semantics = [#tpu.dimension_semantics<parallel>], iteration_bounds = array<i64: 4>, scalar_prefetch = 0 : i64, scratch_operands = 0 : i64, tpu.core_type = #tpu.core_type<tc>, window_params = [{transform_indices = @transform_0, window_bounds = array<i64: 4, 16, 128>}, {pipeline_mode = #tpu.pipeline_mode<synchronous>, transform_indices = @transform_1, window_bounds = array<i64: 1, 1, 128>}, {pipeline_mode = #tpu.pipeline_mode<synchronous>, transform_indices = @transform_2, window_bounds = array<i64: 1, 1, 128>}, {transform_indices = @transform_3, window_bounds = array<i64: 4, 16, 128>}, {transform_indices = @transform_4, window_bounds = array<i64: 4, 16, 128>}]} {
    %c0 = arith.constant 0 : index
    %c0_0 = arith.constant 0 : index
    %c0_1 = arith.constant 0 : index
    %0 = vector.load %arg1[%c0, %c0_0, %c0_1] : memref<4x16x128xbf16, #tpu.memory_space<vmem>>, vector<4x16x128xbf16>
    %1 = arith.extf %0 : vector<4x16x128xbf16> to vector<4x16x128xf32>
    %c0_2 = arith.constant 0 : index
    %c0_3 = arith.constant 0 : index
    %c0_4 = arith.constant 0 : index
    %2 = vector.load %arg2[%c0_2, %c0_3, %c0_4] : memref<1x1x128xf32, #tpu.memory_space<vmem>>, vector<1x1x128xf32>
    %3 = vector.broadcast %2 : vector<1x1x128xf32> to vector<4x16x128xf32>
    %4 = arith.mulf %1, %3 : vector<4x16x128xf32>
    %c0_5 = arith.constant 0 : index
    %c0_6 = arith.constant 0 : index
    %c0_7 = arith.constant 0 : index
    %5 = vector.load %arg3[%c0_5, %c0_6, %c0_7] : memref<1x1x128xf32, #tpu.memory_space<vmem>>, vector<1x1x128xf32>
    %6 = vector.broadcast %5 : vector<1x1x128xf32> to vector<4x16x128xf32>
    %7 = arith.addf %4, %6 : vector<4x16x128xf32>
    %c0_8 = arith.constant 0 : index
    %c0_9 = arith.constant 0 : index
    %c0_10 = arith.constant 0 : index
    %8 = vector.load %arg4[%c0_8, %c0_9, %c0_10] : memref<4x16x128xbf16, #tpu.memory_space<vmem>>, vector<4x16x128xbf16>
    %9 = arith.extf %8 : vector<4x16x128xbf16> to vector<4x16x128xf32>
    %10 = arith.addf %7, %9 : vector<4x16x128xf32>
    %c0_11 = arith.constant 0 : index
    %c0_12 = arith.constant 0 : index
    %c0_13 = arith.constant 0 : index
    %11 = vector.load %arg5[%c0_11, %c0_12, %c0_13] : memref<4x16x128xf32, #tpu.memory_space<vmem>>, vector<4x16x128xf32>
    tpu.vector_store %arg5[%c0_11, %c0_12, %c0_13], %10 {strides = array<i32>} : memref<4x16x128xf32, #tpu.memory_space<vmem>>, vector<4x16x128xf32>,
    return
  }
  func.func @transform_0(%arg0: i32) -> (i32, i32, i32) {
    %c0_i32 = arith.constant 0 : i32
    %c0_i32_0 = arith.constant 0 : i32
    %c0_i32_1 = arith.constant 0 : i32
    return %arg0, %c0_i32, %c0_i32_0 : i32, i32, i32
  }
  func.func @transform_1(%arg0: i32) -> (i32, i32, i32) {
    %c0_i32 = arith.constant 0 : i32
    %c0_i32_0 = arith.constant 0 : i32
    %c0_i32_1 = arith.constant 0 : i32
    %c0_i32_2 = arith.constant 0 : i32
    return %c0_i32, %c0_i32_0, %c0_i32_1 : i32, i32, i32
  }
  func.func @transform_2(%arg0: i32) -> (i32, i32, i32) {
    %c0_i32 = arith.constant 0 : i32
    %c0_i32_0 = arith.constant 0 : i32
    %c0_i32_1 = arith.constant 0 : i32
    %c0_i32_2 = arith.constant 0 : i32
    return %c0_i32, %c0_i32_0, %c0_i32_1 : i32, i32, i32
  }
  func.func @transform_3(%arg0: i32) -> (i32, i32, i32) {
    %c0_i32 = arith.constant 0 : i32
    %c0_i32_0 = arith.constant 0 : i32
    %c0_i32_1 = arith.constant 0 : i32
    return %arg0, %c0_i32, %c0_i32_0 : i32, i32, i32
  }
  func.func @transform_4(%arg0: i32) -> (i32, i32, i32) {
    %c0_i32 = arith.constant 0 : i32
    %c0_i32_0 = arith.constant 0 : i32
    %c0_i32_1 = arith.constant 0 : i32
    return %arg0, %c0_i32, %c0_i32_0 : i32, i32, i32
  }
}

module attributes {stable_mosaic.version = 11 : i64} {
  func.func @_bn_residual_kernel(%arg0: i32, %arg1: memref<4x16x128xbf16, #tpu.memory_space<vmem>>, %arg2: memref<1x1x128xf32, #tpu.memory_space<vmem>>, %arg3: memref<1x1x128xf32, #tpu.memory_space<vmem>>, %arg4: memref<4x16x128xf32, #tpu.memory_space<vmem>>, %arg5: memref<4x16x128xbf16, #tpu.memory_space<vmem>>) attributes {dimension_semantics = [#tpu.dimension_semantics<parallel>], iteration_bounds = array<i64: 4>, scalar_prefetch = 0 : i64, scratch_operands = 0 : i64, tpu.core_type = #tpu.core_type<tc>, window_params = [{transform_indices = @transform_0, window_bounds = array<i64: 4, 16, 128>}, {pipeline_mode = #tpu.pipeline_mode<synchronous>, transform_indices = @transform_1, window_bounds = array<i64: 1, 1, 128>}, {pipeline_mode = #tpu.pipeline_mode<synchronous>, transform_indices = @transform_2, window_bounds = array<i64: 1, 1, 128>}, {transform_indices = @transform_3, window_bounds = array<i64: 4, 16, 128>}, {transform_indices = @transform_4, window_bounds = array<i64: 4, 16, 128>}]} {
    %c0 = arith.constant 0 : index
    %c0_0 = arith.constant 0 : index
    %c0_1 = arith.constant 0 : index
    %0 = vector.load %arg1[%c0, %c0_0, %c0_1] : memref<4x16x128xbf16, #tpu.memory_space<vmem>>, vector<4x16x128xbf16>
    %1 = arith.extf %0 : vector<4x16x128xbf16> to vector<4x16x128xf32>
    %c0_2 = arith.constant 0 : index
    %c0_3 = arith.constant 0 : index
    %c0_4 = arith.constant 0 : index
    %2 = vector.load %arg2[%c0_2, %c0_3, %c0_4] : memref<1x1x128xf32, #tpu.memory_space<vmem>>, vector<1x1x128xf32>
    %3 = vector.broadcast %2 : vector<1x1x128xf32> to vector<4x16x128xf32>
    %4 = arith.mulf %1, %3 : vector<4x16x128xf32>
    %c0_5 = arith.constant 0 : index
    %c0_6 = arith.constant 0 : index
    %c0_7 = arith.constant 0 : index
    %5 = vector.load %arg3[%c0_5, %c0_6, %c0_7] : memref<1x1x128xf32, #tpu.memory_space<vmem>>, vector<1x1x128xf32>
    %6 = vector.broadcast %5 : vector<1x1x128xf32> to vector<4x16x128xf32>
    %7 = arith.addf %4, %6 : vector<4x16x128xf32>
    %c0_8 = arith.constant 0 : index
    %c0_9 = arith.constant 0 : index
    %c0_10 = arith.constant 0 : index
    %8 = vector.load %arg4[%c0_8, %c0_9, %c0_10] : memref<4x16x128xf32, #tpu.memory_space<vmem>>, vector<4x16x128xf32>
    %9 = arith.addf %7, %8 : vector<4x16x128xf32>
    %10 = arith.truncf %9 : vector<4x16x128xf32> to vector<4x16x128xbf16>
    %c0_11 = arith.constant 0 : index
    %c0_12 = arith.constant 0 : index
    %c0_13 = arith.constant 0 : index
    %11 = vector.load %arg5[%c0_11, %c0_12, %c0_13] : memref<4x16x128xbf16, #tpu.memory_space<vmem>>, vector<4x16x128xbf16>
    tpu.vector_store %arg5[%c0_11, %c0_12, %c0_13], %10 {strides = array<i32>} : memref<4x16x128xbf16, #tpu.memory_space<vmem>>, vector<4x16x128xbf16>,
    return
  }
  func.func @transform_0(%arg0: i32) -> (i32, i32, i32) {
    %c0_i32 = arith.constant 0 : i32
    %c0_i32_0 = arith.constant 0 : i32
    %c0_i32_1 = arith.constant 0 : i32
    return %arg0, %c0_i32, %c0_i32_0 : i32, i32, i32
  }
  func.func @transform_1(%arg0: i32) -> (i32, i32, i32) {
    %c0_i32 = arith.constant 0 : i32
    %c0_i32_0 = arith.constant 0 : i32
    %c0_i32_1 = arith.constant 0 : i32
    %c0_i32_2 = arith.constant 0 : i32
    return %c0_i32, %c0_i32_0, %c0_i32_1 : i32, i32, i32
  }
  func.func @transform_2(%arg0: i32) -> (i32, i32, i32) {
    %c0_i32 = arith.constant 0 : i32
    %c0_i32_0 = arith.constant 0 : i32
    %c0_i32_1 = arith.constant 0 : i32
    %c0_i32_2 = arith.constant 0 : i32
    return %c0_i32, %c0_i32_0, %c0_i32_1 : i32, i32, i32
  }
  func.func @transform_3(%arg0: i32) -> (i32, i32, i32) {
    %c0_i32 = arith.constant 0 : i32
    %c0_i32_0 = arith.constant 0 : i32
    %c0_i32_1 = arith.constant 0 : i32
    return %arg0, %c0_i32, %c0_i32_0 : i32, i32, i32
  }
  func.func @transform_4(%arg0: i32) -> (i32, i32, i32) {
    %c0_i32 = arith.constant 0 : i32
    %c0_i32_0 = arith.constant 0 : i32
    %c0_i32_1 = arith.constant 0 : i32
    return %arg0, %c0_i32, %c0_i32_0 : i32, i32, i32
  }
}

module attributes {stable_mosaic.version = 11 : i64} {
  func.func @_conv_bn_stats_kernel(%arg0: i32, %arg1: i32, %arg2: memref<1x16x16x128xbf16, #tpu.memory_space<vmem>>, %arg3: memref<3x384x128xbf16, #tpu.memory_space<vmem>>, %arg4: memref<1x1x128xf32, #tpu.memory_space<vmem>>, %arg5: memref<1x1x128xf32, #tpu.memory_space<vmem>>, %arg6: memref<1x1x128xf32, #tpu.memory_space<vmem>>, %arg7: memref<1x1x128xf32, #tpu.memory_space<vmem>>, %arg8: memref<1x16x16x128xbf16, #tpu.memory_space<vmem>>, %arg9: memref<1x1x2x128xf32, #tpu.memory_space<vmem>>) attributes {dimension_semantics = [#tpu.dimension_semantics<parallel>, #tpu.dimension_semantics<parallel>], iteration_bounds = array<i64: 1, 1>, scalar_prefetch = 0 : i64, scratch_operands = 0 : i64, tpu.core_type = #tpu.core_type<tc>, window_params = [{transform_indices = @transform_0, window_bounds = array<i64: 1, 16, 16, 128>}, {pipeline_mode = #tpu.pipeline_mode<synchronous>, transform_indices = @transform_1, window_bounds = array<i64: 3, 384, 128>}, {pipeline_mode = #tpu.pipeline_mode<synchronous>, transform_indices = @transform_2, window_bounds = array<i64: 1, 1, 128>}, {pipeline_mode = #tpu.pipeline_mode<synchronous>, transform_indices = @transform_3, window_bounds = array<i64: 1, 1, 128>}, {pipeline_mode = #tpu.pipeline_mode<synchronous>, transform_indices = @transform_4, window_bounds = array<i64: 1, 1, 128>}, {pipeline_mode = #tpu.pipeline_mode<synchronous>, transform_indices = @transform_5, window_bounds = array<i64: 1, 1, 128>}, {transform_indices = @transform_6, window_bounds = array<i64: 1, 16, 16, 128>}, {transform_indices = @transform_7, window_bounds = array<i64: 1, 1, 2, 128>}]} {
    %c16_i32 = arith.constant 16 : i32
    %0 = arith.muli %arg1, %c16_i32 : i32
    %1 = tpu.assume_multiple %0, 16 : i32
    %c1_i32 = arith.constant 1 : i32
    %2 = arith.subi %1, %c1_i32 : i32
    %3 = math.absi %2 : i32
    %c16_i32_0 = arith.constant 16 : i32
    %4 = arith.addi %1, %c16_i32_0 : i32
    %c16_i32_1 = arith.constant 16 : i32
    %5 = arith.addi %1, %c16_i32_1 : i32
    %c30_i32 = arith.constant 30 : i32
    %6 = arith.subi %c30_i32, %5 : i32
    %7 = arith.minsi %4, %6 : i32
    %c0 = arith.constant 0 : index
    %8 = arith.index_cast %3 : i32 to index
    %c0_2 = arith.constant 0 : index
    %c0_3 = arith.constant 0 : index
    %9 = vector.load %arg2[%c0, %8, %c0_2, %c0_3] : memref<1x16x16x128xbf16, #tpu.memory_space<vmem>>, vector<1x1x16x128xbf16>
    %10 = vector.shape_cast %9 : vector<1x1x16x128xbf16> to vector<1x16x128xbf16>
    %c0_4 = arith.constant 0 : index
    %11 = arith.index_cast %1 : i32 to index
    %c0_5 = arith.constant 0 : index
    %c0_6 = arith.constant 0 : index
    %12 = vector.load %arg2[%c0_4, %11, %c0_5, %c0_6] : memref<1x16x16x128xbf16, #tpu.memory_space<vmem>>, vector<1x16x16x128xbf16>
    %13 = vector.shape_cast %12 : vector<1x16x16x128xbf16> to vector<16x16x128xbf16>
    %c0_7 = arith.constant 0 : index
    %14 = arith.index_cast %7 : i32 to index
    %c0_8 = arith.constant 0 : index
    %c0_9 = arith.constant 0 : index
    %15 = vector.load %arg2[%c0_7, %14, %c0_8, %c0_9] : memref<1x16x16x128xbf16, #tpu.memory_space<vmem>>, vector<1x1x16x128xbf16>
    %16 = vector.shape_cast %15 : vector<1x1x16x128xbf16> to vector<1x16x128xbf16>
    %17 = tpu.concatenate %10, %13, %16 in 0 : vector<1x16x128xbf16>, vector<16x16x128xbf16>, vector<1x16x128xbf16> -> vector<18x16x128xbf16>
    %18 = arith.extf %17 : vector<18x16x128xbf16> to vector<18x16x128xf32>
    %c0_10 = arith.constant 0 : index
    %c0_11 = arith.constant 0 : index
    %c0_12 = arith.constant 0 : index
    %19 = vector.load %arg5[%c0_10, %c0_11, %c0_12] : memref<1x1x128xf32, #tpu.memory_space<vmem>>, vector<1x1x128xf32>
    %20 = vector.broadcast %19 : vector<1x1x128xf32> to vector<18x16x128xf32>
    %21 = arith.mulf %18, %20 : vector<18x16x128xf32>
    %c0_13 = arith.constant 0 : index
    %c0_14 = arith.constant 0 : index
    %c0_15 = arith.constant 0 : index
    %22 = vector.load %arg6[%c0_13, %c0_14, %c0_15] : memref<1x1x128xf32, #tpu.memory_space<vmem>>, vector<1x1x128xf32>
    %23 = vector.broadcast %22 : vector<1x1x128xf32> to vector<18x16x128xf32>
    %24 = arith.addf %21, %23 : vector<18x16x128xf32>
    %cst = arith.constant 0.000000e+00 : f32
    %25 = vector.broadcast %cst : f32 to vector<18x16x128xf32>
    %26 = arith.cmpf oge, %24, %25 : vector<18x16x128xf32>
    %c0_16 = arith.constant 0 : index
    %c0_17 = arith.constant 0 : index
    %c0_18 = arith.constant 0 : index
    %27 = vector.load %arg7[%c0_16, %c0_17, %c0_18] : memref<1x1x128xf32, #tpu.memory_space<vmem>>, vector<1x1x128xf32>
    %28 = vector.broadcast %27 : vector<1x1x128xf32> to vector<18x16x128xf32>
    %29 = arith.mulf %28, %24 : vector<18x16x128xf32>
    %30 = arith.select %26, %24, %29 : vector<18x16x128xi1>, vector<18x16x128xf32>
    %31 = arith.truncf %30 : vector<18x16x128xf32> to vector<18x16x128xbf16>
    %32 = vector.extract_strided_slice %31 {offsets = [0, 1, 0], sizes = [18, 1, 128], strides = [1, 1, 1]} : vector<18x16x128xbf16> to vector<18x1x128xbf16>
    %33 = vector.extract_strided_slice %31 {offsets = [0, 0, 0], sizes = [18, 15, 128], strides = [1, 1, 1]} : vector<18x16x128xbf16> to vector<18x15x128xbf16>
    %34 = tpu.concatenate %32, %33 in 1 : vector<18x1x128xbf16>, vector<18x15x128xbf16> -> vector<18x16x128xbf16>
    %35 = vector.extract_strided_slice %31 {offsets = [0, 1, 0], sizes = [18, 15, 128], strides = [1, 1, 1]} : vector<18x16x128xbf16> to vector<18x15x128xbf16>
    %36 = vector.extract_strided_slice %31 {offsets = [0, 14, 0], sizes = [18, 1, 128], strides = [1, 1, 1]} : vector<18x16x128xbf16> to vector<18x1x128xbf16>
    %37 = tpu.concatenate %35, %36 in 1 : vector<18x15x128xbf16>, vector<18x1x128xbf16> -> vector<18x16x128xbf16>
    %38 = tpu.concatenate %34, %31, %37 in 2 : vector<18x16x128xbf16>, vector<18x16x128xbf16>, vector<18x16x128xbf16> -> vector<18x16x384xbf16>
    %cst_19 = arith.constant 0.000000e+00 : f32
    %39 = vector.broadcast %cst_19 : f32 to vector<256x128xf32>
    %40 = vector.extract_strided_slice %38 {offsets = [0, 0, 0], sizes = [16, 16, 384], strides = [1, 1, 1]} : vector<18x16x384xbf16> to vector<16x16x384xbf16>
    %41 = vector.shape_cast %40 : vector<16x16x384xbf16> to vector<256x384xbf16>
    %c0_20 = arith.constant 0 : index
    %c0_21 = arith.constant 0 : index
    %c0_22 = arith.constant 0 : index
    %42 = vector.load %arg3[%c0_20, %c0_21, %c0_22] : memref<3x384x128xbf16, #tpu.memory_space<vmem>>, vector<1x384x128xbf16>
    %43 = vector.shape_cast %42 : vector<1x384x128xbf16> to vector<384x128xbf16>
    %cst_23 = arith.constant dense<0.000000e+00> : vector<256x128xf32>
    %44 = tpu.matmul %41, %43, %cst_23 {dimension_numbers = #tpu.dot_dimension_numbers<[1], [0], [0], [1], [0, 0, 1, 1], [], []>} : vector<256x384xbf16>, vector<384x128xbf16>, vector<256x128xf32> -> vector<256x128xf32>
    %45 = arith.addf %39, %44 : vector<256x128xf32>
    %46 = vector.extract_strided_slice %38 {offsets = [1, 0, 0], sizes = [16, 16, 384], strides = [1, 1, 1]} : vector<18x16x384xbf16> to vector<16x16x384xbf16>
    %47 = vector.shape_cast %46 : vector<16x16x384xbf16> to vector<256x384xbf16>
    %c1 = arith.constant 1 : index
    %c0_24 = arith.constant 0 : index
    %c0_25 = arith.constant 0 : index
    %48 = vector.load %arg3[%c1, %c0_24, %c0_25] : memref<3x384x128xbf16, #tpu.memory_space<vmem>>, vector<1x384x128xbf16>
    %49 = vector.shape_cast %48 : vector<1x384x128xbf16> to vector<384x128xbf16>
    %cst_26 = arith.constant dense<0.000000e+00> : vector<256x128xf32>
    %50 = tpu.matmul %47, %49, %cst_26 {dimension_numbers = #tpu.dot_dimension_numbers<[1], [0], [0], [1], [0, 0, 1, 1], [], []>} : vector<256x384xbf16>, vector<384x128xbf16>, vector<256x128xf32> -> vector<256x128xf32>
    %51 = arith.addf %45, %50 : vector<256x128xf32>
    %52 = vector.extract_strided_slice %38 {offsets = [2, 0, 0], sizes = [16, 16, 384], strides = [1, 1, 1]} : vector<18x16x384xbf16> to vector<16x16x384xbf16>
    %53 = vector.shape_cast %52 : vector<16x16x384xbf16> to vector<256x384xbf16>
    %c2 = arith.constant 2 : index
    %c0_27 = arith.constant 0 : index
    %c0_28 = arith.constant 0 : index
    %54 = vector.load %arg3[%c2, %c0_27, %c0_28] : memref<3x384x128xbf16, #tpu.memory_space<vmem>>, vector<1x384x128xbf16>
    %55 = vector.shape_cast %54 : vector<1x384x128xbf16> to vector<384x128xbf16>
    %cst_29 = arith.constant dense<0.000000e+00> : vector<256x128xf32>
    %56 = tpu.matmul %53, %55, %cst_29 {dimension_numbers = #tpu.dot_dimension_numbers<[1], [0], [0], [1], [0, 0, 1, 1], [], []>} : vector<256x384xbf16>, vector<384x128xbf16>, vector<256x128xf32> -> vector<256x128xf32>
    %57 = arith.addf %51, %56 : vector<256x128xf32>
    %c0_30 = arith.constant 0 : index
    %c0_31 = arith.constant 0 : index
    %c0_32 = arith.constant 0 : index
    %58 = vector.load %arg4[%c0_30, %c0_31, %c0_32] : memref<1x1x128xf32, #tpu.memory_space<vmem>>, vector<1x1x128xf32>
    %59 = vector.shape_cast %58 : vector<1x1x128xf32> to vector<1x128xf32>
    %60 = vector.broadcast %59 : vector<1x128xf32> to vector<256x128xf32>
    %61 = arith.addf %57, %60 : vector<256x128xf32>
    %62 = vector.shape_cast %61 : vector<256x128xf32> to vector<1x16x16x128xf32>
    %63 = arith.truncf %62 : vector<1x16x16x128xf32> to vector<1x16x16x128xbf16>
    %c0_33 = arith.constant 0 : index
    %c0_34 = arith.constant 0 : index
    %c0_35 = arith.constant 0 : index
    %c0_36 = arith.constant 0 : index
    %64 = vector.load %arg8[%c0_33, %c0_34, %c0_35, %c0_36] : memref<1x16x16x128xbf16, #tpu.memory_space<vmem>>, vector<1x16x16x128xbf16>
    tpu.vector_store %arg8[%c0_33, %c0_34, %c0_35, %c0_36], %63 {strides = array<i32>} : memref<1x16x16x128xbf16, #tpu.memory_space<vmem>>, vector<1x16x16x128xbf16>,
    %cst_37 = arith.constant dense<0.000000e+00> : vector<128xf32>
    %65 = vector.multi_reduction <add>, %61, %cst_37 [0] : vector<256x128xf32> to vector<128xf32>
    %66 = vector.shape_cast %65 : vector<128xf32> to vector<1x128xf32>
    %67 = arith.mulf %61, %61 : vector<256x128xf32>
    %cst_38 = arith.constant dense<0.000000e+00> : vector<128xf32>
    %68 = vector.multi_reduction <add>, %67, %cst_38 [0] : vector<256x128xf32> to vector<128xf32>
    %69 = vector.shape_cast %68 : vector<128xf32> to vector<1x128xf32>
    %70 = tpu.concatenate %66, %69 in 0 : vector<1x128xf32>, vector<1x128xf32> -> vector<2x128xf32>
    %71 = vector.shape_cast %70 : vector<2x128xf32> to vector<1x1x2x128xf32>
    %c0_39 = arith.constant 0 : index
    %c0_40 = arith.constant 0 : index
    %c0_41 = arith.constant 0 : index
    %c0_42 = arith.constant 0 : index
    %72 = vector.load %arg9[%c0_39, %c0_40, %c0_41, %c0_42] : memref<1x1x2x128xf32, #tpu.memory_space<vmem>>, vector<1x1x2x128xf32>
    tpu.vector_store %arg9[%c0_39, %c0_40, %c0_41, %c0_42], %71 {strides = array<i32>} : memref<1x1x2x128xf32, #tpu.memory_space<vmem>>, vector<1x1x2x128xf32>,
    return
  }
  func.func @transform_0(%arg0: i32, %arg1: i32) -> (i32, i32, i32, i32) {
    %c0_i32 = arith.constant 0 : i32
    %c0_i32_0 = arith.constant 0 : i32
    %c0_i32_1 = arith.constant 0 : i32
    %c0_i32_2 = arith.constant 0 : i32
    return %arg0, %c0_i32, %c0_i32_0, %c0_i32_1 : i32, i32, i32, i32
  }
  func.func @transform_1(%arg0: i32, %arg1: i32) -> (i32, i32, i32) {
    %c0_i32 = arith.constant 0 : i32
    %c0_i32_0 = arith.constant 0 : i32
    %c0_i32_1 = arith.constant 0 : i32
    %c0_i32_2 = arith.constant 0 : i32
    return %c0_i32, %c0_i32_0, %c0_i32_1 : i32, i32, i32
  }
  func.func @transform_2(%arg0: i32, %arg1: i32) -> (i32, i32, i32) {
    %c0_i32 = arith.constant 0 : i32
    %c0_i32_0 = arith.constant 0 : i32
    %c0_i32_1 = arith.constant 0 : i32
    %c0_i32_2 = arith.constant 0 : i32
    return %c0_i32, %c0_i32_0, %c0_i32_1 : i32, i32, i32
  }
  func.func @transform_3(%arg0: i32, %arg1: i32) -> (i32, i32, i32) {
    %c0_i32 = arith.constant 0 : i32
    %c0_i32_0 = arith.constant 0 : i32
    %c0_i32_1 = arith.constant 0 : i32
    %c0_i32_2 = arith.constant 0 : i32
    return %c0_i32, %c0_i32_0, %c0_i32_1 : i32, i32, i32
  }
  func.func @transform_4(%arg0: i32, %arg1: i32) -> (i32, i32, i32) {
    %c0_i32 = arith.constant 0 : i32
    %c0_i32_0 = arith.constant 0 : i32
    %c0_i32_1 = arith.constant 0 : i32
    %c0_i32_2 = arith.constant 0 : i32
    return %c0_i32, %c0_i32_0, %c0_i32_1 : i32, i32, i32
  }
  func.func @transform_5(%arg0: i32, %arg1: i32) -> (i32, i32, i32) {
    %c0_i32 = arith.constant 0 : i32
    %c0_i32_0 = arith.constant 0 : i32
    %c0_i32_1 = arith.constant 0 : i32
    %c0_i32_2 = arith.constant 0 : i32
    return %c0_i32, %c0_i32_0, %c0_i32_1 : i32, i32, i32
  }
  func.func @transform_6(%arg0: i32, %arg1: i32) -> (i32, i32, i32, i32) {
    %c0_i32 = arith.constant 0 : i32
    %c0_i32_0 = arith.constant 0 : i32
    %c0_i32_1 = arith.constant 0 : i32
    return %arg0, %arg1, %c0_i32, %c0_i32_0 : i32, i32, i32, i32
  }
  func.func @transform_7(%arg0: i32, %arg1: i32) -> (i32, i32, i32, i32) {
    %c0_i32 = arith.constant 0 : i32
    %c0_i32_0 = arith.constant 0 : i32
    %c0_i32_1 = arith.constant 0 : i32
    return %arg0, %arg1, %c0_i32, %c0_i32_0 : i32, i32, i32, i32
  }
}

</mosaic_0001>

<llo_original>
// kernel: resnet_gen_shared.11
$region0: #{resnet_gen_shared.11}
  #allocation0 [shape = 'u32[]', space=smem, size = 0x4, offset = 0x4, fixed_abs, tag = 'smem constant byte address 0x4 - core index']
  #allocation1 [shape = 'u32[144,128]{1,0:T(1,128)}', space=vmem, size = 0x12000, scoped, tag = 'internal scratch']
  %s0 = inlined_call_operand.vmem [shape: bf16[16,16,128], index: 0, kind: input, shape index: {}]
  %s1 = inlined_call_operand.vmem [shape: f32[1,1,128], index: 1, kind: input, shape index: {}]
  %s2 = inlined_call_operand.vmem [shape: f32[1,1,128], index: 2, kind: input, shape index: {}]
  %s3 = inlined_call_operand.vmem [shape: bf16[16,16,128], index: 3, kind: input, shape index: {}]
  %s4 = inlined_call_operand.hbm [shape: f32[16,16,128], index: 4, kind: output, shape index: {}]
  %s5 = sld [smem:[#allocation0]]
  $region49: #{resnet_gen_shared.11} parent=0
    _
  %s7 = ssub.s32 1, %s5
  %s8 = scalar_select 0, %s7, %s5
  $region1: #{resnet_gen_shared.11} parent=0
    #allocation2 [shape = 'u8[65536]{0}', space=vmem, size = 0x10000, scoped, tag = 'output window, operand 0']
    #allocation3 [shape = 's32[2]{0}', space=sflag, size = 0x8, scoped, tag = 'scoped memory for resnet_gen_shared.11']
    %9 = vsyncpa [#allocation3], 0
    %s10 = scalar_lea.sflag [#allocation3], 1
    %11 = vsyncpa %s10, 0
    loop: start=0, step=1, limit=6
    $region2: #{resnet_gen_shared.11} parent=1 // loop_pre_header
      _
    $region3: #{resnet_gen_shared.11} parent=1 // loop_header
      %s13 = sphi 0, %s17
      %p14 = scmp.ge.s32.totalorder %s13, 6
      %s23 = sphi 0, %s25
      %s26 = sphi 0, %s23
      %s27 = sphi 0, %s26
      %s43 = sphi 0, %s27
      %s47 = sphi 0, %s47
      %s49 = sphi 0, %s47
      %s50 = sphi 0, %s49
      %s64 = sphi 0, %s50
      %s68 = sphi 0, %s68
      %s70 = sphi 0, %s68
      %s71 = sphi 0, %s70
      %s85 = sphi 0, %s71
      %s91 = sphi 0, %s93
      %s94 = sphi 0, %s91
      %s95 = sphi 0, %s94
      %s111 = sphi 0, %s95
      %s117 = sphi 0, %s119
      %s120 = sphi 0, %s117
      %s121 = sphi 0, %s120
      %s137 = sphi 0, %s121
    $region4: #{resnet_gen_shared.11} parent=1 // loop_header_branch
      %16 = sbr.rel (%p14) target = $region8
    $region5: #{resnet_gen_shared.11} parent=1 // loop_body
      %s18 = ssub.s32 %s13, 1
      %s19 = ssub.s32 %s13, 2
      %s20 = sadd.s32 %s13, 1
      %s21 = ssub.s32 %s13, %s20
      %p22 = scmp.eq.s32.totalorder %s21, 0
      %s24 = sadd.s32 %s23, 1
      %s25 = scalar_select %p22, %s23, %s24
      %p28 = pneg %p22
      %p29 = scmp.eq.s32.totalorder %s13, 3
      %p30 = por %p28, %p29
      %p31 = scmp.ne.s32.totalorder %s23, %s26
      %p32 = scmp.eq.s32.totalorder %s13, 0
      %p33 = por %p31, %p32
      %p34 = scmp.ne.s32.totalorder %s23, %s26
      %p35 = scmp.eq.s32.totalorder %s18, 3
      %p36 = por %p34, %p35
      %p37 = scmp.ne.s32.totalorder %s26, %s27
      %p38 = scmp.eq.s32.totalorder %s18, 0
      %p39 = por %p37, %p38
      %p40 = scmp.ne.s32.totalorder %s26, %s27
      %p41 = scmp.eq.s32.totalorder %s19, 3
      %p42 = por %p40, %p41
      %p44 = scmp.ne.s32.totalorder %s27, %s43
      %p45 = scmp.eq.s32.totalorder %s19, 0
      %p46 = por %p44, %p45
      %s48 = sadd.s32 %s47, 1
      %p51 = scmp.eq.s32.totalorder %s13, 3
      %p52 = scmp.ne.s32.totalorder %s47, %s49
      %p53 = scmp.eq.s32.totalorder %s13, 0
      %p54 = por %p52, %p53
      %p55 = scmp.ne.s32.totalorder %s47, %s49
      %p56 = scmp.eq.s32.totalorder %s18, 3
      %p57 = por %p55, %p56
      %p58 = scmp.ne.s32.totalorder %s49, %s50
      %p59 = scmp.eq.s32.totalorder %s18, 0
      %p60 = por %p58, %p59
      %p61 = scmp.ne.s32.totalorder %s49, %s50
      %p62 = scmp.eq.s32.totalorder %s19, 3
      %p63 = por %p61, %p62
      %p65 = scmp.ne.s32.totalorder %s50, %s64
      %p66 = scmp.eq.s32.totalorder %s19, 0
      %p67 = por %p65, %p66
      %s69 = sadd.s32 %s68, 1
      %p72 = scmp.eq.s32.totalorder %s13, 3
      %p73 = scmp.ne.s32.totalorder %s68, %s70
      %p74 = scmp.eq.s32.totalorder %s13, 0
      %p75 = por %p73, %p74
      %p76 = scmp.ne.s32.totalorder %s68, %s70
      %p77 = scmp.eq.s32.totalorder %s18, 3
      %p78 = por %p76, %p77
      %p79 = scmp.ne.s32.totalorder %s70, %s71
      %p80 = scmp.eq.s32.totalorder %s18, 0
      %p81 = por %p79, %p80
      %p82 = scmp.ne.s32.totalorder %s70, %s71
      %p83 = scmp.eq.s32.totalorder %s19, 3
      %p84 = por %p82, %p83
      %p86 = scmp.ne.s32.totalorder %s71, %s85
      %p87 = scmp.eq.s32.totalorder %s19, 0
      %p88 = por %p86, %p87
      %s89 = ssub.s32 %s13, %s20
      %p90 = scmp.eq.s32.totalorder %s89, 0
      %s92 = sadd.s32 %s91, 1
      %s93 = scalar_select %p90, %s91, %s92
      %p96 = pneg %p90
      %p97 = scmp.eq.s32.totalorder %s13, 3
      %p98 = por %p96, %p97
      %p99 = scmp.ne.s32.totalorder %s91, %s94
      %p100 = scmp.eq.s32.totalorder %s13, 0
      %p101 = por %p99, %p100
      %p102 = scmp.ne.s32.totalorder %s91, %s94
      %p103 = scmp.eq.s32.totalorder %s18, 3
      %p104 = por %p102, %p103
      %p105 = scmp.ne.s32.totalorder %s94, %s95
      %p106 = scmp.eq.s32.totalorder %s18, 0
      %p107 = por %p105, %p106
      %p108 = scmp.ne.s32.totalorder %s94, %s95
      %p109 = scmp.eq.s32.totalorder %s19, 3
      %p110 = por %p108, %p109
      %p112 = scmp.ne.s32.totalorder %s95, %s111
      %p113 = scmp.eq.s32.totalorder %s19, 0
      %p114 = por %p112, %p113
      %s115 = ssub.s32 %s13, %s20
      %p116 = scmp.eq.s32.totalorder %s115, 0
      %s118 = sadd.s32 %s117, 1
      %s119 = scalar_select %p116, %s117, %s118
      %p122 = pneg %p116
      %p123 = scmp.eq.s32.totalorder %s13, 3
      %p124 = por %p122, %p123
      %p125 = scmp.ne.s32.totalorder %s117, %s120
      %p126 = scmp.eq.s32.totalorder %s13, 0
      %p127 = por %p125, %p126
      %p128 = scmp.ne.s32.totalorder %s117, %s120
      %p129 = scmp.eq.s32.totalorder %s18, 3
      %p130 = por %p128, %p129
      %p131 = scmp.ne.s32.totalorder %s120, %s121
      %p132 = scmp.eq.s32.totalorder %s18, 0
      %p133 = por %p131, %p132
      %p134 = scmp.ne.s32.totalorder %s120, %s121
      %p135 = scmp.eq.s32.totalorder %s19, 3
      %p136 = por %p134, %p135
      %p138 = scmp.ne.s32.totalorder %s121, %s137
      %p139 = scmp.eq.s32.totalorder %s19, 0
      %p140 = por %p138, %p139
      %p141 = scmp.le.s32.totalorder 1, %s13
      %p142 = scmp.lt.s32.totalorder %s13, 5
      %p143 = pnand %p141, %p142
      %p144 = pneg %p143
      // Predicated region
      $region9: #{resnet_gen_shared.11} parent=5 // pred_check
        _
      $region10: #{resnet_gen_shared.11} parent=5 // pred_check_branch
        %146 = sbr.rel (%p143) target = $region12
      $region11: #{resnet_gen_shared.11} parent=5 // pred_region
        %s147 = ssub.s32 %s13, 1
        // Predicated region
        $region13: #{resnet_gen_shared.11} parent=11 // pred_check
          %p148 = pneg %p60
        $region14: #{resnet_gen_shared.11} parent=11 // pred_check_branch
          %150 = sbr.rel (%p148) target = $region16
        $region15: #{resnet_gen_shared.11} parent=11 // pred_region
          _
        $region16: #{resnet_gen_shared.11} parent=11 // pred_fallthru
          _
        // Predicated region
        $region17: #{resnet_gen_shared.11} parent=11 // pred_check
          %p151 = pneg %p81
        $region18: #{resnet_gen_shared.11} parent=11 // pred_check_branch
          %153 = sbr.rel (%p151) target = $region20
        $region19: #{resnet_gen_shared.11} parent=11 // pred_region
          _
        $region20: #{resnet_gen_shared.11} parent=11 // pred_fallthru
          _
      $region12: #{resnet_gen_shared.11} parent=5 // pred_fallthru
        _
      %p154 = scmp.lt.s32.totalorder %s13, 4
      // Predicated region
      $region21: #{resnet_gen_shared.11} parent=5 // pred_check
        %p155 = pneg %p154
      $region22: #{resnet_gen_shared.11} parent=5 // pred_check_branch
        %157 = sbr.rel (%p155) target = $region24
      $region23: #{resnet_gen_shared.11} parent=5 // pred_region
        // Predicated region
        $region25: #{resnet_gen_shared.11} parent=23 // pred_check
          %p158 = pneg %p33
        $region26: #{resnet_gen_shared.11} parent=23 // pred_check_branch
          %160 = sbr.rel (%p158) target = $region28
        $region27: #{resnet_gen_shared.11} parent=23 // pred_region
          %s161 = smul.u32 4, %s13
          %p162 = scmp.lt.s32.totalorder %s161, 15
          %s163 = scalar_select %p162, %s161, 15
          %s164 = smul.addr %s163, 2
          %s165 = smul.addr %s164, 4
          %s166 = scalar_lea.vmem %s0, %s165
          %s167 = smul.u32 4, %s13
        $region28: #{resnet_gen_shared.11} parent=23 // pred_fallthru
          _
        // Predicated region
        $region29: #{resnet_gen_shared.11} parent=23 // pred_check
          %p168 = pneg %p101
        $region30: #{resnet_gen_shared.11} parent=23 // pred_check_branch
          %170 = sbr.rel (%p168) target = $region32
        $region31: #{resnet_gen_shared.11} parent=23 // pred_region
          %s171 = smul.u32 4, %s13
          %p172 = scmp.lt.s32.totalorder %s171, 15
          %s173 = scalar_select %p172, %s171, 15
          %s174 = smul.addr %s173, 2
          %s175 = smul.addr %s174, 4
          %s176 = scalar_lea.vmem %s3, %s175
          %s177 = smul.u32 4, %s13
        $region32: #{resnet_gen_shared.11} parent=23 // pred_fallthru
          _
      $region24: #{resnet_gen_shared.11} parent=5 // pred_fallthru
        _
      %p178 = scmp.le.s32.totalorder 1, %s13
      %p179 = scmp.lt.s32.totalorder %s13, 5
      %p180 = pnand %p178, %p179
      %p181 = pneg %p180
      // Predicated region
      $region33: #{resnet_gen_shared.11} parent=5 // pred_check
        _
      $region34: #{resnet_gen_shared.11} parent=5 // pred_check_branch
        %183 = sbr.rel (%p180) target = $region36
      $region35: #{resnet_gen_shared.11} parent=5 // pred_region
        %s184 = ssub.s32 %s13, 1
        %s185 = smul.u32 4, %s18
        %p186 = scmp.lt.s32.totalorder %s185, 15
        %s187 = scalar_select %p186, %s185, 15
        %s188 = smul.addr %s187, 2
        %s189 = smul.addr %s188, 4
        %s190 = scalar_lea.vmem %s0, %s189
        %p191 = pneg %p39
        %p192 = pneg %p36
        %p193 = pneg %p60
        %p194 = pneg %p57
        %p195 = pneg %p81
        %p196 = pneg %p78
        %s197 = smul.u32 4, %s18
        %p198 = scmp.lt.s32.totalorder %s197, 15
        %s199 = scalar_select %p198, %s197, 15
        %s200 = smul.addr %s199, 2
        %s201 = smul.addr %s200, 4
        %s202 = scalar_lea.vmem %s3, %s201
        %p203 = pneg %p107
        %p204 = pneg %p104
        %p205 = pneg %p133
        %p206 = pneg %p130
        %s207 = sand.u32 %s120, 1
        %s208 = scalar_lea.sflag [#allocation3], %s207
        %s209 = sand.u32 %s120, 1
        %s210 = smul.addr %s209, 64
        %s211 = scalar_lea.vmem [#allocation2], %s210
        %s212 = smul.u32 4, %s18
        %p213 = scmp.lt.s32.totalorder %s212, 15
        %s214 = scalar_select %p213, %s212, 15
        %s215 = smul.addr %s214, 2
        %s216 = smul.addr %s215, 4
        %s217 = scalar_lea.vmem %s0, %s216
        %s218 = smul.u32 4, %s18
        %s219 = smul.u32 4, %s18
        %p220 = scmp.lt.s32.totalorder %s219, 15
        %s221 = scalar_select %p220, %s219, 15
        %s222 = smul.addr %s221, 2
        %s223 = smul.addr %s222, 4
        %s224 = scalar_lea.vmem %s3, %s223
        %s225 = smul.u32 4, %s18
        %s226 = smul.u32 4, %s18
        %v227 = vld [vmem:[%s217] sm:$0xf]
        %v228 = vld [vmem:[%s217 + $0x4] sm:$0xf]
        %v229 = vld [vmem:[%s217 + $0x8] sm:$0xf]
        %v230 = vld [vmem:[%s217 + $0xc] sm:$0xf]
        %v231 = vld [vmem:[%s217 + $0x10] sm:$0xf]
        %v232 = vld [vmem:[%s217 + $0x14] sm:$0xf]
        %v233 = vld [vmem:[%s217 + $0x18] sm:$0xf]
        %v234 = vld [vmem:[%s217 + $0x1c] sm:$0xf]
        %v235 = vunpack.c.l.bf16 %v227
        %v236 = vunpack.c.l.bf16 %v228
        %v237 = vunpack.c.l.bf16 %v229
        %v238 = vunpack.c.l.bf16 %v230
        %v239 = vunpack.c.l.bf16 %v231
        %v240 = vunpack.c.l.bf16 %v232
        %v241 = vunpack.c.l.bf16 %v233
        %v242 = vunpack.c.l.bf16 %v234
        %v243 = vld [vmem:[%s1] sm:$0x1]
        %v245 = vlaneseq
        %v246 = vshrl.u32 %v245, 7
        %v247 = vsub.s32 0, %v246
        %v248 = vrot.slane %v243, %v247
        %v250 = vmul.f32 %v235, %v248
        %v251 = vmul.f32 %v236, %v248
        %v252 = vmul.f32 %v237, %v248
        %v253 = vmul.f32 %v238, %v248
        %v254 = vmul.f32 %v239, %v248
        %v255 = vmul.f32 %v240, %v248
        %v256 = vmul.f32 %v241, %v248
        %v257 = vmul.f32 %v242, %v248
        %v258 = vld [vmem:[%s2] sm:$0x1]
        %v260 = vlaneseq
        %v261 = vshrl.u32 %v260, 7
        %v262 = vsub.s32 0, %v261
        %v263 = vrot.slane %v258, %v262
        %v265 = vadd.f32 %v250, %v263
        %v266 = vadd.f32 %v251, %v263
        %v267 = vadd.f32 %v252, %v263
        %v268 = vadd.f32 %v253, %v263
        %v269 = vadd.f32 %v254, %v263
        %v270 = vadd.f32 %v255, %v263
        %v271 = vadd.f32 %v256, %v263
        %v272 = vadd.f32 %v257, %v263
        %v273 = vld [vmem:[%s224] sm:$0xf]
        %v274 = vld [vmem:[%s224 + $0x4] sm:$0xf]
        %v275 = vld [vmem:[%s224 + $0x8] sm:$0xf]
        %v276 = vld [vmem:[%s224 + $0xc] sm:$0xf]
        %v277 = vld [vmem:[%s224 + $0x10] sm:$0xf]
        %v278 = vld [vmem:[%s224 + $0x14] sm:$0xf]
        %v279 = vld [vmem:[%s224 + $0x18] sm:$0xf]
        %v280 = vld [vmem:[%s224 + $0x1c] sm:$0xf]
        %v281 = vunpack.c.l.bf16 %v273
        %v282 = vunpack.c.l.bf16 %v274
        %v283 = vunpack.c.l.bf16 %v275
        %v284 = vunpack.c.l.bf16 %v276
        %v285 = vunpack.c.l.bf16 %v277
        %v286 = vunpack.c.l.bf16 %v278
        %v287 = vunpack.c.l.bf16 %v279
        %v288 = vunpack.c.l.bf16 %v280
        %v289 = vadd.f32 %v265, %v281
        %v290 = vadd.f32 %v266, %v282
        %v291 = vadd.f32 %v267, %v283
        %v292 = vadd.f32 %v268, %v284
        %v293 = vadd.f32 %v269, %v285
        %v294 = vadd.f32 %v270, %v286
        %v295 = vadd.f32 %v271, %v287
        %v296 = vadd.f32 %v272, %v288
        %297 = vst [vmem:[%s211] sm:$0xff] %v289
        %298 = vst [vmem:[%s211 + $0x8] sm:$0xff] %v290
        %299 = vst [vmem:[%s211 + $0x10] sm:$0xff] %v291
        %300 = vst [vmem:[%s211 + $0x18] sm:$0xff] %v292
        %301 = vst [vmem:[%s211 + $0x20] sm:$0xff] %v293
        %302 = vst [vmem:[%s211 + $0x28] sm:$0xff] %v294
        %303 = vst [vmem:[%s211 + $0x30] sm:$0xff] %v295
        %304 = vst [vmem:[%s211 + $0x38] sm:$0xff] %v296
        %s305 = sand.u32 %s120, 1
        %s306 = scalar_lea.sflag [#allocation3], %s305
        %s307 = sand.u32 %s120, 1
        %s308 = smul.addr %s307, 64
        %s309 = scalar_lea.vmem [#allocation2], %s308
        // Predicated region
        $region37: #{resnet_gen_shared.11} parent=35 // pred_check
          %p310 = pneg %p130
        $region38: #{resnet_gen_shared.11} parent=35 // pred_check_branch
          %312 = sbr.rel (%p310) target = $region40
        $region39: #{resnet_gen_shared.11} parent=35 // pred_region
          %s313 = smul.u32 4, %s18
          %s315 = ssub.s32 1024, 1024
          %316 = vsyncadd %s306, %s315
          %s317 = smul.addr %s313, 2
          %s318 = smul.addr %s317, 128
          %s319 = scalar_lea.hbm %s4, %s318
          %s320 = sshll.u32 %s309, 4
          %s321 = int_to_ptr.vmem [resolvable:$true] %s320
          %326 = dma.vmem_to_hbm [thread:$0]  %s321, 1024, %s319, %s306, 128, 128, 8
        $region40: #{resnet_gen_shared.11} parent=35 // pred_fallthru
          _
      $region36: #{resnet_gen_shared.11} parent=5 // pred_fallthru
        _
      %p327 = scmp.le.s32.totalorder 2, %s13
      // Predicated region
      $region41: #{resnet_gen_shared.11} parent=5 // pred_check
        %p328 = pneg %p327
      $region42: #{resnet_gen_shared.11} parent=5 // pred_check_branch
        %330 = sbr.rel (%p328) target = $region44
      $region43: #{resnet_gen_shared.11} parent=5 // pred_region
        %s331 = ssub.s32 %s13, 2
        // Predicated region
        $region45: #{resnet_gen_shared.11} parent=43 // pred_check
          %p332 = pneg %p136
        $region46: #{resnet_gen_shared.11} parent=43 // pred_check_branch
          %334 = sbr.rel (%p332) target = $region48
        $region47: #{resnet_gen_shared.11} parent=43 // pred_region
          %s335 = sand.u32 %s121, 1
          %s336 = scalar_lea.sflag [#allocation3], %s335
          %s337 = sand.u32 %s121, 1
          %s338 = smul.addr %s337, 64
          %s339 = scalar_lea.vmem [#allocation2], %s338
          %340 = dma.done %s336, 1024
        $region48: #{resnet_gen_shared.11} parent=43 // pred_fallthru
          _
      $region44: #{resnet_gen_shared.11} parent=5 // pred_fallthru
        _
    $region6: #{resnet_gen_shared.11} parent=1 // loop_footer
      %s17 = sadd.s32 1, %s13
    $region7: #{resnet_gen_shared.11} parent=1 // loop_footer_branch
      %12 = sbr.rel target = $region3
    $region8: #{resnet_gen_shared.11} parent=1 // loop_exit
      _
    %341 = vsyncpa [#allocation3], 1
    %s342 = scalar_lea.sflag [#allocation3], 1
    %343 = vsyncpa %s342, 1

// kernel: resnet_gen_shared.8
$region0: #{resnet_gen_shared.8}
  #allocation0 [shape = 'u32[]', space=smem, size = 0x4, offset = 0x4, fixed_abs, tag = 'smem constant byte address 0x4 - core index']
  #allocation1 [shape = 'u32[144,128]{1,0:T(1,128)}', space=vmem, size = 0x12000, scoped, tag = 'internal scratch']
  %s0 = inlined_call_operand.vmem [shape: bf16[16,16,128], index: 0, kind: input, shape index: {}]
  %s1 = inlined_call_operand.vmem [shape: f32[1,1,128], index: 1, kind: input, shape index: {}]
  %s2 = inlined_call_operand.vmem [shape: f32[1,1,128], index: 2, kind: input, shape index: {}]
  %s3 = inlined_call_operand.vmem [shape: f32[16,16,128], index: 3, kind: input, shape index: {}]
  %s4 = inlined_call_operand.vmem [shape: bf16[16,16,128], index: 4, kind: output, shape index: {}]
  %s5 = sld [smem:[#allocation0]]
  $region49: #{resnet_gen_shared.8} parent=0
    _
  %s7 = ssub.s32 1, %s5
  %s8 = scalar_select 0, %s7, %s5
  loop: start=0, step=1, limit=6
  $region2: #{resnet_gen_shared.8} parent=0 // loop_pre_header
    _
  $region3: #{resnet_gen_shared.8} parent=0 // loop_header
    %s10 = sphi 0, %s14
    %p11 = scmp.ge.s32.totalorder %s10, 6
    %s20 = sphi 0, %s22
    %s23 = sphi 0, %s20
    %s24 = sphi 0, %s23
    %s40 = sphi 0, %s24
    %s44 = sphi 0, %s44
    %s46 = sphi 0, %s44
    %s47 = sphi 0, %s46
    %s61 = sphi 0, %s47
    %s65 = sphi 0, %s65
    %s67 = sphi 0, %s65
    %s68 = sphi 0, %s67
    %s82 = sphi 0, %s68
    %s88 = sphi 0, %s90
    %s91 = sphi 0, %s88
    %s92 = sphi 0, %s91
    %s108 = sphi 0, %s92
    %s114 = sphi 0, %s116
    %s117 = sphi 0, %s114
    %s118 = sphi 0, %s117
    %s134 = sphi 0, %s118
  $region4: #{resnet_gen_shared.8} parent=0 // loop_header_branch
    %13 = sbr.rel (%p11) target = $region8
  $region5: #{resnet_gen_shared.8} parent=0 // loop_body
    %s15 = ssub.s32 %s10, 1
    %s16 = ssub.s32 %s10, 2
    %s17 = sadd.s32 %s10, 1
    %s18 = ssub.s32 %s10, %s17
    %p19 = scmp.eq.s32.totalorder %s18, 0
    %s21 = sadd.s32 %s20, 1
    %s22 = scalar_select %p19, %s20, %s21
    %p25 = pneg %p19
    %p26 = scmp.eq.s32.totalorder %s10, 3
    %p27 = por %p25, %p26
    %p28 = scmp.ne.s32.totalorder %s20, %s23
    %p29 = scmp.eq.s32.totalorder %s10, 0
    %p30 = por %p28, %p29
    %p31 = scmp.ne.s32.totalorder %s20, %s23
    %p32 = scmp.eq.s32.totalorder %s15, 3
    %p33 = por %p31, %p32
    %p34 = scmp.ne.s32.totalorder %s23, %s24
    %p35 = scmp.eq.s32.totalorder %s15, 0
    %p36 = por %p34, %p35
    %p37 = scmp.ne.s32.totalorder %s23, %s24
    %p38 = scmp.eq.s32.totalorder %s16, 3
    %p39 = por %p37, %p38
    %p41 = scmp.ne.s32.totalorder %s24, %s40
    %p42 = scmp.eq.s32.totalorder %s16, 0
    %p43 = por %p41, %p42
    %s45 = sadd.s32 %s44, 1
    %p48 = scmp.eq.s32.totalorder %s10, 3
    %p49 = scmp.ne.s32.totalorder %s44, %s46
    %p50 = scmp.eq.s32.totalorder %s10, 0
    %p51 = por %p49, %p50
    %p52 = scmp.ne.s32.totalorder %s44, %s46
    %p53 = scmp.eq.s32.totalorder %s15, 3
    %p54 = por %p52, %p53
    %p55 = scmp.ne.s32.totalorder %s46, %s47
    %p56 = scmp.eq.s32.totalorder %s15, 0
    %p57 = por %p55, %p56
    %p58 = scmp.ne.s32.totalorder %s46, %s47
    %p59 = scmp.eq.s32.totalorder %s16, 3
    %p60 = por %p58, %p59
    %p62 = scmp.ne.s32.totalorder %s47, %s61
    %p63 = scmp.eq.s32.totalorder %s16, 0
    %p64 = por %p62, %p63
    %s66 = sadd.s32 %s65, 1
    %p69 = scmp.eq.s32.totalorder %s10, 3
    %p70 = scmp.ne.s32.totalorder %s65, %s67
    %p71 = scmp.eq.s32.totalorder %s10, 0
    %p72 = por %p70, %p71
    %p73 = scmp.ne.s32.totalorder %s65, %s67
    %p74 = scmp.eq.s32.totalorder %s15, 3
    %p75 = por %p73, %p74
    %p76 = scmp.ne.s32.totalorder %s67, %s68
    %p77 = scmp.eq.s32.totalorder %s15, 0
    %p78 = por %p76, %p77
    %p79 = scmp.ne.s32.totalorder %s67, %s68
    %p80 = scmp.eq.s32.totalorder %s16, 3
    %p81 = por %p79, %p80
    %p83 = scmp.ne.s32.totalorder %s68, %s82
    %p84 = scmp.eq.s32.totalorder %s16, 0
    %p85 = por %p83, %p84
    %s86 = ssub.s32 %s10, %s17
    %p87 = scmp.eq.s32.totalorder %s86, 0
    %s89 = sadd.s32 %s88, 1
    %s90 = scalar_select %p87, %s88, %s89
    %p93 = pneg %p87
    %p94 = scmp.eq.s32.totalorder %s10, 3
    %p95 = por %p93, %p94
    %p96 = scmp.ne.s32.totalorder %s88, %s91
    %p97 = scmp.eq.s32.totalorder %s10, 0
    %p98 = por %p96, %p97
    %p99 = scmp.ne.s32.totalorder %s88, %s91
    %p100 = scmp.eq.s32.totalorder %s15, 3
    %p101 = por %p99, %p100
    %p102 = scmp.ne.s32.totalorder %s91, %s92
    %p103 = scmp.eq.s32.totalorder %s15, 0
    %p104 = por %p102, %p103
    %p105 = scmp.ne.s32.totalorder %s91, %s92
    %p106 = scmp.eq.s32.totalorder %s16, 3
    %p107 = por %p105, %p106
    %p109 = scmp.ne.s32.totalorder %s92, %s108
    %p110 = scmp.eq.s32.totalorder %s16, 0
    %p111 = por %p109, %p110
    %s112 = ssub.s32 %s10, %s17
    %p113 = scmp.eq.s32.totalorder %s112, 0
    %s115 = sadd.s32 %s114, 1
    %s116 = scalar_select %p113, %s114, %s115
    %p119 = pneg %p113
    %p120 = scmp.eq.s32.totalorder %s10, 3
    %p121 = por %p119, %p120
    %p122 = scmp.ne.s32.totalorder %s114, %s117
    %p123 = scmp.eq.s32.totalorder %s10, 0
    %p124 = por %p122, %p123
    %p125 = scmp.ne.s32.totalorder %s114, %s117
    %p126 = scmp.eq.s32.totalorder %s15, 3
    %p127 = por %p125, %p126
    %p128 = scmp.ne.s32.totalorder %s117, %s118
    %p129 = scmp.eq.s32.totalorder %s15, 0
    %p130 = por %p128, %p129
    %p131 = scmp.ne.s32.totalorder %s117, %s118
    %p132 = scmp.eq.s32.totalorder %s16, 3
    %p133 = por %p131, %p132
    %p135 = scmp.ne.s32.totalorder %s118, %s134
    %p136 = scmp.eq.s32.totalorder %s16, 0
    %p137 = por %p135, %p136
    %p138 = scmp.le.s32.totalorder 1, %s10
    %p139 = scmp.lt.s32.totalorder %s10, 5
    %p140 = pnand %p138, %p139
    %p141 = pneg %p140
    // Predicated region
    $region9: #{resnet_gen_shared.8} parent=5 // pred_check
      _
    $region10: #{resnet_gen_shared.8} parent=5 // pred_check_branch
      %143 = sbr.rel (%p140) target = $region12
    $region11: #{resnet_gen_shared.8} parent=5 // pred_region
      %s144 = ssub.s32 %s10, 1
      // Predicated region
      $region13: #{resnet_gen_shared.8} parent=11 // pred_check
        %p145 = pneg %p57
      $region14: #{resnet_gen_shared.8} parent=11 // pred_check_branch
        %147 = sbr.rel (%p145) target = $region16
      $region15: #{resnet_gen_shared.8} parent=11 // pred_region
        _
      $region16: #{resnet_gen_shared.8} parent=11 // pred_fallthru
        _
      // Predicated region
      $region17: #{resnet_gen_shared.8} parent=11 // pred_check
        %p148 = pneg %p78
      $region18: #{resnet_gen_shared.8} parent=11 // pred_check_branch
        %150 = sbr.rel (%p148) target = $region20
      $region19: #{resnet_gen_shared.8} parent=11 // pred_region
        _
      $region20: #{resnet_gen_shared.8} parent=11 // pred_fallthru
        _
    $region12: #{resnet_gen_shared.8} parent=5 // pred_fallthru
      _
    %p151 = scmp.lt.s32.totalorder %s10, 4
    // Predicated region
    $region21: #{resnet_gen_shared.8} parent=5 // pred_check
      %p152 = pneg %p151
    $region22: #{resnet_gen_shared.8} parent=5 // pred_check_branch
      %154 = sbr.rel (%p152) target = $region24
    $region23: #{resnet_gen_shared.8} parent=5 // pred_region
      // Predicated region
      $region25: #{resnet_gen_shared.8} parent=23 // pred_check
        %p155 = pneg %p30
      $region26: #{resnet_gen_shared.8} parent=23 // pred_check_branch
        %157 = sbr.rel (%p155) target = $region28
      $region27: #{resnet_gen_shared.8} parent=23 // pred_region
        %s158 = smul.u32 4, %s10
        %p159 = scmp.lt.s32.totalorder %s158, 15
        %s160 = scalar_select %p159, %s158, 15
        %s161 = smul.addr %s160, 2
        %s162 = smul.addr %s161, 4
        %s163 = scalar_lea.vmem %s0, %s162
        %s164 = smul.u32 4, %s10
      $region28: #{resnet_gen_shared.8} parent=23 // pred_fallthru
        _
      // Predicated region
      $region29: #{resnet_gen_shared.8} parent=23 // pred_check
        %p165 = pneg %p98
      $region30: #{resnet_gen_shared.8} parent=23 // pred_check_branch
        %167 = sbr.rel (%p165) target = $region32
      $region31: #{resnet_gen_shared.8} parent=23 // pred_region
        %s168 = smul.u32 4, %s10
        %p169 = scmp.lt.s32.totalorder %s168, 15
        %s170 = scalar_select %p169, %s168, 15
        %s171 = smul.addr %s170, 2
        %s172 = smul.addr %s171, 8
        %s173 = scalar_lea.vmem %s3, %s172
        %s174 = smul.u32 4, %s10
      $region32: #{resnet_gen_shared.8} parent=23 // pred_fallthru
        _
    $region24: #{resnet_gen_shared.8} parent=5 // pred_fallthru
      _
    %p175 = scmp.le.s32.totalorder 1, %s10
    %p176 = scmp.lt.s32.totalorder %s10, 5
    %p177 = pnand %p175, %p176
    %p178 = pneg %p177
    // Predicated region
    $region33: #{resnet_gen_shared.8} parent=5 // pred_check
      _
    $region34: #{resnet_gen_shared.8} parent=5 // pred_check_branch
      %180 = sbr.rel (%p177) target = $region36
    $region35: #{resnet_gen_shared.8} parent=5 // pred_region
      %s181 = ssub.s32 %s10, 1
      %s182 = smul.u32 4, %s15
      %p183 = scmp.lt.s32.totalorder %s182, 15
      %s184 = scalar_select %p183, %s182, 15
      %s185 = smul.addr %s184, 2
      %s186 = smul.addr %s185, 4
      %s187 = scalar_lea.vmem %s0, %s186
      %p188 = pneg %p36
      %p189 = pneg %p33
      %p190 = pneg %p57
      %p191 = pneg %p54
      %p192 = pneg %p78
      %p193 = pneg %p75
      %s194 = smul.u32 4, %s15
      %p195 = scmp.lt.s32.totalorder %s194, 15
      %s196 = scalar_select %p195, %s194, 15
      %s197 = smul.addr %s196, 2
      %s198 = smul.addr %s197, 8
      %s199 = scalar_lea.vmem %s3, %s198
      %p200 = pneg %p104
      %p201 = pneg %p101
      %p202 = pneg %p130
      %p203 = pneg %p127
      %s204 = smul.u32 4, %s15
      %p205 = scmp.lt.s32.totalorder %s204, 15
      %s206 = scalar_select %p205, %s204, 15
      %s207 = smul.addr %s206, 2
      %s208 = smul.addr %s207, 4
      %s209 = scalar_lea.vmem %s4, %s208
      %s210 = smul.u32 4, %s15
      %p211 = scmp.lt.s32.totalorder %s210, 15
      %s212 = scalar_select %p211, %s210, 15
      %s213 = smul.addr %s212, 2
      %s214 = smul.addr %s213, 4
      %s215 = scalar_lea.vmem %s0, %s214
      %s216 = smul.u32 4, %s15
      %s217 = smul.u32 4, %s15
      %p218 = scmp.lt.s32.totalorder %s217, 15
      %s219 = scalar_select %p218, %s217, 15
      %s220 = smul.addr %s219, 2
      %s221 = smul.addr %s220, 8
      %s222 = scalar_lea.vmem %s3, %s221
      %s223 = smul.u32 4, %s15
      %s224 = smul.u32 4, %s15
      %p225 = scmp.lt.s32.totalorder %s224, 15
      %s226 = scalar_select %p225, %s224, 15
      %s227 = smul.addr %s226, 2
      %s228 = smul.addr %s227, 4
      %s229 = scalar_lea.vmem %s4, %s228
      %s230 = smul.u32 4, %s15
      %v231 = vld [vmem:[%s215] sm:$0xf]
      %v232 = vld [vmem:[%s215 + $0x4] sm:$0xf]
      %v233 = vld [vmem:[%s215 + $0x8] sm:$0xf]
      %v234 = vld [vmem:[%s215 + $0xc] sm:$0xf]
      %v235 = vld [vmem:[%s215 + $0x10] sm:$0xf]
      %v236 = vld [vmem:[%s215 + $0x14] sm:$0xf]
      %v237 = vld [vmem:[%s215 + $0x18] sm:$0xf]
      %v238 = vld [vmem:[%s215 + $0x1c] sm:$0xf]
      %v239 = vunpack.c.l.bf16 %v231
      %v240 = vunpack.c.l.bf16 %v232
      %v241 = vunpack.c.l.bf16 %v233
      %v242 = vunpack.c.l.bf16 %v234
      %v243 = vunpack.c.l.bf16 %v235
      %v244 = vunpack.c.l.bf16 %v236
      %v245 = vunpack.c.l.bf16 %v237
      %v246 = vunpack.c.l.bf16 %v238
      %v247 = vld [vmem:[%s1] sm:$0x1]
      %v249 = vlaneseq
      %v250 = vshrl.u32 %v249, 7
      %v251 = vsub.s32 0, %v250
      %v252 = vrot.slane %v247, %v251
      %v254 = vmul.f32 %v239, %v252
      %v255 = vmul.f32 %v240, %v252
      %v256 = vmul.f32 %v241, %v252
      %v257 = vmul.f32 %v242, %v252
      %v258 = vmul.f32 %v243, %v252
      %v259 = vmul.f32 %v244, %v252
      %v260 = vmul.f32 %v245, %v252
      %v261 = vmul.f32 %v246, %v252
      %v262 = vld [vmem:[%s2] sm:$0x1]
      %v264 = vlaneseq
      %v265 = vshrl.u32 %v264, 7
      %v266 = vsub.s32 0, %v265
      %v267 = vrot.slane %v262, %v266
      %v269 = vadd.f32 %v254, %v267
      %v270 = vadd.f32 %v255, %v267
      %v271 = vadd.f32 %v256, %v267
      %v272 = vadd.f32 %v257, %v267
      %v273 = vadd.f32 %v258, %v267
      %v274 = vadd.f32 %v259, %v267
      %v275 = vadd.f32 %v260, %v267
      %v276 = vadd.f32 %v261, %v267
      %v277 = vld [vmem:[%s222] sm:$0xff]
      %v278 = vld [vmem:[%s222 + $0x8] sm:$0xff]
      %v279 = vld [vmem:[%s222 + $0x10] sm:$0xff]
      %v280 = vld [vmem:[%s222 + $0x18] sm:$0xff]
      %v281 = vld [vmem:[%s222 + $0x20] sm:$0xff]
      %v282 = vld [vmem:[%s222 + $0x28] sm:$0xff]
      %v283 = vld [vmem:[%s222 + $0x30] sm:$0xff]
      %v284 = vld [vmem:[%s222 + $0x38] sm:$0xff]
      %v285 = vadd.f32 %v269, %v277
      %v286 = vadd.f32 %v270, %v278
      %v287 = vadd.f32 %v271, %v279
      %v288 = vadd.f32 %v272, %v280
      %v289 = vadd.f32 %v273, %v281
      %v290 = vadd.f32 %v274, %v282
      %v291 = vadd.f32 %v275, %v283
      %v292 = vadd.f32 %v276, %v284
      %v293 = vpack.c.bf16 %v286, %v285
      %v294 = vpack.c.bf16 %v288, %v287
      %v295 = vpack.c.bf16 %v290, %v289
      %v296 = vpack.c.bf16 %v292, %v291
      %v301 = vunpack.c.l.b16 %v293
      %v302 = vunpack.c.h.b16 %v293
      %v303 = vunpack.c.l.b16 %v294
      %v304 = vunpack.c.h.b16 %v294
      %v305 = vunpack.c.l.b16 %v295
      %v306 = vunpack.c.h.b16 %v295
      %v307 = vunpack.c.l.b16 %v296
      %v308 = vunpack.c.h.b16 %v296
      %v309 = vpack.c.b16 %v301, %v301
      %v310 = vpack.c.b16 %v302, %v302
      %v311 = vpack.c.b16 %v303, %v303
      %v312 = vpack.c.b16 %v304, %v304
      %v313 = vpack.c.b16 %v305, %v305
      %v314 = vpack.c.b16 %v306, %v306
      %v315 = vpack.c.b16 %v307, %v307
      %v316 = vpack.c.b16 %v308, %v308
      %325 = vst [vmem:[%s229] sm:$0xf] %v309
      %326 = vst [vmem:[%s229 + $0x4] sm:$0xf] %v310
      %327 = vst [vmem:[%s229 + $0x8] sm:$0xf] %v311
      %328 = vst [vmem:[%s229 + $0xc] sm:$0xf] %v312
      %329 = vst [vmem:[%s229 + $0x10] sm:$0xf] %v313
      %330 = vst [vmem:[%s229 + $0x14] sm:$0xf] %v314
      %331 = vst [vmem:[%s229 + $0x18] sm:$0xf] %v315
      %332 = vst [vmem:[%s229 + $0x1c] sm:$0xf] %v316
      %s333 = smul.u32 4, %s15
      %p334 = scmp.lt.s32.totalorder %s333, 15
      %s335 = scalar_select %p334, %s333, 15
      %s336 = smul.addr %s335, 2
      %s337 = smul.addr %s336, 4
      %s338 = scalar_lea.vmem %s4, %s337
      // Predicated region
      $region37: #{resnet_gen_shared.8} parent=35 // pred_check
        %p339 = pneg %p127
      $region38: #{resnet_gen_shared.8} parent=35 // pred_check_branch
        %341 = sbr.rel (%p339) target = $region40
      $region39: #{resnet_gen_shared.8} parent=35 // pred_region
        %s342 = smul.u32 4, %s15
      $region40: #{resnet_gen_shared.8} parent=35 // pred_fallthru
        _
    $region36: #{resnet_gen_shared.8} parent=5 // pred_fallthru
      _
    %p343 = scmp.le.s32.totalorder 2, %s10
    // Predicated region
    $region41: #{resnet_gen_shared.8} parent=5 // pred_check
      %p344 = pneg %p343
    $region42: #{resnet_gen_shared.8} parent=5 // pred_check_branch
      %346 = sbr.rel (%p344) target = $region44
    $region43: #{resnet_gen_shared.8} parent=5 // pred_region
      %s347 = ssub.s32 %s10, 2
      // Predicated region
      $region45: #{resnet_gen_shared.8} parent=43 // pred_check
        %p348 = pneg %p133
      $region46: #{resnet_gen_shared.8} parent=43 // pred_check_branch
        %350 = sbr.rel (%p348) target = $region48
      $region47: #{resnet_gen_shared.8} parent=43 // pred_region
        %s351 = smul.u32 4, %s16
        %p352 = scmp.lt.s32.totalorder %s351, 15
        %s353 = scalar_select %p352, %s351, 15
        %s354 = smul.addr %s353, 2
        %s355 = smul.addr %s354, 4
        %s356 = scalar_lea.vmem %s4, %s355
      $region48: #{resnet_gen_shared.8} parent=43 // pred_fallthru
        _
    $region44: #{resnet_gen_shared.8} parent=5 // pred_fallthru
      _
  $region6: #{resnet_gen_shared.8} parent=0 // loop_footer
    %s14 = sadd.s32 1, %s10
  $region7: #{resnet_gen_shared.8} parent=0 // loop_footer_branch
    %9 = sbr.rel target = $region3
  $region8: #{resnet_gen_shared.8} parent=0 // loop_exit
    _

// kernel: resnet_gen_shared.6
$region0: #{resnet_gen_shared.6}
  #allocation0 [shape = 'u32[]', space=smem, size = 0x4, offset = 0x4, fixed_abs, tag = 'smem constant byte address 0x4 - core index']
  #allocation1 [shape = 'u32[144,128]{1,0:T(1,128)}', space=vmem, size = 0x12000, scoped, tag = 'internal scratch']
  %s0 = inlined_call_operand.hbm [shape: f32[1,16,16,128], index: 0, kind: input, shape index: {}]
  %s1 = inlined_call_operand.hbm [shape: bf16[3,384,128], index: 1, kind: input, shape index: {}]
  %s2 = inlined_call_operand.vmem [shape: f32[1,1,128], index: 2, kind: input, shape index: {}]
  %s3 = inlined_call_operand.vmem [shape: f32[1,1,128], index: 3, kind: input, shape index: {}, may-alias: {3,5}]
  %s4 = inlined_call_operand.vmem [shape: f32[1,1,128], index: 4, kind: input, shape index: {}]
  %s5 = inlined_call_operand.vmem [shape: f32[1,1,128], index: 5, kind: input, shape index: {}, may-alias: {3,5}]
  %s6 = inlined_call_operand.vmem [shape: bf16[1,16,16,128], index: 6, kind: output, shape index: {0}]
  %s7 = inlined_call_operand.vmem [shape: f32[1,1,2,128], index: 7, kind: output, shape index: {1}]
  %8 = xla_tuple %s6, %s7
  %s9 = sld [smem:[#allocation0]]
  $region50: #{resnet_gen_shared.6} parent=0
    _
  %s11 = ssub.s32 1, %s9
  %s12 = scalar_select 0, %s11, %s9
  $region1: #{resnet_gen_shared.6} parent=0
    #allocation2 [shape = 'u8[131072]{0}', space=vmem, size = 0x20000, scoped, tag = 'input window, operand 0, single buffered']
    #allocation3 [shape = 's32[1]{0}', space=sflag, size = 0x4, scoped, tag = 'scoped memory for resnet_gen_shared.6']
    #allocation4 [shape = 'u8[294912]{0}', space=vmem, size = 0x48000, scoped, tag = 'input window, operand 1, single buffered']
    #allocation5 [shape = 's32[1]{0}', space=sflag, size = 0x4, scoped, tag = 'scoped memory for resnet_gen_shared.6']
    %13 = vsyncpa [#allocation3], 0
    %14 = vsyncpa [#allocation5], 0
    // Predicated region
    $region2: #{resnet_gen_shared.6} parent=1 // pred_check
      _
    $region3: #{resnet_gen_shared.6} parent=1 // pred_check_branch
      %16 = sbr.rel (0) target = $region5
    $region4: #{resnet_gen_shared.6} parent=1 // pred_region
      %s18 = ssub.s32 4096, 4096
      %19 = vsyncadd [#allocation3], %s18
      %s20 = sshll.u32 [#allocation2], 4
      %s21 = int_to_ptr.vmem [resolvable:$true] %s20
      %26 = dma.hbm_to_vmem [thread:$0]  %s0, 4096, %s21, [#allocation3], 128, 128, 8
    $region5: #{resnet_gen_shared.6} parent=1 // pred_fallthru
      _
    // Predicated region
    $region6: #{resnet_gen_shared.6} parent=1 // pred_check
      _
    $region7: #{resnet_gen_shared.6} parent=1 // pred_check_branch
      %28 = sbr.rel (0) target = $region9
    $region8: #{resnet_gen_shared.6} parent=1 // pred_region
      %s30 = ssub.s32 9216, 9216
      %31 = vsyncadd [#allocation5], %s30
      %s32 = sshll.u32 [#allocation4], 4
      %s33 = int_to_ptr.vmem [resolvable:$true] %s32
      %38 = dma.hbm_to_vmem [thread:$0]  %s1, 9216, %s33, [#allocation5], 64, 64, 4
    $region9: #{resnet_gen_shared.6} parent=1 // pred_fallthru
      _
    // Predicated region
    $region10: #{resnet_gen_shared.6} parent=1 // pred_check
      _
    $region11: #{resnet_gen_shared.6} parent=1 // pred_check_branch
      %40 = sbr.rel (0) target = $region13
    $region12: #{resnet_gen_shared.6} parent=1 // pred_region
      _
    $region13: #{resnet_gen_shared.6} parent=1 // pred_fallthru
      _
    // Predicated region
    $region14: #{resnet_gen_shared.6} parent=1 // pred_check
      _
    $region15: #{resnet_gen_shared.6} parent=1 // pred_check_branch
      %42 = sbr.rel (0) target = $region17
    $region16: #{resnet_gen_shared.6} parent=1 // pred_region
      _
    $region17: #{resnet_gen_shared.6} parent=1 // pred_fallthru
      _
    // Predicated region
    $region18: #{resnet_gen_shared.6} parent=1 // pred_check
      _
    $region19: #{resnet_gen_shared.6} parent=1 // pred_check_branch
      %44 = sbr.rel (0) target = $region21
    $region20: #{resnet_gen_shared.6} parent=1 // pred_region
      _
    $region21: #{resnet_gen_shared.6} parent=1 // pred_fallthru
      _
    // Predicated region
    $region22: #{resnet_gen_shared.6} parent=1 // pred_check
      _
    $region23: #{resnet_gen_shared.6} parent=1 // pred_check_branch
      %46 = sbr.rel (0) target = $region25
    $region24: #{resnet_gen_shared.6} parent=1 // pred_region
      _
    $region25: #{resnet_gen_shared.6} parent=1 // pred_fallthru
      _
    // Predicated region
    $region26: #{resnet_gen_shared.6} parent=1 // pred_check
      _
    $region27: #{resnet_gen_shared.6} parent=1 // pred_check_branch
      %48 = sbr.rel (0) target = $region29
    $region28: #{resnet_gen_shared.6} parent=1 // pred_region
      %49 = dma.done [#allocation3], 4096
    $region29: #{resnet_gen_shared.6} parent=1 // pred_fallthru
      _
    // Predicated region
    $region30: #{resnet_gen_shared.6} parent=1 // pred_check
      _
    $region31: #{resnet_gen_shared.6} parent=1 // pred_check_branch
      %51 = sbr.rel (0) target = $region33
    $region32: #{resnet_gen_shared.6} parent=1 // pred_region
      %52 = dma.done [#allocation5], 9216
    $region33: #{resnet_gen_shared.6} parent=1 // pred_fallthru
      _
    %s54 = smul.u32 0, 16
    %s55 = ssub.s32 %s54, 1
    %s56 = sshra.s32 %s55, 31
    %s57 = sadd.s32 %s55, %s56
    %s58 = sxor.u32 %s57, %s56
    %s59 = sadd.s32 %s54, 16
    %s60 = ssub.s32 14, %s54
    %p61 = scmp.lt.s32.totalorder %s59, %s60
    %s62 = scalar_select %p61, %s59, %s60
    %s63 = smul.u32 %s58, 16
    %s64 = scalar_lea.vmem [#allocation2], %s63
    %v65 = vld [vmem:[%s64] sm:$0xff]
    %v66 = vld [vmem:[%s64 + $0x8] sm:$0xff]
    %s67 = smul.u32 %s54, 16
    %s68 = scalar_lea.vmem [#allocation2], %s67
    %v69 = vld [vmem:[%s68] sm:$0xff]
    %v70 = vld [vmem:[%s68 + $0x8] sm:$0xff]
    %v71 = vld [vmem:[%s68 + $0x10] sm:$0xff]
    %v72 = vld [vmem:[%s68 + $0x18] sm:$0xff]
    %v73 = vld [vmem:[%s68 + $0x20] sm:$0xff]
    %v74 = vld [vmem:[%s68 + $0x28] sm:$0xff]
    %v75 = vld [vmem:[%s68 + $0x30] sm:$0xff]
    %v76 = vld [vmem:[%s68 + $0x38] sm:$0xff]
    %v77 = vld [vmem:[%s68 + $0x40] sm:$0xff]
    %v78 = vld [vmem:[%s68 + $0x48] sm:$0xff]
    %v79 = vld [vmem:[%s68 + $0x50] sm:$0xff]
    %v80 = vld [vmem:[%s68 + $0x58] sm:$0xff]
    %v81 = vld [vmem:[%s68 + $0x60] sm:$0xff]
    %v82 = vld [vmem:[%s68 + $0x68] sm:$0xff]
    %v83 = vld [vmem:[%s68 + $0x70] sm:$0xff]
    %v84 = vld [vmem:[%s68 + $0x78] sm:$0xff]
    %v85 = vld [vmem:[%s68 + $0x80] sm:$0xff]
    %v86 = vld [vmem:[%s68 + $0x88] sm:$0xff]
    %v87 = vld [vmem:[%s68 + $0x90] sm:$0xff]
    %v88 = vld [vmem:[%s68 + $0x98] sm:$0xff]
    %v89 = vld [vmem:[%s68 + $0xa0] sm:$0xff]
    %v90 = vld [vmem:[%s68 + $0xa8] sm:$0xff]
    %v91 = vld [vmem:[%s68 + $0xb0] sm:$0xff]
    %v92 = vld [vmem:[%s68 + $0xb8] sm:$0xff]
    %v93 = vld [vmem:[%s68 + $0xc0] sm:$0xff]
    %v94 = vld [vmem:[%s68 + $0xc8] sm:$0xff]
    %v95 = vld [vmem:[%s68 + $0xd0] sm:$0xff]
    %v96 = vld [vmem:[%s68 + $0xd8] sm:$0xff]
    %v97 = vld [vmem:[%s68 + $0xe0] sm:$0xff]
    %v98 = vld [vmem:[%s68 + $0xe8] sm:$0xff]
    %v99 = vld [vmem:[%s68 + $0xf0] sm:$0xff]
    %v100 = vld [vmem:[%s68 + $0xf8] sm:$0xff]
    %s101 = smul.u32 %s62, 16
    %s102 = scalar_lea.vmem [#allocation2], %s101
    %v103 = vld [vmem:[%s102] sm:$0xff]
    %v104 = vld [vmem:[%s102 + $0x8] sm:$0xff]
    %v105 = vld [vmem:[%s3] sm:$0x1]
    %v107 = vlaneseq
    %v108 = vshrl.u32 %v107, 7
    %v109 = vsub.s32 0, %v108
    %v110 = vrot.slane %v105, %v109
    %v112 = vmul.f32 %v65, %v110
    %v113 = vmul.f32 %v66, %v110
    %v114 = vmul.f32 %v69, %v110
    %v115 = vmul.f32 %v70, %v110
    %v116 = vmul.f32 %v71, %v110
    %v117 = vmul.f32 %v72, %v110
    %v118 = vmul.f32 %v73, %v110
    %v119 = vmul.f32 %v74, %v110
    %v120 = vmul.f32 %v75, %v110
    %v121 = vmul.f32 %v76, %v110
    %v122 = vmul.f32 %v77, %v110
    %v123 = vmul.f32 %v78, %v110
    %v124 = vmul.f32 %v79, %v110
    %v125 = vmul.f32 %v80, %v110
    %v126 = vmul.f32 %v81, %v110
    %v127 = vmul.f32 %v82, %v110
    %v128 = vmul.f32 %v83, %v110
    %v129 = vmul.f32 %v84, %v110
    %v130 = vmul.f32 %v85, %v110
    %v131 = vmul.f32 %v86, %v110
    %v132 = vmul.f32 %v87, %v110
    %v133 = vmul.f32 %v88, %v110
    %v134 = vmul.f32 %v89, %v110
    %v135 = vmul.f32 %v90, %v110
    %v136 = vmul.f32 %v91, %v110
    %v137 = vmul.f32 %v92, %v110
    %v138 = vmul.f32 %v93, %v110
    %v139 = vmul.f32 %v94, %v110
    %v140 = vmul.f32 %v95, %v110
    %v141 = vmul.f32 %v96, %v110
    %v142 = vmul.f32 %v97, %v110
    %v143 = vmul.f32 %v98, %v110
    %v144 = vmul.f32 %v99, %v110
    %v145 = vmul.f32 %v100, %v110
    %v146 = vmul.f32 %v103, %v110
    %v147 = vmul.f32 %v104, %v110
    %v148 = vld [vmem:[%s4] sm:$0x1]
    %v150 = vlaneseq
    %v151 = vshrl.u32 %v150, 7
    %v152 = vsub.s32 0, %v151
    %v153 = vrot.slane %v148, %v152
    %v155 = vadd.f32 %v112, %v153
    %v156 = vadd.f32 %v113, %v153
    %v157 = vadd.f32 %v114, %v153
    %v158 = vadd.f32 %v115, %v153
    %v159 = vadd.f32 %v116, %v153
    %v160 = vadd.f32 %v117, %v153
    %v161 = vadd.f32 %v118, %v153
    %v162 = vadd.f32 %v119, %v153
    %v163 = vadd.f32 %v120, %v153
    %v164 = vadd.f32 %v121, %v153
    %v165 = vadd.f32 %v122, %v153
    %v166 = vadd.f32 %v123, %v153
    %v167 = vadd.f32 %v124, %v153
    %v168 = vadd.f32 %v125, %v153
    %v169 = vadd.f32 %v126, %v153
    %v170 = vadd.f32 %v127, %v153
    %v171 = vadd.f32 %v128, %v153
    %v172 = vadd.f32 %v129, %v153
    %v173 = vadd.f32 %v130, %v153
    %v174 = vadd.f32 %v131, %v153
    %v175 = vadd.f32 %v132, %v153
    %v176 = vadd.f32 %v133, %v153
    %v177 = vadd.f32 %v134, %v153
    %v178 = vadd.f32 %v135, %v153
    %v179 = vadd.f32 %v136, %v153
    %v180 = vadd.f32 %v137, %v153
    %v181 = vadd.f32 %v138, %v153
    %v182 = vadd.f32 %v139, %v153
    %v183 = vadd.f32 %v140, %v153
    %v184 = vadd.f32 %v141, %v153
    %v185 = vadd.f32 %v142, %v153
    %v186 = vadd.f32 %v143, %v153
    %v187 = vadd.f32 %v144, %v153
    %v188 = vadd.f32 %v145, %v153
    %v189 = vadd.f32 %v146, %v153
    %v190 = vadd.f32 %v147, %v153
    %vm191 = vcmp.ge.f32.partialorder %v155, 0.0
    %vm192 = vcmp.ge.f32.partialorder %v156, 0.0
    %vm193 = vcmp.ge.f32.partialorder %v157, 0.0
    %vm194 = vcmp.ge.f32.partialorder %v158, 0.0
    %vm195 = vcmp.ge.f32.partialorder %v159, 0.0
    %vm196 = vcmp.ge.f32.partialorder %v160, 0.0
    %vm197 = vcmp.ge.f32.partialorder %v161, 0.0
    %vm198 = vcmp.ge.f32.partialorder %v162, 0.0
    %vm199 = vcmp.ge.f32.partialorder %v163, 0.0
    %vm200 = vcmp.ge.f32.partialorder %v164, 0.0
    %vm201 = vcmp.ge.f32.partialorder %v165, 0.0
    %vm202 = vcmp.ge.f32.partialorder %v166, 0.0
    %vm203 = vcmp.ge.f32.partialorder %v167, 0.0
    %vm204 = vcmp.ge.f32.partialorder %v168, 0.0
    %vm205 = vcmp.ge.f32.partialorder %v169, 0.0
    %vm206 = vcmp.ge.f32.partialorder %v170, 0.0
    %vm207 = vcmp.ge.f32.partialorder %v171, 0.0
    %vm208 = vcmp.ge.f32.partialorder %v172, 0.0
    %vm209 = vcmp.ge.f32.partialorder %v173, 0.0
    %vm210 = vcmp.ge.f32.partialorder %v174, 0.0
    %vm211 = vcmp.ge.f32.partialorder %v175, 0.0
    %vm212 = vcmp.ge.f32.partialorder %v176, 0.0
    %vm213 = vcmp.ge.f32.partialorder %v177, 0.0
    %vm214 = vcmp.ge.f32.partialorder %v178, 0.0
    %vm215 = vcmp.ge.f32.partialorder %v179, 0.0
    %vm216 = vcmp.ge.f32.partialorder %v180, 0.0
    %vm217 = vcmp.ge.f32.partialorder %v181, 0.0
    %vm218 = vcmp.ge.f32.partialorder %v182, 0.0
    %vm219 = vcmp.ge.f32.partialorder %v183, 0.0
    %vm220 = vcmp.ge.f32.partialorder %v184, 0.0
    %vm221 = vcmp.ge.f32.partialorder %v185, 0.0
    %vm222 = vcmp.ge.f32.partialorder %v186, 0.0
    %vm223 = vcmp.ge.f32.partialorder %v187, 0.0
    %vm224 = vcmp.ge.f32.partialorder %v188, 0.0
    %vm225 = vcmp.ge.f32.partialorder %v189, 0.0
    %vm226 = vcmp.ge.f32.partialorder %v190, 0.0
    %v227 = vld [vmem:[%s5] sm:$0x1]
    %v229 = vlaneseq
    %v230 = vshrl.u32 %v229, 7
    %v231 = vsub.s32 0, %v230
    %v232 = vrot.slane %v227, %v231
    %v234 = vmul.f32 %v232, %v155
    %v235 = vmul.f32 %v232, %v156
    %v236 = vmul.f32 %v232, %v157
    %v237 = vmul.f32 %v232, %v158
    %v238 = vmul.f32 %v232, %v159
    %v239 = vmul.f32 %v232, %v160
    %v240 = vmul.f32 %v232, %v161
    %v241 = vmul.f32 %v232, %v162
    %v242 = vmul.f32 %v232, %v163
    %v243 = vmul.f32 %v232, %v164
    %v244 = vmul.f32 %v232, %v165
    %v245 = vmul.f32 %v232, %v166
    %v246 = vmul.f32 %v232, %v167
    %v247 = vmul.f32 %v232, %v168
    %v248 = vmul.f32 %v232, %v169
    %v249 = vmul.f32 %v232, %v170
    %v250 = vmul.f32 %v232, %v171
    %v251 = vmul.f32 %v232, %v172
    %v252 = vmul.f32 %v232, %v173
    %v253 = vmul.f32 %v232, %v174
    %v254 = vmul.f32 %v232, %v175
    %v255 = vmul.f32 %v232, %v176
    %v256 = vmul.f32 %v232, %v177
    %v257 = vmul.f32 %v232, %v178
    %v258 = vmul.f32 %v232, %v179
    %v259 = vmul.f32 %v232, %v180
    %v260 = vmul.f32 %v232, %v181
    %v261 = vmul.f32 %v232, %v182
    %v262 = vmul.f32 %v232, %v183
    %v263 = vmul.f32 %v232, %v184
    %v264 = vmul.f32 %v232, %v185
    %v265 = vmul.f32 %v232, %v186
    %v266 = vmul.f32 %v232, %v187
    %v267 = vmul.f32 %v232, %v188
    %v268 = vmul.f32 %v232, %v189
    %v269 = vmul.f32 %v232, %v190
    %v270 = vsel %vm191, %v155, %v234
    %v271 = vsel %vm192, %v156, %v235
    %v272 = vsel %vm193, %v157, %v236
    %v273 = vsel %vm194, %v158, %v237
    %v274 = vsel %vm195, %v159, %v238
    %v275 = vsel %vm196, %v160, %v239
    %v276 = vsel %vm197, %v161, %v240
    %v277 = vsel %vm198, %v162, %v241
    %v278 = vsel %vm199, %v163, %v242
    %v279 = vsel %vm200, %v164, %v243
    %v280 = vsel %vm201, %v165, %v244
    %v281 = vsel %vm202, %v166, %v245
    %v282 = vsel %vm203, %v167, %v246
    %v283 = vsel %vm204, %v168, %v247
    %v284 = vsel %vm205, %v169, %v248
    %v285 = vsel %vm206, %v170, %v249
    %v286 = vsel %vm207, %v171, %v250
    %v287 = vsel %vm208, %v172, %v251
    %v288 = vsel %vm209, %v173, %v252
    %v289 = vsel %vm210, %v174, %v253
    %v290 = vsel %vm211, %v175, %v254
    %v291 = vsel %vm212, %v176, %v255
    %v292 = vsel %vm213, %v177, %v256
    %v293 = vsel %vm214, %v178, %v257
    %v294 = vsel %vm215, %v179, %v258
    %v295 = vsel %vm216, %v180, %v259
    %v296 = vsel %vm217, %v181, %v260
    %v297 = vsel %vm218, %v182, %v261
    %v298 = vsel %vm219, %v183, %v262
    %v299 = vsel %vm220, %v184, %v263
    %v300 = vsel %vm221, %v185, %v264
    %v301 = vsel %vm222, %v186, %v265
    %v302 = vsel %vm223, %v187, %v266
    %v303 = vsel %vm224, %v188, %v267
    %v304 = vsel %vm225, %v189, %v268
    %v305 = vsel %vm226, %v190, %v269
    %v306 = vpack.c.bf16 %v271, %v270
    %v307 = vpack.c.bf16 %v273, %v272
    %v308 = vpack.c.bf16 %v275, %v274
    %v309 = vpack.c.bf16 %v277, %v276
    %v310 = vpack.c.bf16 %v279, %v278
    %v311 = vpack.c.bf16 %v281, %v280
    %v312 = vpack.c.bf16 %v283, %v282
    %v313 = vpack.c.bf16 %v285, %v284
    %v314 = vpack.c.bf16 %v287, %v286
    %v315 = vpack.c.bf16 %v289, %v288
    %v316 = vpack.c.bf16 %v291, %v290
    %v317 = vpack.c.bf16 %v293, %v292
    %v318 = vpack.c.bf16 %v295, %v294
    %v319 = vpack.c.bf16 %v297, %v296
    %v320 = vpack.c.bf16 %v299, %v298
    %v321 = vpack.c.bf16 %v301, %v300
    %v322 = vpack.c.bf16 %v303, %v302
    %v323 = vpack.c.bf16 %v305, %v304
    %v325 = vshrl.u32 %v306, 16
    %v328 = vshrl.u32 %v307, 16
    %v331 = vshrl.u32 %v308, 16
    %v334 = vshrl.u32 %v309, 16
    %v337 = vshrl.u32 %v310, 16
    %v340 = vshrl.u32 %v311, 16
    %v343 = vshrl.u32 %v312, 16
    %v346 = vshrl.u32 %v313, 16
    %v349 = vshrl.u32 %v314, 16
    %v352 = vshrl.u32 %v315, 16
    %v355 = vshrl.u32 %v316, 16
    %v358 = vshrl.u32 %v317, 16
    %v361 = vshrl.u32 %v318, 16
    %v364 = vshrl.u32 %v319, 16
    %v367 = vshrl.u32 %v320, 16
    %v370 = vshrl.u32 %v321, 16
    %v373 = vshrl.u32 %v322, 16
    %v376 = vshrl.u32 %v323, 16
    %v396 = vrot.slane %v325, 7
    %v397 = vshll.u32 %v306, 16
    %v399 = vor.u32 %v396, %v397
    %v400 = vrot.slane %v328, 7
    %v401 = vshll.u32 %v307, 16
    %v403 = vor.u32 %v400, %v401
    %v404 = vrot.slane %v331, 7
    %v405 = vshll.u32 %v308, 16
    %v407 = vor.u32 %v404, %v405
    %v408 = vrot.slane %v334, 7
    %v409 = vshll.u32 %v309, 16
    %v411 = vor.u32 %v408, %v409
    %v412 = vrot.slane %v337, 7
    %v413 = vshll.u32 %v310, 16
    %v415 = vor.u32 %v412, %v413
    %v416 = vrot.slane %v340, 7
    %v417 = vshll.u32 %v311, 16
    %v419 = vor.u32 %v416, %v417
    %v420 = vrot.slane %v343, 7
    %v421 = vshll.u32 %v312, 16
    %v423 = vor.u32 %v420, %v421
    %v424 = vrot.slane %v346, 7
    %v425 = vshll.u32 %v313, 16
    %v427 = vor.u32 %v424, %v425
    %v428 = vrot.slane %v349, 7
    %v429 = vshll.u32 %v314, 16
    %v431 = vor.u32 %v428, %v429
    %v432 = vrot.slane %v352, 7
    %v433 = vshll.u32 %v315, 16
    %v435 = vor.u32 %v432, %v433
    %v436 = vrot.slane %v355, 7
    %v437 = vshll.u32 %v316, 16
    %v439 = vor.u32 %v436, %v437
    %v440 = vrot.slane %v358, 7
    %v441 = vshll.u32 %v317, 16
    %v443 = vor.u32 %v440, %v441
    %v444 = vrot.slane %v361, 7
    %v445 = vshll.u32 %v318, 16
    %v447 = vor.u32 %v444, %v445
    %v448 = vrot.slane %v364, 7
    %v449 = vshll.u32 %v319, 16
    %v451 = vor.u32 %v448, %v449
    %v452 = vrot.slane %v367, 7
    %v453 = vshll.u32 %v320, 16
    %v455 = vor.u32 %v452, %v453
    %v456 = vrot.slane %v370, 7
    %v457 = vshll.u32 %v321, 16
    %v459 = vor.u32 %v456, %v457
    %v460 = vrot.slane %v373, 7
    %v461 = vshll.u32 %v322, 16
    %v463 = vor.u32 %v460, %v461
    %v464 = vrot.slane %v376, 7
    %v465 = vshll.u32 %v323, 16
    %v467 = vor.u32 %v464, %v465
    %vm486 = vcmask 1040384
    %vm487 = vsmask.f32 256
    %vm488 = vmand %vm486, %vm487
    %v489 = vsel %vm488, %v325, %v399
    %v490 = vsel %vm488, %v328, %v403
    %v491 = vsel %vm488, %v331, %v407
    %v492 = vsel %vm488, %v334, %v411
    %v493 = vsel %vm488, %v337, %v415
    %v494 = vsel %vm488, %v340, %v419
    %v495 = vsel %vm488, %v343, %v423
    %v496 = vsel %vm488, %v346, %v427
    %v497 = vsel %vm488, %v349, %v431
    %v498 = vsel %vm488, %v352, %v435
    %v499 = vsel %vm488, %v355, %v439
    %v500 = vsel %vm488, %v358, %v443
    %v501 = vsel %vm488, %v361, %v447
    %v502 = vsel %vm488, %v364, %v451
    %v503 = vsel %vm488, %v367, %v455
    %v504 = vsel %vm488, %v370, %v459
    %v505 = vsel %vm488, %v373, %v463
    %v506 = vsel %vm488, %v376, %v467
    %v507 = vrot.slane %v397, 1
    %v508 = vor.u32 %v325, %v507
    %v509 = vrot.slane %v401, 1
    %v510 = vor.u32 %v328, %v509
    %v511 = vrot.slane %v405, 1
    %v512 = vor.u32 %v331, %v511
    %v513 = vrot.slane %v409, 1
    %v514 = vor.u32 %v334, %v513
    %v515 = vrot.slane %v413, 1
    %v516 = vor.u32 %v337, %v515
    %v517 = vrot.slane %v417, 1
    %v518 = vor.u32 %v340, %v517
    %v519 = vrot.slane %v421, 1
    %v520 = vor.u32 %v343, %v519
    %v521 = vrot.slane %v425, 1
    %v522 = vor.u32 %v346, %v521
    %v523 = vrot.slane %v429, 1
    %v524 = vor.u32 %v349, %v523
    %v525 = vrot.slane %v433, 1
    %v526 = vor.u32 %v352, %v525
    %v527 = vrot.slane %v437, 1
    %v528 = vor.u32 %v355, %v527
    %v529 = vrot.slane %v441, 1
    %v530 = vor.u32 %v358, %v529
    %v531 = vrot.slane %v445, 1
    %v532 = vor.u32 %v361, %v531
    %v533 = vrot.slane %v449, 1
    %v534 = vor.u32 %v364, %v533
    %v535 = vrot.slane %v453, 1
    %v536 = vor.u32 %v367, %v535
    %v537 = vrot.slane %v457, 1
    %v538 = vor.u32 %v370, %v537
    %v539 = vrot.slane %v461, 1
    %v540 = vor.u32 %v373, %v539
    %v541 = vrot.slane %v465, 1
    %v542 = vor.u32 %v376, %v541
    %vm579 = vcmask 1047552
    %vm580 = vsmask.f32 7424
    %vm581 = vmand %vm579, %vm580
    %v582 = vsel %vm581, %v508, %v397
    %v583 = vsel %vm581, %v510, %v401
    %v584 = vsel %vm581, %v512, %v405
    %v585 = vsel %vm581, %v514, %v409
    %v586 = vsel %vm581, %v516, %v413
    %v587 = vsel %vm581, %v518, %v417
    %v588 = vsel %vm581, %v520, %v421
    %v589 = vsel %vm581, %v522, %v425
    %v590 = vsel %vm581, %v524, %v429
    %v591 = vsel %vm581, %v526, %v433
    %v592 = vsel %vm581, %v528, %v437
    %v593 = vsel %vm581, %v530, %v441
    %v594 = vsel %vm581, %v532, %v445
    %v595 = vsel %vm581, %v534, %v449
    %v596 = vsel %vm581, %v536, %v453
    %v597 = vsel %vm581, %v538, %v457
    %v598 = vsel %vm581, %v540, %v461
    %v599 = vsel %vm581, %v542, %v465
    %v600 = vld [vmem:[#allocation4] sm:$0xf]
    %v601 = vld [vmem:[#allocation4 + $0x4] sm:$0xf]
    %v602 = vld [vmem:[#allocation4 + $0x8] sm:$0xf]
    %v603 = vld [vmem:[#allocation4 + $0xc] sm:$0xf]
    %v604 = vld [vmem:[#allocation4 + $0x10] sm:$0xf]
    %v605 = vld [vmem:[#allocation4 + $0x14] sm:$0xf]
    %v606 = vld [vmem:[#allocation4 + $0x18] sm:$0xf]
    %v607 = vld [vmem:[#allocation4 + $0x1c] sm:$0xf]
    %v608 = vld [vmem:[#allocation4 + $0x20] sm:$0xf]
    %v609 = vld [vmem:[#allocation4 + $0x24] sm:$0xf]
    %v610 = vld [vmem:[#allocation4 + $0x28] sm:$0xf]
    %v611 = vld [vmem:[#allocation4 + $0x2c] sm:$0xf]
    %v612 = vld [vmem:[#allocation4 + $0x30] sm:$0xf]
    %v613 = vld [vmem:[#allocation4 + $0x34] sm:$0xf]
    %v614 = vld [vmem:[#allocation4 + $0x38] sm:$0xf]
    %v615 = vld [vmem:[#allocation4 + $0x3c] sm:$0xf]
    %v616 = vld [vmem:[#allocation4 + $0x40] sm:$0xf]
    %v617 = vld [vmem:[#allocation4 + $0x44] sm:$0xf]
    %v618 = vld [vmem:[#allocation4 + $0x48] sm:$0xf]
    %v619 = vld [vmem:[#allocation4 + $0x4c] sm:$0xf]
    %v620 = vld [vmem:[#allocation4 + $0x50] sm:$0xf]
    %v621 = vld [vmem:[#allocation4 + $0x54] sm:$0xf]
    %v622 = vld [vmem:[#allocation4 + $0x58] sm:$0xf]
    %v623 = vld [vmem:[#allocation4 + $0x5c] sm:$0xf]
    %v624 = vld [vmem:[#allocation4 + $0x60] sm:$0xf]
    %v625 = vld [vmem:[#allocation4 + $0x64] sm:$0xf]
    %v626 = vld [vmem:[#allocation4 + $0x68] sm:$0xf]
    %v627 = vld [vmem:[#allocation4 + $0x6c] sm:$0xf]
    %v628 = vld [vmem:[#allocation4 + $0x70] sm:$0xf]
    %v629 = vld [vmem:[#allocation4 + $0x74] sm:$0xf]
    %v630 = vld [vmem:[#allocation4 + $0x78] sm:$0xf]
    %v631 = vld [vmem:[#allocation4 + $0x7c] sm:$0xf]
    %v632 = vld [vmem:[#allocation4 + $0x80] sm:$0xf]
    %v633 = vld [vmem:[#allocation4 + $0x84] sm:$0xf]
    %v634 = vld [vmem:[#allocation4 + $0x88] sm:$0xf]
    %v635 = vld [vmem:[#allocation4 + $0x8c] sm:$0xf]
    %v636 = vld [vmem:[#allocation4 + $0x90] sm:$0xf]
    %v637 = vld [vmem:[#allocation4 + $0x94] sm:$0xf]
    %v638 = vld [vmem:[#allocation4 + $0x98] sm:$0xf]
    %v639 = vld [vmem:[#allocation4 + $0x9c] sm:$0xf]
    %v640 = vld [vmem:[#allocation4 + $0xa0] sm:$0xf]
    %v641 = vld [vmem:[#allocation4 + $0xa4] sm:$0xf]
    %v642 = vld [vmem:[#allocation4 + $0xa8] sm:$0xf]
    %v643 = vld [vmem:[#allocation4 + $0xac] sm:$0xf]
    %v644 = vld [vmem:[#allocation4 + $0xb0] sm:$0xf]
    %v645 = vld [vmem:[#allocation4 + $0xb4] sm:$0xf]
    %v646 = vld [vmem:[#allocation4 + $0xb8] sm:$0xf]
    %v647 = vld [vmem:[#allocation4 + $0xbc] sm:$0xf]
    %s648 = scalar_lea.vmem [#allocation4], 192
    %v649 = vld [vmem:[%s648] sm:$0xf]
    %v650 = vld [vmem:[%s648 + $0x4] sm:$0xf]
    %v651 = vld [vmem:[%s648 + $0x8] sm:$0xf]
    %v652 = vld [vmem:[%s648 + $0xc] sm:$0xf]
    %v653 = vld [vmem:[%s648 + $0x10] sm:$0xf]
    %v654 = vld [vmem:[%s648 + $0x14] sm:$0xf]
    %v655 = vld [vmem:[%s648 + $0x18] sm:$0xf]
    %v656 = vld [vmem:[%s648 + $0x1c] sm:$0xf]
    %v657 = vld [vmem:[%s648 + $0x20] sm:$0xf]
    %v658 = vld [vmem:[%s648 + $0x24] sm:$0xf]
    %v659 = vld [vmem:[%s648 + $0x28] sm:$0xf]
    %v660 = vld [vmem:[%s648 + $0x2c] sm:$0xf]
    %v661 = vld [vmem:[%s648 + $0x30] sm:$0xf]
    %v662 = vld [vmem:[%s648 + $0x34] sm:$0xf]
    %v663 = vld [vmem:[%s648 + $0x38] sm:$0xf]
    %v664 = vld [vmem:[%s648 + $0x3c] sm:$0xf]
    %v665 = vld [vmem:[%s648 + $0x40] sm:$0xf]
    %v666 = vld [vmem:[%s648 + $0x44] sm:$0xf]
    %v667 = vld [vmem:[%s648 + $0x48] sm:$0xf]
    %v668 = vld [vmem:[%s648 + $0x4c] sm:$0xf]
    %v669 = vld [vmem:[%s648 + $0x50] sm:$0xf]
    %v670 = vld [vmem:[%s648 + $0x54] sm:$0xf]
    %v671 = vld [vmem:[%s648 + $0x58] sm:$0xf]
    %v672 = vld [vmem:[%s648 + $0x5c] sm:$0xf]
    %v673 = vld [vmem:[%s648 + $0x60] sm:$0xf]
    %v674 = vld [vmem:[%s648 + $0x64] sm:$0xf]
    %v675 = vld [vmem:[%s648 + $0x68] sm:$0xf]
    %v676 = vld [vmem:[%s648 + $0x6c] sm:$0xf]
    %v677 = vld [vmem:[%s648 + $0x70] sm:$0xf]
    %v678 = vld [vmem:[%s648 + $0x74] sm:$0xf]
    %v679 = vld [vmem:[%s648 + $0x78] sm:$0xf]
    %v680 = vld [vmem:[%s648 + $0x7c] sm:$0xf]
    %v681 = vld [vmem:[%s648 + $0x80] sm:$0xf]
    %v682 = vld [vmem:[%s648 + $0x84] sm:$0xf]
    %v683 = vld [vmem:[%s648 + $0x88] sm:$0xf]
    %v684 = vld [vmem:[%s648 + $0x8c] sm:$0xf]
    %v685 = vld [vmem:[%s648 + $0x90] sm:$0xf]
    %v686 = vld [vmem:[%s648 + $0x94] sm:$0xf]
    %v687 = vld [vmem:[%s648 + $0x98] sm:$0xf]
    %v688 = vld [vmem:[%s648 + $0x9c] sm:$0xf]
    %v689 = vld [vmem:[%s648 + $0xa0] sm:$0xf]
    %v690 = vld [vmem:[%s648 + $0xa4] sm:$0xf]
    %v691 = vld [vmem:[%s648 + $0xa8] sm:$0xf]
    %v692 = vld [vmem:[%s648 + $0xac] sm:$0xf]
    %v693 = vld [vmem:[%s648 + $0xb0] sm:$0xf]
    %v694 = vld [vmem:[%s648 + $0xb4] sm:$0xf]
    %v695 = vld [vmem:[%s648 + $0xb8] sm:$0xf]
    %v696 = vld [vmem:[%s648 + $0xbc] sm:$0xf]
    %v745 = vunpack.c.l.b16 %v649
    %v746 = vunpack.c.l.b16 %v650
    %v747 = vunpack.c.l.b16 %v651
    %v748 = vunpack.c.l.b16 %v652
    %v749 = vunpack.c.l.b16 %v653
    %v750 = vunpack.c.l.b16 %v654
    %v751 = vunpack.c.l.b16 %v655
    %v752 = vunpack.c.l.b16 %v656
    %v753 = vunpack.c.l.b16 %v657
    %v754 = vunpack.c.l.b16 %v658
    %v755 = vunpack.c.l.b16 %v659
    %v756 = vunpack.c.l.b16 %v660
    %v757 = vunpack.c.l.b16 %v661
    %v758 = vunpack.c.l.b16 %v662
    %v759 = vunpack.c.l.b16 %v663
    %v760 = vunpack.c.l.b16 %v664
    %v761 = vunpack.c.l.b16 %v665
    %v762 = vunpack.c.l.b16 %v666
    %v763 = vunpack.c.l.b16 %v667
    %v764 = vunpack.c.l.b16 %v668
    %v765 = vunpack.c.l.b16 %v669
    %v766 = vunpack.c.l.b16 %v670
    %v767 = vunpack.c.l.b16 %v671
    %v768 = vunpack.c.l.b16 %v672
    %v769 = vunpack.c.l.b16 %v673
    %v770 = vunpack.c.l.b16 %v674
    %v771 = vunpack.c.l.b16 %v675
    %v772 = vunpack.c.l.b16 %v676
    %v773 = vunpack.c.l.b16 %v677
    %v774 = vunpack.c.l.b16 %v678
    %v775 = vunpack.c.l.b16 %v679
    %v776 = vunpack.c.l.b16 %v680
    %v777 = vunpack.c.l.b16 %v681
    %v778 = vunpack.c.l.b16 %v682
    %v779 = vunpack.c.l.b16 %v683
    %v780 = vunpack.c.l.b16 %v684
    %v781 = vunpack.c.l.b16 %v685
    %v782 = vunpack.c.l.b16 %v686
    %v783 = vunpack.c.l.b16 %v687
    %v784 = vunpack.c.l.b16 %v688
    %v785 = vunpack.c.l.b16 %v689
    %v786 = vunpack.c.l.b16 %v690
    %v787 = vunpack.c.l.b16 %v691
    %v788 = vunpack.c.l.b16 %v692
    %v789 = vunpack.c.l.b16 %v693
    %v790 = vunpack.c.l.b16 %v694
    %v791 = vunpack.c.l.b16 %v695
    %v792 = vunpack.c.l.b16 %v696
    %v793 = vpack.c.b16 %v746, %v745
    %v794 = vpack.c.b16 %v748, %v747
    %v795 = vpack.c.b16 %v750, %v749
    %v796 = vpack.c.b16 %v752, %v751
    %v797 = vpack.c.b16 %v754, %v753
    %v798 = vpack.c.b16 %v756, %v755
    %v799 = vpack.c.b16 %v758, %v757
    %v800 = vpack.c.b16 %v760, %v759
    %v801 = vpack.c.b16 %v762, %v761
    %v802 = vpack.c.b16 %v764, %v763
    %v803 = vpack.c.b16 %v766, %v765
    %v804 = vpack.c.b16 %v768, %v767
    %v805 = vpack.c.b16 %v770, %v769
    %v806 = vpack.c.b16 %v772, %v771
    %v807 = vpack.c.b16 %v774, %v773
    %v808 = vpack.c.b16 %v776, %v775
    %v809 = vpack.c.b16 %v778, %v777
    %v810 = vpack.c.b16 %v780, %v779
    %v811 = vpack.c.b16 %v782, %v781
    %v812 = vpack.c.b16 %v784, %v783
    %v813 = vpack.c.b16 %v786, %v785
    %v814 = vpack.c.b16 %v788, %v787
    %v815 = vpack.c.b16 %v790, %v789
    %v816 = vpack.c.b16 %v792, %v791
    %841 = vmatprep.subr.bf16.mxu0 0
    %842 = vmatpush1.bf16.msra.mxu0 %v800
    %843 = vmatprep.subr.bf16.mxu0 0
    %844 = vmatpush1.bf16.msra.mxu0 %v799
    %845 = vmatprep.subr.bf16.mxu0 0
    %846 = vmatpush1.bf16.msra.mxu0 %v798
    %847 = vmatprep.subr.bf16.mxu0 0
    %848 = vmatpush1.bf16.msra.mxu0 %v797
    %849 = vmatprep.subr.bf16.mxu0 0
    %850 = vmatpush1.bf16.msra.mxu0 %v796
    %851 = vmatprep.subr.bf16.mxu0 0
    %852 = vmatpush1.bf16.msra.mxu0 %v795
    %853 = vmatprep.subr.bf16.mxu0 0
    %854 = vmatpush1.bf16.msra.mxu0 %v794
    %855 = vmatprep.subr.bf16.mxu0 0
    %856 = vmatpush1.bf16.msra.mxu0 %v793
    %857 = vmatprep.subr.bf16.mxu0 0
    %858 = vmatpush2.bf16.msra.mxu0 %v808
    %859 = vmatprep.subr.bf16.mxu0 0
    %860 = vmatpush2.bf16.msra.mxu0 %v807
    %861 = vmatprep.subr.bf16.mxu0 0
    %862 = vmatpush2.bf16.msra.mxu0 %v806
    %863 = vmatprep.subr.bf16.mxu0 0
    %864 = vmatpush2.bf16.msra.mxu0 %v805
    %865 = vmatprep.subr.bf16.mxu0 0
    %866 = vmatpush2.bf16.msra.mxu0 %v804
    %867 = vmatprep.subr.bf16.mxu0 0
    %868 = vmatpush2.bf16.msra.mxu0 %v803
    %869 = vmatprep.subr.bf16.mxu0 0
    %870 = vmatpush2.bf16.msra.mxu0 %v802
    %871 = vmatprep.subr.bf16.mxu0 0
    %872 = vmatpush2.bf16.msra.mxu0 %v801
    %873 = vmatprep.mubr.bf16.mxu0 %v307
    %874 = vmatmul.mubr.bf16.gmra.mxu0 %v490
    %v875 = vpop.f32.mrf.mxu0
    %v876 = vadd.f32 0.0, %v875
    %v877 = vpop.f32.mrf.mxu0
    %v878 = vpop.f32.mrf.mxu0
    %v879 = vadd.f32 0.0, %v878
    %v880 = vpop.f32.mrf.mxu0
    %881 = vmatprep.mubr.bf16.mxu0 %v308
    %882 = vmatmul.mubr.bf16.gmra.mxu0 %v491
    %v883 = vpop.f32.mrf.mxu0
    %v884 = vadd.f32 0.0, %v883
    %v885 = vpop.f32.mrf.mxu0
    %v886 = vpop.f32.mrf.mxu0
    %v887 = vadd.f32 0.0, %v886
    %v888 = vpop.f32.mrf.mxu0
    %889 = vmatprep.mubr.bf16.mxu0 %v309
    %890 = vmatmul.mubr.bf16.gmra.mxu0 %v492
    %v891 = vpop.f32.mrf.mxu0
    %v892 = vadd.f32 0.0, %v891
    %v893 = vpop.f32.mrf.mxu0
    %v894 = vpop.f32.mrf.mxu0
    %v895 = vadd.f32 0.0, %v894
    %v896 = vpop.f32.mrf.mxu0
    %897 = vmatprep.mubr.bf16.mxu0 %v310
    %898 = vmatmul.mubr.bf16.gmra.mxu0 %v493
    %v899 = vpop.f32.mrf.mxu0
    %v900 = vadd.f32 0.0, %v899
    %v901 = vpop.f32.mrf.mxu0
    %v902 = vpop.f32.mrf.mxu0
    %v903 = vadd.f32 0.0, %v902
    %v904 = vpop.f32.mrf.mxu0
    %905 = vmatprep.mubr.bf16.mxu0 %v311
    %906 = vmatmul.mubr.bf16.gmra.mxu0 %v494
    %v907 = vpop.f32.mrf.mxu0
    %v908 = vadd.f32 0.0, %v907
    %v909 = vpop.f32.mrf.mxu0
    %v910 = vpop.f32.mrf.mxu0
    %v911 = vadd.f32 0.0, %v910
    %v912 = vpop.f32.mrf.mxu0
    %913 = vmatprep.mubr.bf16.mxu0 %v312
    %914 = vmatmul.mubr.bf16.gmra.mxu0 %v495
    %v915 = vpop.f32.mrf.mxu0
    %v916 = vadd.f32 0.0, %v915
    %v917 = vpop.f32.mrf.mxu0
    %v918 = vpop.f32.mrf.mxu0
    %v919 = vadd.f32 0.0, %v918
    %v920 = vpop.f32.mrf.mxu0
    %921 = vmatprep.mubr.bf16.mxu0 %v313
    %922 = vmatmul.mubr.bf16.gmra.mxu0 %v496
    %v923 = vpop.f32.mrf.mxu0
    %v924 = vadd.f32 0.0, %v923
    %v925 = vpop.f32.mrf.mxu0
    %v926 = vpop.f32.mrf.mxu0
    %v927 = vadd.f32 0.0, %v926
    %v928 = vpop.f32.mrf.mxu0
    %929 = vmatprep.mubr.bf16.mxu0 %v314
    %930 = vmatmul.mubr.bf16.gmra.mxu0 %v497
    %v931 = vpop.f32.mrf.mxu0
    %v932 = vadd.f32 0.0, %v931
    %v933 = vpop.f32.mrf.mxu0
    %v934 = vpop.f32.mrf.mxu0
    %v935 = vadd.f32 0.0, %v934
    %v936 = vpop.f32.mrf.mxu0
    %937 = vmatprep.mubr.bf16.mxu0 %v315
    %938 = vmatmul.mubr.bf16.gmra.mxu0 %v498
    %v939 = vpop.f32.mrf.mxu0
    %v940 = vadd.f32 0.0, %v939
    %v941 = vpop.f32.mrf.mxu0
    %v942 = vpop.f32.mrf.mxu0
    %v943 = vadd.f32 0.0, %v942
    %v944 = vpop.f32.mrf.mxu0
    %945 = vmatprep.mubr.bf16.mxu0 %v316
    %946 = vmatmul.mubr.bf16.gmra.mxu0 %v499
    %v947 = vpop.f32.mrf.mxu0
    %v948 = vadd.f32 0.0, %v947
    %v949 = vpop.f32.mrf.mxu0
    %v950 = vpop.f32.mrf.mxu0
    %v951 = vadd.f32 0.0, %v950
    %v952 = vpop.f32.mrf.mxu0
    %953 = vmatprep.mubr.bf16.mxu0 %v317
    %954 = vmatmul.mubr.bf16.gmra.mxu0 %v500
    %v955 = vpop.f32.mrf.mxu0
    %v956 = vadd.f32 0.0, %v955
    %v957 = vpop.f32.mrf.mxu0
    %v958 = vpop.f32.mrf.mxu0
    %v959 = vadd.f32 0.0, %v958
    %v960 = vpop.f32.mrf.mxu0
    %961 = vmatprep.mubr.bf16.mxu0 %v318
    %962 = vmatmul.mubr.bf16.gmra.mxu0 %v501
    %v963 = vpop.f32.mrf.mxu0
    %v964 = vadd.f32 0.0, %v963
    %v965 = vpop.f32.mrf.mxu0
    %v966 = vpop.f32.mrf.mxu0
    %v967 = vadd.f32 0.0, %v966
    %v968 = vpop.f32.mrf.mxu0
    %969 = vmatprep.mubr.bf16.mxu0 %v319
    %970 = vmatmul.mubr.bf16.gmra.mxu0 %v502
    %v971 = vpop.f32.mrf.mxu0
    %v972 = vadd.f32 0.0, %v971
    %v973 = vpop.f32.mrf.mxu0
    %v974 = vpop.f32.mrf.mxu0
    %v975 = vadd.f32 0.0, %v974
    %v976 = vpop.f32.mrf.mxu0
    %977 = vmatprep.mubr.bf16.mxu0 %v320
    %978 = vmatmul.mubr.bf16.gmra.mxu0 %v503
    %v979 = vpop.f32.mrf.mxu0
    %v980 = vadd.f32 0.0, %v979
    %v981 = vpop.f32.mrf.mxu0
    %v982 = vpop.f32.mrf.mxu0
    %v983 = vadd.f32 0.0, %v982
    %v984 = vpop.f32.mrf.mxu0
    %985 = vmatprep.mubr.bf16.mxu0 %v321
    %986 = vmatmul.mubr.bf16.gmra.mxu0 %v504
    %v987 = vpop.f32.mrf.mxu0
    %v988 = vadd.f32 0.0, %v987
    %v989 = vpop.f32.mrf.mxu0
    %v990 = vpop.f32.mrf.mxu0
    %v991 = vadd.f32 0.0, %v990
    %v992 = vpop.f32.mrf.mxu0
    %993 = vmatprep.mubr.bf16.mxu0 %v322
    %994 = vmatmul.mubr.bf16.gmra.mxu0 %v505
    %v995 = vpop.f32.mrf.mxu0
    %v996 = vadd.f32 0.0, %v995
    %v997 = vpop.f32.mrf.mxu0
    %v998 = vpop.f32.mrf.mxu0
    %v999 = vadd.f32 0.0, %v998
    %v1000 = vpop.f32.mrf.mxu0
    %1001 = vdwg.mxu0
    %1002 = vmatprep.subr.bf16.mxu0 0
    %1003 = vmatpush1.bf16.msra.mxu0 %v816
    %1004 = vmatprep.subr.bf16.mxu0 0
    %1005 = vmatpush1.bf16.msra.mxu0 %v815
    %1006 = vmatprep.subr.bf16.mxu0 0
    %1007 = vmatpush1.bf16.msra.mxu0 %v814
    %1008 = vmatprep.subr.bf16.mxu0 0
    %1009 = vmatpush1.bf16.msra.mxu0 %v813
    %1010 = vmatprep.subr.bf16.mxu0 0
    %1011 = vmatpush1.bf16.msra.mxu0 %v812
    %1012 = vmatprep.subr.bf16.mxu0 0
    %1013 = vmatpush1.bf16.msra.mxu0 %v811
    %1014 = vmatprep.subr.bf16.mxu0 0
    %1015 = vmatpush1.bf16.msra.mxu0 %v810
    %1016 = vmatprep.subr.bf16.mxu0 0
    %1017 = vmatpush1.bf16.msra.mxu0 %v809
    %1018 = vmatprep.subr.bf16.mxu0 0
    %1019 = vmatpush2.bf16.msra.mxu0 0
    %1020 = vmatprep.subr.bf16.mxu0 0
    %1021 = vmatpush2.bf16.msra.mxu0 0
    %1022 = vmatprep.subr.bf16.mxu0 0
    %1023 = vmatpush2.bf16.msra.mxu0 0
    %1024 = vmatprep.subr.bf16.mxu0 0
    %1025 = vmatpush2.bf16.msra.mxu0 0
    %1026 = vmatprep.subr.bf16.mxu0 0
    %1027 = vmatpush2.bf16.msra.mxu0 0
    %1028 = vmatprep.subr.bf16.mxu0 0
    %1029 = vmatpush2.bf16.msra.mxu0 0
    %1030 = vmatprep.subr.bf16.mxu0 0
    %1031 = vmatpush2.bf16.msra.mxu0 0
    %1032 = vmatprep.subr.bf16.mxu0 0
    %1033 = vmatpush2.bf16.msra.mxu0 0
    %1034 = vmatprep.mubr.bf16.mxu0 0
    %1035 = vmatmul.mubr.bf16.gmra.mxu0 %v583
    %v1036 = vpop.f32.mrf.mxu0
    %v1037 = vadd.f32 %v876, %v1036
    %v1038 = vpop.f32.mrf.mxu0
    %v1039 = vpop.f32.mrf.mxu0
    %v1040 = vadd.f32 %v879, %v1039
    %v1041 = vpop.f32.mrf.mxu0
    %1042 = vmatprep.mubr.bf16.mxu0 0
    %1043 = vmatmul.mubr.bf16.gmra.mxu0 %v584
    %v1044 = vpop.f32.mrf.mxu0
    %v1045 = vadd.f32 %v884, %v1044
    %v1046 = vpop.f32.mrf.mxu0
    %v1047 = vpop.f32.mrf.mxu0
    %v1048 = vadd.f32 %v887, %v1047
    %v1049 = vpop.f32.mrf.mxu0
    %1050 = vmatprep.mubr.bf16.mxu0 0
    %1051 = vmatmul.mubr.bf16.gmra.mxu0 %v585
    %v1052 = vpop.f32.mrf.mxu0
    %v1053 = vadd.f32 %v892, %v1052
    %v1054 = vpop.f32.mrf.mxu0
    %v1055 = vpop.f32.mrf.mxu0
    %v1056 = vadd.f32 %v895, %v1055
    %v1057 = vpop.f32.mrf.mxu0
    %1058 = vmatprep.mubr.bf16.mxu0 0
    %1059 = vmatmul.mubr.bf16.gmra.mxu0 %v586
    %v1060 = vpop.f32.mrf.mxu0
    %v1061 = vadd.f32 %v900, %v1060
    %v1062 = vpop.f32.mrf.mxu0
    %v1063 = vpop.f32.mrf.mxu0
    %v1064 = vadd.f32 %v903, %v1063
    %v1065 = vpop.f32.mrf.mxu0
    %1066 = vmatprep.mubr.bf16.mxu0 0
    %1067 = vmatmul.mubr.bf16.gmra.mxu0 %v587
    %v1068 = vpop.f32.mrf.mxu0
    %v1069 = vadd.f32 %v908, %v1068
    %v1070 = vpop.f32.mrf.mxu0
    %v1071 = vpop.f32.mrf.mxu0
    %v1072 = vadd.f32 %v911, %v1071
    %v1073 = vpop.f32.mrf.mxu0
    %1074 = vmatprep.mubr.bf16.mxu0 0
    %1075 = vmatmul.mubr.bf16.gmra.mxu0 %v588
    %v1076 = vpop.f32.mrf.mxu0
    %v1077 = vadd.f32 %v916, %v1076
    %v1078 = vpop.f32.mrf.mxu0
    %v1079 = vpop.f32.mrf.mxu0
    %v1080 = vadd.f32 %v919, %v1079
    %v1081 = vpop.f32.mrf.mxu0
    %1082 = vmatprep.mubr.bf16.mxu0 0
    %1083 = vmatmul.mubr.bf16.gmra.mxu0 %v589
    %v1084 = vpop.f32.mrf.mxu0
    %v1085 = vadd.f32 %v924, %v1084
    %v1086 = vpop.f32.mrf.mxu0
    %v1087 = vpop.f32.mrf.mxu0
    %v1088 = vadd.f32 %v927, %v1087
    %v1089 = vpop.f32.mrf.mxu0
    %1090 = vmatprep.mubr.bf16.mxu0 0
    %1091 = vmatmul.mubr.bf16.gmra.mxu0 %v590
    %v1092 = vpop.f32.mrf.mxu0
    %v1093 = vadd.f32 %v932, %v1092
    %v1094 = vpop.f32.mrf.mxu0
    %v1095 = vpop.f32.mrf.mxu0
    %v1096 = vadd.f32 %v935, %v1095
    %v1097 = vpop.f32.mrf.mxu0
    %1098 = vmatprep.mubr.bf16.mxu0 0
    %1099 = vmatmul.mubr.bf16.gmra.mxu0 %v591
    %v1100 = vpop.f32.mrf.mxu0
    %v1101 = vadd.f32 %v940, %v1100
    %v1102 = vpop.f32.mrf.mxu0
    %v1103 = vpop.f32.mrf.mxu0
    %v1104 = vadd.f32 %v943, %v1103
    %v1105 = vpop.f32.mrf.mxu0
    %1106 = vmatprep.mubr.bf16.mxu0 0
    %1107 = vmatmul.mubr.bf16.gmra.mxu0 %v592
    %v1108 = vpop.f32.mrf.mxu0
    %v1109 = vadd.f32 %v948, %v1108
    %v1110 = vpop.f32.mrf.mxu0
    %v1111 = vpop.f32.mrf.mxu0
    %v1112 = vadd.f32 %v951, %v1111
    %v1113 = vpop.f32.mrf.mxu0
    %1114 = vmatprep.mubr.bf16.mxu0 0
    %1115 = vmatmul.mubr.bf16.gmra.mxu0 %v593
    %v1116 = vpop.f32.mrf.mxu0
    %v1117 = vadd.f32 %v956, %v1116
    %v1118 = vpop.f32.mrf.mxu0
    %v1119 = vpop.f32.mrf.mxu0
    %v1120 = vadd.f32 %v959, %v1119
    %v1121 = vpop.f32.mrf.mxu0
    %1122 = vmatprep.mubr.bf16.mxu0 0
    %1123 = vmatmul.mubr.bf16.gmra.mxu0 %v594
    %v1124 = vpop.f32.mrf.mxu0
    %v1125 = vadd.f32 %v964, %v1124
    %v1126 = vpop.f32.mrf.mxu0
    %v1127 = vpop.f32.mrf.mxu0
    %v1128 = vadd.f32 %v967, %v1127
    %v1129 = vpop.f32.mrf.mxu0
    %1130 = vmatprep.mubr.bf16.mxu0 0
    %1131 = vmatmul.mubr.bf16.gmra.mxu0 %v595
    %v1132 = vpop.f32.mrf.mxu0
    %v1133 = vadd.f32 %v972, %v1132
    %v1134 = vpop.f32.mrf.mxu0
    %v1135 = vpop.f32.mrf.mxu0
    %v1136 = vadd.f32 %v975, %v1135
    %v1137 = vpop.f32.mrf.mxu0
    %1138 = vmatprep.mubr.bf16.mxu0 0
    %1139 = vmatmul.mubr.bf16.gmra.mxu0 %v596
    %v1140 = vpop.f32.mrf.mxu0
    %v1141 = vadd.f32 %v980, %v1140
    %v1142 = vpop.f32.mrf.mxu0
    %v1143 = vpop.f32.mrf.mxu0
    %v1144 = vadd.f32 %v983, %v1143
    %v1145 = vpop.f32.mrf.mxu0
    %1146 = vmatprep.mubr.bf16.mxu0 0
    %1147 = vmatmul.mubr.bf16.gmra.mxu0 %v597
    %v1148 = vpop.f32.mrf.mxu0
    %v1149 = vadd.f32 %v988, %v1148
    %v1150 = vpop.f32.mrf.mxu0
    %v1151 = vpop.f32.mrf.mxu0
    %v1152 = vadd.f32 %v991, %v1151
    %v1153 = vpop.f32.mrf.mxu0
    %1154 = vmatprep.mubr.bf16.mxu0 0
    %1155 = vmatmul.mubr.bf16.gmra.mxu0 %v598
    %v1156 = vpop.f32.mrf.mxu0
    %v1157 = vadd.f32 %v996, %v1156
    %v1158 = vpop.f32.mrf.mxu0
    %v1159 = vpop.f32.mrf.mxu0
    %v1160 = vadd.f32 %v999, %v1159
    %v1161 = vpop.f32.mrf.mxu0
    %1162 = vdwg.mxu0
    %v1211 = vunpack.c.l.b16 %v600
    %v1212 = vunpack.c.l.b16 %v601
    %v1213 = vunpack.c.l.b16 %v602
    %v1214 = vunpack.c.l.b16 %v603
    %v1215 = vunpack.c.l.b16 %v604
    %v1216 = vunpack.c.l.b16 %v605
    %v1217 = vunpack.c.l.b16 %v606
    %v1218 = vunpack.c.l.b16 %v607
    %v1219 = vunpack.c.l.b16 %v608
    %v1220 = vunpack.c.l.b16 %v609
    %v1221 = vunpack.c.l.b16 %v610
    %v1222 = vunpack.c.l.b16 %v611
    %v1223 = vunpack.c.l.b16 %v612
    %v1224 = vunpack.c.l.b16 %v613
    %v1225 = vunpack.c.l.b16 %v614
    %v1226 = vunpack.c.l.b16 %v615
    %v1227 = vunpack.c.l.b16 %v616
    %v1228 = vunpack.c.l.b16 %v617
    %v1229 = vunpack.c.l.b16 %v618
    %v1230 = vunpack.c.l.b16 %v619
    %v1231 = vunpack.c.l.b16 %v620
    %v1232 = vunpack.c.l.b16 %v621
    %v1233 = vunpack.c.l.b16 %v622
    %v1234 = vunpack.c.l.b16 %v623
    %v1235 = vunpack.c.l.b16 %v624
    %v1236 = vunpack.c.l.b16 %v625
    %v1237 = vunpack.c.l.b16 %v626
    %v1238 = vunpack.c.l.b16 %v627
    %v1239 = vunpack.c.l.b16 %v628
    %v1240 = vunpack.c.l.b16 %v629
    %v1241 = vunpack.c.l.b16 %v630
    %v1242 = vunpack.c.l.b16 %v631
    %v1243 = vunpack.c.l.b16 %v632
    %v1244 = vunpack.c.l.b16 %v633
    %v1245 = vunpack.c.l.b16 %v634
    %v1246 = vunpack.c.l.b16 %v635
    %v1247 = vunpack.c.l.b16 %v636
    %v1248 = vunpack.c.l.b16 %v637
    %v1249 = vunpack.c.l.b16 %v638
    %v1250 = vunpack.c.l.b16 %v639
    %v1251 = vunpack.c.l.b16 %v640
    %v1252 = vunpack.c.l.b16 %v641
    %v1253 = vunpack.c.l.b16 %v642
    %v1254 = vunpack.c.l.b16 %v643
    %v1255 = vunpack.c.l.b16 %v644
    %v1256 = vunpack.c.l.b16 %v645
    %v1257 = vunpack.c.l.b16 %v646
    %v1258 = vunpack.c.l.b16 %v647
    %v1259 = vpack.c.b16 %v1212, %v1211
    %v1260 = vpack.c.b16 %v1214, %v1213
    %v1261 = vpack.c.b16 %v1216, %v1215
    %v1262 = vpack.c.b16 %v1218, %v1217
    %v1263 = vpack.c.b16 %v1220, %v1219
    %v1264 = vpack.c.b16 %v1222, %v1221
    %v1265 = vpack.c.b16 %v1224, %v1223
    %v1266 = vpack.c.b16 %v1226, %v1225
    %v1267 = vpack.c.b16 %v1228, %v1227
    %v1268 = vpack.c.b16 %v1230, %v1229
    %v1269 = vpack.c.b16 %v1232, %v1231
    %v1270 = vpack.c.b16 %v1234, %v1233
    %v1271 = vpack.c.b16 %v1236, %v1235
    %v1272 = vpack.c.b16 %v1238, %v1237
    %v1273 = vpack.c.b16 %v1240, %v1239
    %v1274 = vpack.c.b16 %v1242, %v1241
    %v1275 = vpack.c.b16 %v1244, %v1243
    %v1276 = vpack.c.b16 %v1246, %v1245
    %v1277 = vpack.c.b16 %v1248, %v1247
    %v1278 = vpack.c.b16 %v1250, %v1249
    %v1279 = vpack.c.b16 %v1252, %v1251
    %v1280 = vpack.c.b16 %v1254, %v1253
    %v1281 = vpack.c.b16 %v1256, %v1255
    %v1282 = vpack.c.b16 %v1258, %v1257
    %1307 = vmatprep.subr.bf16.mxu0 0
    %1308 = vmatpush1.bf16.msra.mxu0 %v1266
    %1309 = vmatprep.subr.bf16.mxu0 0
    %1310 = vmatpush1.bf16.msra.mxu0 %v1265
    %1311 = vmatprep.subr.bf16.mxu0 0
    %1312 = vmatpush1.bf16.msra.mxu0 %v1264
    %1313 = vmatprep.subr.bf16.mxu0 0
    %1314 = vmatpush1.bf16.msra.mxu0 %v1263
    %1315 = vmatprep.subr.bf16.mxu0 0
    %1316 = vmatpush1.bf16.msra.mxu0 %v1262
    %1317 = vmatprep.subr.bf16.mxu0 0
    %1318 = vmatpush1.bf16.msra.mxu0 %v1261
    %1319 = vmatprep.subr.bf16.mxu0 0
    %1320 = vmatpush1.bf16.msra.mxu0 %v1260
    %1321 = vmatprep.subr.bf16.mxu0 0
    %1322 = vmatpush1.bf16.msra.mxu0 %v1259
    %1323 = vmatprep.subr.bf16.mxu0 0
    %1324 = vmatpush2.bf16.msra.mxu0 %v1274
    %1325 = vmatprep.subr.bf16.mxu0 0
    %1326 = vmatpush2.bf16.msra.mxu0 %v1273
    %1327 = vmatprep.subr.bf16.mxu0 0
    %1328 = vmatpush2.bf16.msra.mxu0 %v1272
    %1329 = vmatprep.subr.bf16.mxu0 0
    %1330 = vmatpush2.bf16.msra.mxu0 %v1271
    %1331 = vmatprep.subr.bf16.mxu0 0
    %1332 = vmatpush2.bf16.msra.mxu0 %v1270
    %1333 = vmatprep.subr.bf16.mxu0 0
    %1334 = vmatpush2.bf16.msra.mxu0 %v1269
    %1335 = vmatprep.subr.bf16.mxu0 0
    %1336 = vmatpush2.bf16.msra.mxu0 %v1268
    %1337 = vmatprep.subr.bf16.mxu0 0
    %1338 = vmatpush2.bf16.msra.mxu0 %v1267
    %1339 = vmatprep.mubr.bf16.mxu0 %v306
    %1340 = vmatmul.mubr.bf16.gmra.mxu0 %v489
    %v1341 = vpop.f32.mrf.mxu0
    %v1342 = vadd.f32 %v1037, %v1341
    %v1343 = vpop.f32.mrf.mxu0
    %v1344 = vpop.f32.mrf.mxu0
    %v1345 = vadd.f32 %v1040, %v1344
    %v1346 = vpop.f32.mrf.mxu0
    %1347 = vmatprep.mubr.bf16.mxu0 %v307
    %1348 = vmatmul.mubr.bf16.gmra.mxu0 %v490
    %v1349 = vpop.f32.mrf.mxu0
    %v1350 = vadd.f32 %v1045, %v1349
    %v1351 = vpop.f32.mrf.mxu0
    %v1352 = vpop.f32.mrf.mxu0
    %v1353 = vadd.f32 %v1048, %v1352
    %v1354 = vpop.f32.mrf.mxu0
    %1355 = vmatprep.mubr.bf16.mxu0 %v308
    %1356 = vmatmul.mubr.bf16.gmra.mxu0 %v491
    %v1357 = vpop.f32.mrf.mxu0
    %v1358 = vadd.f32 %v1053, %v1357
    %v1359 = vpop.f32.mrf.mxu0
    %v1360 = vpop.f32.mrf.mxu0
    %v1361 = vadd.f32 %v1056, %v1360
    %v1362 = vpop.f32.mrf.mxu0
    %1363 = vmatprep.mubr.bf16.mxu0 %v309
    %1364 = vmatmul.mubr.bf16.gmra.mxu0 %v492
    %v1365 = vpop.f32.mrf.mxu0
    %v1366 = vadd.f32 %v1061, %v1365
    %v1367 = vpop.f32.mrf.mxu0
    %v1368 = vpop.f32.mrf.mxu0
    %v1369 = vadd.f32 %v1064, %v1368
    %v1370 = vpop.f32.mrf.mxu0
    %1371 = vmatprep.mubr.bf16.mxu0 %v310
    %1372 = vmatmul.mubr.bf16.gmra.mxu0 %v493
    %v1373 = vpop.f32.mrf.mxu0
    %v1374 = vadd.f32 %v1069, %v1373
    %v1375 = vpop.f32.mrf.mxu0
    %v1376 = vpop.f32.mrf.mxu0
    %v1377 = vadd.f32 %v1072, %v1376
    %v1378 = vpop.f32.mrf.mxu0
    %1379 = vmatprep.mubr.bf16.mxu0 %v311
    %1380 = vmatmul.mubr.bf16.gmra.mxu0 %v494
    %v1381 = vpop.f32.mrf.mxu0
    %v1382 = vadd.f32 %v1077, %v1381
    %v1383 = vpop.f32.mrf.mxu0
    %v1384 = vpop.f32.mrf.mxu0
    %v1385 = vadd.f32 %v1080, %v1384
    %v1386 = vpop.f32.mrf.mxu0
    %1387 = vmatprep.mubr.bf16.mxu0 %v312
    %1388 = vmatmul.mubr.bf16.gmra.mxu0 %v495
    %v1389 = vpop.f32.mrf.mxu0
    %v1390 = vadd.f32 %v1085, %v1389
    %v1391 = vpop.f32.mrf.mxu0
    %v1392 = vpop.f32.mrf.mxu0
    %v1393 = vadd.f32 %v1088, %v1392
    %v1394 = vpop.f32.mrf.mxu0
    %1395 = vmatprep.mubr.bf16.mxu0 %v313
    %1396 = vmatmul.mubr.bf16.gmra.mxu0 %v496
    %v1397 = vpop.f32.mrf.mxu0
    %v1398 = vadd.f32 %v1093, %v1397
    %v1399 = vpop.f32.mrf.mxu0
    %v1400 = vpop.f32.mrf.mxu0
    %v1401 = vadd.f32 %v1096, %v1400
    %v1402 = vpop.f32.mrf.mxu0
    %1403 = vmatprep.mubr.bf16.mxu0 %v314
    %1404 = vmatmul.mubr.bf16.gmra.mxu0 %v497
    %v1405 = vpop.f32.mrf.mxu0
    %v1406 = vadd.f32 %v1101, %v1405
    %v1407 = vpop.f32.mrf.mxu0
    %v1408 = vpop.f32.mrf.mxu0
    %v1409 = vadd.f32 %v1104, %v1408
    %v1410 = vpop.f32.mrf.mxu0
    %1411 = vmatprep.mubr.bf16.mxu0 %v315
    %1412 = vmatmul.mubr.bf16.gmra.mxu0 %v498
    %v1413 = vpop.f32.mrf.mxu0
    %v1414 = vadd.f32 %v1109, %v1413
    %v1415 = vpop.f32.mrf.mxu0
    %v1416 = vpop.f32.mrf.mxu0
    %v1417 = vadd.f32 %v1112, %v1416
    %v1418 = vpop.f32.mrf.mxu0
    %1419 = vmatprep.mubr.bf16.mxu0 %v316
    %1420 = vmatmul.mubr.bf16.gmra.mxu0 %v499
    %v1421 = vpop.f32.mrf.mxu0
    %v1422 = vadd.f32 %v1117, %v1421
    %v1423 = vpop.f32.mrf.mxu0
    %v1424 = vpop.f32.mrf.mxu0
    %v1425 = vadd.f32 %v1120, %v1424
    %v1426 = vpop.f32.mrf.mxu0
    %1427 = vmatprep.mubr.bf16.mxu0 %v317
    %1428 = vmatmul.mubr.bf16.gmra.mxu0 %v500
    %v1429 = vpop.f32.mrf.mxu0
    %v1430 = vadd.f32 %v1125, %v1429
    %v1431 = vpop.f32.mrf.mxu0
    %v1432 = vpop.f32.mrf.mxu0
    %v1433 = vadd.f32 %v1128, %v1432
    %v1434 = vpop.f32.mrf.mxu0
    %1435 = vmatprep.mubr.bf16.mxu0 %v318
    %1436 = vmatmul.mubr.bf16.gmra.mxu0 %v501
    %v1437 = vpop.f32.mrf.mxu0
    %v1438 = vadd.f32 %v1133, %v1437
    %v1439 = vpop.f32.mrf.mxu0
    %v1440 = vpop.f32.mrf.mxu0
    %v1441 = vadd.f32 %v1136, %v1440
    %v1442 = vpop.f32.mrf.mxu0
    %1443 = vmatprep.mubr.bf16.mxu0 %v319
    %1444 = vmatmul.mubr.bf16.gmra.mxu0 %v502
    %v1445 = vpop.f32.mrf.mxu0
    %v1446 = vadd.f32 %v1141, %v1445
    %v1447 = vpop.f32.mrf.mxu0
    %v1448 = vpop.f32.mrf.mxu0
    %v1449 = vadd.f32 %v1144, %v1448
    %v1450 = vpop.f32.mrf.mxu0
    %1451 = vmatprep.mubr.bf16.mxu0 %v320
    %1452 = vmatmul.mubr.bf16.gmra.mxu0 %v503
    %v1453 = vpop.f32.mrf.mxu0
    %v1454 = vadd.f32 %v1149, %v1453
    %v1455 = vpop.f32.mrf.mxu0
    %v1456 = vpop.f32.mrf.mxu0
    %v1457 = vadd.f32 %v1152, %v1456
    %v1458 = vpop.f32.mrf.mxu0
    %1459 = vmatprep.mubr.bf16.mxu0 %v321
    %1460 = vmatmul.mubr.bf16.gmra.mxu0 %v504
    %v1461 = vpop.f32.mrf.mxu0
    %v1462 = vadd.f32 %v1157, %v1461
    %v1463 = vpop.f32.mrf.mxu0
    %v1464 = vpop.f32.mrf.mxu0
    %v1465 = vadd.f32 %v1160, %v1464
    %v1466 = vpop.f32.mrf.mxu0
    %1467 = vdwg.mxu0
    %1468 = vmatprep.subr.bf16.mxu0 0
    %1469 = vmatpush1.bf16.msra.mxu0 %v1282
    %1470 = vmatprep.subr.bf16.mxu0 0
    %1471 = vmatpush1.bf16.msra.mxu0 %v1281
    %1472 = vmatprep.subr.bf16.mxu0 0
    %1473 = vmatpush1.bf16.msra.mxu0 %v1280
    %1474 = vmatprep.subr.bf16.mxu0 0
    %1475 = vmatpush1.bf16.msra.mxu0 %v1279
    %1476 = vmatprep.subr.bf16.mxu0 0
    %1477 = vmatpush1.bf16.msra.mxu0 %v1278
    %1478 = vmatprep.subr.bf16.mxu0 0
    %1479 = vmatpush1.bf16.msra.mxu0 %v1277
    %1480 = vmatprep.subr.bf16.mxu0 0
    %1481 = vmatpush1.bf16.msra.mxu0 %v1276
    %1482 = vmatprep.subr.bf16.mxu0 0
    %1483 = vmatpush1.bf16.msra.mxu0 %v1275
    %1484 = vmatprep.subr.bf16.mxu0 0
    %1485 = vmatpush2.bf16.msra.mxu0 0
    %1486 = vmatprep.subr.bf16.mxu0 0
    %1487 = vmatpush2.bf16.msra.mxu0 0
    %1488 = vmatprep.subr.bf16.mxu0 0
    %1489 = vmatpush2.bf16.msra.mxu0 0
    %1490 = vmatprep.subr.bf16.mxu0 0
    %1491 = vmatpush2.bf16.msra.mxu0 0
    %1492 = vmatprep.subr.bf16.mxu0 0
    %1493 = vmatpush2.bf16.msra.mxu0 0
    %1494 = vmatprep.subr.bf16.mxu0 0
    %1495 = vmatpush2.bf16.msra.mxu0 0
    %1496 = vmatprep.subr.bf16.mxu0 0
    %1497 = vmatpush2.bf16.msra.mxu0 0
    %1498 = vmatprep.subr.bf16.mxu0 0
    %1499 = vmatpush2.bf16.msra.mxu0 0
    %1500 = vmatprep.mubr.bf16.mxu0 0
    %1501 = vmatmul.mubr.bf16.gmra.mxu0 %v582
    %v1502 = vpop.f32.mrf.mxu0
    %v1503 = vadd.f32 %v1342, %v1502
    %v1504 = vpop.f32.mrf.mxu0
    %v1505 = vpop.f32.mrf.mxu0
    %v1506 = vadd.f32 %v1345, %v1505
    %v1507 = vpop.f32.mrf.mxu0
    %1508 = vmatprep.mubr.bf16.mxu0 0
    %1509 = vmatmul.mubr.bf16.gmra.mxu0 %v583
    %v1510 = vpop.f32.mrf.mxu0
    %v1511 = vadd.f32 %v1350, %v1510
    %v1512 = vpop.f32.mrf.mxu0
    %v1513 = vpop.f32.mrf.mxu0
    %v1514 = vadd.f32 %v1353, %v1513
    %v1515 = vpop.f32.mrf.mxu0
    %1516 = vmatprep.mubr.bf16.mxu0 0
    %1517 = vmatmul.mubr.bf16.gmra.mxu0 %v584
    %v1518 = vpop.f32.mrf.mxu0
    %v1519 = vadd.f32 %v1358, %v1518
    %v1520 = vpop.f32.mrf.mxu0
    %v1521 = vpop.f32.mrf.mxu0
    %v1522 = vadd.f32 %v1361, %v1521
    %v1523 = vpop.f32.mrf.mxu0
    %1524 = vmatprep.mubr.bf16.mxu0 0
    %1525 = vmatmul.mubr.bf16.gmra.mxu0 %v585
    %v1526 = vpop.f32.mrf.mxu0
    %v1527 = vadd.f32 %v1366, %v1526
    %v1528 = vpop.f32.mrf.mxu0
    %v1529 = vpop.f32.mrf.mxu0
    %v1530 = vadd.f32 %v1369, %v1529
    %v1531 = vpop.f32.mrf.mxu0
    %1532 = vmatprep.mubr.bf16.mxu0 0
    %1533 = vmatmul.mubr.bf16.gmra.mxu0 %v586
    %v1534 = vpop.f32.mrf.mxu0
    %v1535 = vadd.f32 %v1374, %v1534
    %v1536 = vpop.f32.mrf.mxu0
    %v1537 = vpop.f32.mrf.mxu0
    %v1538 = vadd.f32 %v1377, %v1537
    %v1539 = vpop.f32.mrf.mxu0
    %1540 = vmatprep.mubr.bf16.mxu0 0
    %1541 = vmatmul.mubr.bf16.gmra.mxu0 %v587
    %v1542 = vpop.f32.mrf.mxu0
    %v1543 = vadd.f32 %v1382, %v1542
    %v1544 = vpop.f32.mrf.mxu0
    %v1545 = vpop.f32.mrf.mxu0
    %v1546 = vadd.f32 %v1385, %v1545
    %v1547 = vpop.f32.mrf.mxu0
    %1548 = vmatprep.mubr.bf16.mxu0 0
    %1549 = vmatmul.mubr.bf16.gmra.mxu0 %v588
    %v1550 = vpop.f32.mrf.mxu0
    %v1551 = vadd.f32 %v1390, %v1550
    %v1552 = vpop.f32.mrf.mxu0
    %v1553 = vpop.f32.mrf.mxu0
    %v1554 = vadd.f32 %v1393, %v1553
    %v1555 = vpop.f32.mrf.mxu0
    %1556 = vmatprep.mubr.bf16.mxu0 0
    %1557 = vmatmul.mubr.bf16.gmra.mxu0 %v589
    %v1558 = vpop.f32.mrf.mxu0
    %v1559 = vadd.f32 %v1398, %v1558
    %v1560 = vpop.f32.mrf.mxu0
    %v1561 = vpop.f32.mrf.mxu0
    %v1562 = vadd.f32 %v1401, %v1561
    %v1563 = vpop.f32.mrf.mxu0
    %1564 = vmatprep.mubr.bf16.mxu0 0
    %1565 = vmatmul.mubr.bf16.gmra.mxu0 %v590
    %v1566 = vpop.f32.mrf.mxu0
    %v1567 = vadd.f32 %v1406, %v1566
    %v1568 = vpop.f32.mrf.mxu0
    %v1569 = vpop.f32.mrf.mxu0
    %v1570 = vadd.f32 %v1409, %v1569
    %v1571 = vpop.f32.mrf.mxu0
    %1572 = vmatprep.mubr.bf16.mxu0 0
    %1573 = vmatmul.mubr.bf16.gmra.mxu0 %v591
    %v1574 = vpop.f32.mrf.mxu0
    %v1575 = vadd.f32 %v1414, %v1574
    %v1576 = vpop.f32.mrf.mxu0
    %v1577 = vpop.f32.mrf.mxu0
    %v1578 = vadd.f32 %v1417, %v1577
    %v1579 = vpop.f32.mrf.mxu0
    %1580 = vmatprep.mubr.bf16.mxu0 0
    %1581 = vmatmul.mubr.bf16.gmra.mxu0 %v592
    %v1582 = vpop.f32.mrf.mxu0
    %v1583 = vadd.f32 %v1422, %v1582
    %v1584 = vpop.f32.mrf.mxu0
    %v1585 = vpop.f32.mrf.mxu0
    %v1586 = vadd.f32 %v1425, %v1585
    %v1587 = vpop.f32.mrf.mxu0
    %1588 = vmatprep.mubr.bf16.mxu0 0
    %1589 = vmatmul.mubr.bf16.gmra.mxu0 %v593
    %v1590 = vpop.f32.mrf.mxu0
    %v1591 = vadd.f32 %v1430, %v1590
    %v1592 = vpop.f32.mrf.mxu0
    %v1593 = vpop.f32.mrf.mxu0
    %v1594 = vadd.f32 %v1433, %v1593
    %v1595 = vpop.f32.mrf.mxu0
    %1596 = vmatprep.mubr.bf16.mxu0 0
    %1597 = vmatmul.mubr.bf16.gmra.mxu0 %v594
    %v1598 = vpop.f32.mrf.mxu0
    %v1599 = vadd.f32 %v1438, %v1598
    %v1600 = vpop.f32.mrf.mxu0
    %v1601 = vpop.f32.mrf.mxu0
    %v1602 = vadd.f32 %v1441, %v1601
    %v1603 = vpop.f32.mrf.mxu0
    %1604 = vmatprep.mubr.bf16.mxu0 0
    %1605 = vmatmul.mubr.bf16.gmra.mxu0 %v595
    %v1606 = vpop.f32.mrf.mxu0
    %v1607 = vadd.f32 %v1446, %v1606
    %v1608 = vpop.f32.mrf.mxu0
    %v1609 = vpop.f32.mrf.mxu0
    %v1610 = vadd.f32 %v1449, %v1609
    %v1611 = vpop.f32.mrf.mxu0
    %1612 = vmatprep.mubr.bf16.mxu0 0
    %1613 = vmatmul.mubr.bf16.gmra.mxu0 %v596
    %v1614 = vpop.f32.mrf.mxu0
    %v1615 = vadd.f32 %v1454, %v1614
    %v1616 = vpop.f32.mrf.mxu0
    %v1617 = vpop.f32.mrf.mxu0
    %v1618 = vadd.f32 %v1457, %v1617
    %v1619 = vpop.f32.mrf.mxu0
    %1620 = vmatprep.mubr.bf16.mxu0 0
    %1621 = vmatmul.mubr.bf16.gmra.mxu0 %v597
    %v1622 = vpop.f32.mrf.mxu0
    %v1623 = vadd.f32 %v1462, %v1622
    %v1624 = vpop.f32.mrf.mxu0
    %v1625 = vpop.f32.mrf.mxu0
    %v1626 = vadd.f32 %v1465, %v1625
    %v1627 = vpop.f32.mrf.mxu0
    %1628 = vdwg.mxu0
    %s1629 = scalar_lea.vmem [#allocation4], 384
    %v1630 = vld [vmem:[%s1629] sm:$0xf]
    %v1631 = vld [vmem:[%s1629 + $0x4] sm:$0xf]
    %v1632 = vld [vmem:[%s1629 + $0x8] sm:$0xf]
    %v1633 = vld [vmem:[%s1629 + $0xc] sm:$0xf]
    %v1634 = vld [vmem:[%s1629 + $0x10] sm:$0xf]
    %v1635 = vld [vmem:[%s1629 + $0x14] sm:$0xf]
    %v1636 = vld [vmem:[%s1629 + $0x18] sm:$0xf]
    %v1637 = vld [vmem:[%s1629 + $0x1c] sm:$0xf]
    %v1638 = vld [vmem:[%s1629 + $0x20] sm:$0xf]
    %v1639 = vld [vmem:[%s1629 + $0x24] sm:$0xf]
    %v1640 = vld [vmem:[%s1629 + $0x28] sm:$0xf]
    %v1641 = vld [vmem:[%s1629 + $0x2c] sm:$0xf]
    %v1642 = vld [vmem:[%s1629 + $0x30] sm:$0xf]
    %v1643 = vld [vmem:[%s1629 + $0x34] sm:$0xf]
    %v1644 = vld [vmem:[%s1629 + $0x38] sm:$0xf]
    %v1645 = vld [vmem:[%s1629 + $0x3c] sm:$0xf]
    %v1646 = vld [vmem:[%s1629 + $0x40] sm:$0xf]
    %v1647 = vld [vmem:[%s1629 + $0x44] sm:$0xf]
    %v1648 = vld [vmem:[%s1629 + $0x48] sm:$0xf]
    %v1649 = vld [vmem:[%s1629 + $0x4c] sm:$0xf]
    %v1650 = vld [vmem:[%s1629 + $0x50] sm:$0xf]
    %v1651 = vld [vmem:[%s1629 + $0x54] sm:$0xf]
    %v1652 = vld [vmem:[%s1629 + $0x58] sm:$0xf]
    %v1653 = vld [vmem:[%s1629 + $0x5c] sm:$0xf]
    %v1654 = vld [vmem:[%s1629 + $0x60] sm:$0xf]
    %v1655 = vld [vmem:[%s1629 + $0x64] sm:$0xf]
    %v1656 = vld [vmem:[%s1629 + $0x68] sm:$0xf]
    %v1657 = vld [vmem:[%s1629 + $0x6c] sm:$0xf]
    %v1658 = vld [vmem:[%s1629 + $0x70] sm:$0xf]
    %v1659 = vld [vmem:[%s1629 + $0x74] sm:$0xf]
    %v1660 = vld [vmem:[%s1629 + $0x78] sm:$0xf]
    %v1661 = vld [vmem:[%s1629 + $0x7c] sm:$0xf]
    %v1662 = vld [vmem:[%s1629 + $0x80] sm:$0xf]
    %v1663 = vld [vmem:[%s1629 + $0x84] sm:$0xf]
    %v1664 = vld [vmem:[%s1629 + $0x88] sm:$0xf]
    %v1665 = vld [vmem:[%s1629 + $0x8c] sm:$0xf]
    %v1666 = vld [vmem:[%s1629 + $0x90] sm:$0xf]
    %v1667 = vld [vmem:[%s1629 + $0x94] sm:$0xf]
    %v1668 = vld [vmem:[%s1629 + $0x98] sm:$0xf]
    %v1669 = vld [vmem:[%s1629 + $0x9c] sm:$0xf]
    %v1670 = vld [vmem:[%s1629 + $0xa0] sm:$0xf]
    %v1671 = vld [vmem:[%s1629 + $0xa4] sm:$0xf]
    %v1672 = vld [vmem:[%s1629 + $0xa8] sm:$0xf]
    %v1673 = vld [vmem:[%s1629 + $0xac] sm:$0xf]
    %v1674 = vld [vmem:[%s1629 + $0xb0] sm:$0xf]
    %v1675 = vld [vmem:[%s1629 + $0xb4] sm:$0xf]
    %v1676 = vld [vmem:[%s1629 + $0xb8] sm:$0xf]
    %v1677 = vld [vmem:[%s1629 + $0xbc] sm:$0xf]
    %v1726 = vunpack.c.l.b16 %v1630
    %v1727 = vunpack.c.l.b16 %v1631
    %v1728 = vunpack.c.l.b16 %v1632
    %v1729 = vunpack.c.l.b16 %v1633
    %v1730 = vunpack.c.l.b16 %v1634
    %v1731 = vunpack.c.l.b16 %v1635
    %v1732 = vunpack.c.l.b16 %v1636
    %v1733 = vunpack.c.l.b16 %v1637
    %v1734 = vunpack.c.l.b16 %v1638
    %v1735 = vunpack.c.l.b16 %v1639
    %v1736 = vunpack.c.l.b16 %v1640
    %v1737 = vunpack.c.l.b16 %v1641
    %v1738 = vunpack.c.l.b16 %v1642
    %v1739 = vunpack.c.l.b16 %v1643
    %v1740 = vunpack.c.l.b16 %v1644
    %v1741 = vunpack.c.l.b16 %v1645
    %v1742 = vunpack.c.l.b16 %v1646
    %v1743 = vunpack.c.l.b16 %v1647
    %v1744 = vunpack.c.l.b16 %v1648
    %v1745 = vunpack.c.l.b16 %v1649
    %v1746 = vunpack.c.l.b16 %v1650
    %v1747 = vunpack.c.l.b16 %v1651
    %v1748 = vunpack.c.l.b16 %v1652
    %v1749 = vunpack.c.l.b16 %v1653
    %v1750 = vunpack.c.l.b16 %v1654
    %v1751 = vunpack.c.l.b16 %v1655
    %v1752 = vunpack.c.l.b16 %v1656
    %v1753 = vunpack.c.l.b16 %v1657
    %v1754 = vunpack.c.l.b16 %v1658
    %v1755 = vunpack.c.l.b16 %v1659
    %v1756 = vunpack.c.l.b16 %v1660
    %v1757 = vunpack.c.l.b16 %v1661
    %v1758 = vunpack.c.l.b16 %v1662
    %v1759 = vunpack.c.l.b16 %v1663
    %v1760 = vunpack.c.l.b16 %v1664
    %v1761 = vunpack.c.l.b16 %v1665
    %v1762 = vunpack.c.l.b16 %v1666
    %v1763 = vunpack.c.l.b16 %v1667
    %v1764 = vunpack.c.l.b16 %v1668
    %v1765 = vunpack.c.l.b16 %v1669
    %v1766 = vunpack.c.l.b16 %v1670
    %v1767 = vunpack.c.l.b16 %v1671
    %v1768 = vunpack.c.l.b16 %v1672
    %v1769 = vunpack.c.l.b16 %v1673
    %v1770 = vunpack.c.l.b16 %v1674
    %v1771 = vunpack.c.l.b16 %v1675
    %v1772 = vunpack.c.l.b16 %v1676
    %v1773 = vunpack.c.l.b16 %v1677
    %v1774 = vpack.c.b16 %v1727, %v1726
    %v1775 = vpack.c.b16 %v1729, %v1728
    %v1776 = vpack.c.b16 %v1731, %v1730
    %v1777 = vpack.c.b16 %v1733, %v1732
    %v1778 = vpack.c.b16 %v1735, %v1734
    %v1779 = vpack.c.b16 %v1737, %v1736
    %v1780 = vpack.c.b16 %v1739, %v1738
    %v1781 = vpack.c.b16 %v1741, %v1740
    %v1782 = vpack.c.b16 %v1743, %v1742
    %v1783 = vpack.c.b16 %v1745, %v1744
    %v1784 = vpack.c.b16 %v1747, %v1746
    %v1785 = vpack.c.b16 %v1749, %v1748
    %v1786 = vpack.c.b16 %v1751, %v1750
    %v1787 = vpack.c.b16 %v1753, %v1752
    %v1788 = vpack.c.b16 %v1755, %v1754
    %v1789 = vpack.c.b16 %v1757, %v1756
    %v1790 = vpack.c.b16 %v1759, %v1758
    %v1791 = vpack.c.b16 %v1761, %v1760
    %v1792 = vpack.c.b16 %v1763, %v1762
    %v1793 = vpack.c.b16 %v1765, %v1764
    %v1794 = vpack.c.b16 %v1767, %v1766
    %v1795 = vpack.c.b16 %v1769, %v1768
    %v1796 = vpack.c.b16 %v1771, %v1770
    %v1797 = vpack.c.b16 %v1773, %v1772
    %1822 = vmatprep.subr.bf16.mxu0 0
    %1823 = vmatpush1.bf16.msra.mxu0 %v1781
    %1824 = vmatprep.subr.bf16.mxu0 0
    %1825 = vmatpush1.bf16.msra.mxu0 %v1780
    %1826 = vmatprep.subr.bf16.mxu0 0
    %1827 = vmatpush1.bf16.msra.mxu0 %v1779
    %1828 = vmatprep.subr.bf16.mxu0 0
    %1829 = vmatpush1.bf16.msra.mxu0 %v1778
    %1830 = vmatprep.subr.bf16.mxu0 0
    %1831 = vmatpush1.bf16.msra.mxu0 %v1777
    %1832 = vmatprep.subr.bf16.mxu0 0
    %1833 = vmatpush1.bf16.msra.mxu0 %v1776
    %1834 = vmatprep.subr.bf16.mxu0 0
    %1835 = vmatpush1.bf16.msra.mxu0 %v1775
    %1836 = vmatprep.subr.bf16.mxu0 0
    %1837 = vmatpush1.bf16.msra.mxu0 %v1774
    %1838 = vmatprep.subr.bf16.mxu0 0
    %1839 = vmatpush2.bf16.msra.mxu0 %v1789
    %1840 = vmatprep.subr.bf16.mxu0 0
    %1841 = vmatpush2.bf16.msra.mxu0 %v1788
    %1842 = vmatprep.subr.bf16.mxu0 0
    %1843 = vmatpush2.bf16.msra.mxu0 %v1787
    %1844 = vmatprep.subr.bf16.mxu0 0
    %1845 = vmatpush2.bf16.msra.mxu0 %v1786
    %1846 = vmatprep.subr.bf16.mxu0 0
    %1847 = vmatpush2.bf16.msra.mxu0 %v1785
    %1848 = vmatprep.subr.bf16.mxu0 0
    %1849 = vmatpush2.bf16.msra.mxu0 %v1784
    %1850 = vmatprep.subr.bf16.mxu0 0
    %1851 = vmatpush2.bf16.msra.mxu0 %v1783
    %1852 = vmatprep.subr.bf16.mxu0 0
    %1853 = vmatpush2.bf16.msra.mxu0 %v1782
    %1854 = vmatprep.mubr.bf16.mxu0 %v308
    %1855 = vmatmul.mubr.bf16.gmra.mxu0 %v491
    %v1856 = vpop.f32.mrf.mxu0
    %v1857 = vadd.f32 0.0, %v1856
    %v1858 = vpop.f32.mrf.mxu0
    %v1859 = vpop.f32.mrf.mxu0
    %v1860 = vadd.f32 0.0, %v1859
    %v1861 = vpop.f32.mrf.mxu0
    %1862 = vmatprep.mubr.bf16.mxu0 %v309
    %1863 = vmatmul.mubr.bf16.gmra.mxu0 %v492
    %v1864 = vpop.f32.mrf.mxu0
    %v1865 = vadd.f32 0.0, %v1864
    %v1866 = vpop.f32.mrf.mxu0
    %v1867 = vpop.f32.mrf.mxu0
    %v1868 = vadd.f32 0.0, %v1867
    %v1869 = vpop.f32.mrf.mxu0
    %1870 = vmatprep.mubr.bf16.mxu0 %v310
    %1871 = vmatmul.mubr.bf16.gmra.mxu0 %v493
    %v1872 = vpop.f32.mrf.mxu0
    %v1873 = vadd.f32 0.0, %v1872
    %v1874 = vpop.f32.mrf.mxu0
    %v1875 = vpop.f32.mrf.mxu0
    %v1876 = vadd.f32 0.0, %v1875
    %v1877 = vpop.f32.mrf.mxu0
    %1878 = vmatprep.mubr.bf16.mxu0 %v311
    %1879 = vmatmul.mubr.bf16.gmra.mxu0 %v494
    %v1880 = vpop.f32.mrf.mxu0
    %v1881 = vadd.f32 0.0, %v1880
    %v1882 = vpop.f32.mrf.mxu0
    %v1883 = vpop.f32.mrf.mxu0
    %v1884 = vadd.f32 0.0, %v1883
    %v1885 = vpop.f32.mrf.mxu0
    %1886 = vmatprep.mubr.bf16.mxu0 %v312
    %1887 = vmatmul.mubr.bf16.gmra.mxu0 %v495
    %v1888 = vpop.f32.mrf.mxu0
    %v1889 = vadd.f32 0.0, %v1888
    %v1890 = vpop.f32.mrf.mxu0
    %v1891 = vpop.f32.mrf.mxu0
    %v1892 = vadd.f32 0.0, %v1891
    %v1893 = vpop.f32.mrf.mxu0
    %1894 = vmatprep.mubr.bf16.mxu0 %v313
    %1895 = vmatmul.mubr.bf16.gmra.mxu0 %v496
    %v1896 = vpop.f32.mrf.mxu0
    %v1897 = vadd.f32 0.0, %v1896
    %v1898 = vpop.f32.mrf.mxu0
    %v1899 = vpop.f32.mrf.mxu0
    %v1900 = vadd.f32 0.0, %v1899
    %v1901 = vpop.f32.mrf.mxu0
    %1902 = vmatprep.mubr.bf16.mxu0 %v314
    %1903 = vmatmul.mubr.bf16.gmra.mxu0 %v497
    %v1904 = vpop.f32.mrf.mxu0
    %v1905 = vadd.f32 0.0, %v1904
    %v1906 = vpop.f32.mrf.mxu0
    %v1907 = vpop.f32.mrf.mxu0
    %v1908 = vadd.f32 0.0, %v1907
    %v1909 = vpop.f32.mrf.mxu0
    %1910 = vmatprep.mubr.bf16.mxu0 %v315
    %1911 = vmatmul.mubr.bf16.gmra.mxu0 %v498
    %v1912 = vpop.f32.mrf.mxu0
    %v1913 = vadd.f32 0.0, %v1912
    %v1914 = vpop.f32.mrf.mxu0
    %v1915 = vpop.f32.mrf.mxu0
    %v1916 = vadd.f32 0.0, %v1915
    %v1917 = vpop.f32.mrf.mxu0
    %1918 = vmatprep.mubr.bf16.mxu0 %v316
    %1919 = vmatmul.mubr.bf16.gmra.mxu0 %v499
    %v1920 = vpop.f32.mrf.mxu0
    %v1921 = vadd.f32 0.0, %v1920
    %v1922 = vpop.f32.mrf.mxu0
    %v1923 = vpop.f32.mrf.mxu0
    %v1924 = vadd.f32 0.0, %v1923
    %v1925 = vpop.f32.mrf.mxu0
    %1926 = vmatprep.mubr.bf16.mxu0 %v317
    %1927 = vmatmul.mubr.bf16.gmra.mxu0 %v500
    %v1928 = vpop.f32.mrf.mxu0
    %v1929 = vadd.f32 0.0, %v1928
    %v1930 = vpop.f32.mrf.mxu0
    %v1931 = vpop.f32.mrf.mxu0
    %v1932 = vadd.f32 0.0, %v1931
    %v1933 = vpop.f32.mrf.mxu0
    %1934 = vmatprep.mubr.bf16.mxu0 %v318
    %1935 = vmatmul.mubr.bf16.gmra.mxu0 %v501
    %v1936 = vpop.f32.mrf.mxu0
    %v1937 = vadd.f32 0.0, %v1936
    %v1938 = vpop.f32.mrf.mxu0
    %v1939 = vpop.f32.mrf.mxu0
    %v1940 = vadd.f32 0.0, %v1939
    %v1941 = vpop.f32.mrf.mxu0
    %1942 = vmatprep.mubr.bf16.mxu0 %v319
    %1943 = vmatmul.mubr.bf16.gmra.mxu0 %v502
    %v1944 = vpop.f32.mrf.mxu0
    %v1945 = vadd.f32 0.0, %v1944
    %v1946 = vpop.f32.mrf.mxu0
    %v1947 = vpop.f32.mrf.mxu0
    %v1948 = vadd.f32 0.0, %v1947
    %v1949 = vpop.f32.mrf.mxu0
    %1950 = vmatprep.mubr.bf16.mxu0 %v320
    %1951 = vmatmul.mubr.bf16.gmra.mxu0 %v503
    %v1952 = vpop.f32.mrf.mxu0
    %v1953 = vadd.f32 0.0, %v1952
    %v1954 = vpop.f32.mrf.mxu0
    %v1955 = vpop.f32.mrf.mxu0
    %v1956 = vadd.f32 0.0, %v1955
    %v1957 = vpop.f32.mrf.mxu0
    %1958 = vmatprep.mubr.bf16.mxu0 %v321
    %1959 = vmatmul.mubr.bf16.gmra.mxu0 %v504
    %v1960 = vpop.f32.mrf.mxu0
    %v1961 = vadd.f32 0.0, %v1960
    %v1962 = vpop.f32.mrf.mxu0
    %v1963 = vpop.f32.mrf.mxu0
    %v1964 = vadd.f32 0.0, %v1963
    %v1965 = vpop.f32.mrf.mxu0
    %1966 = vmatprep.mubr.bf16.mxu0 %v322
    %1967 = vmatmul.mubr.bf16.gmra.mxu0 %v505
    %v1968 = vpop.f32.mrf.mxu0
    %v1969 = vadd.f32 0.0, %v1968
    %v1970 = vpop.f32.mrf.mxu0
    %v1971 = vpop.f32.mrf.mxu0
    %v1972 = vadd.f32 0.0, %v1971
    %v1973 = vpop.f32.mrf.mxu0
    %1974 = vmatprep.mubr.bf16.mxu0 %v323
    %1975 = vmatmul.mubr.bf16.gmra.mxu0 %v506
    %v1976 = vpop.f32.mrf.mxu0
    %v1977 = vadd.f32 0.0, %v1976
    %v1978 = vpop.f32.mrf.mxu0
    %v1979 = vpop.f32.mrf.mxu0
    %v1980 = vadd.f32 0.0, %v1979
    %v1981 = vpop.f32.mrf.mxu0
    %1982 = vdwg.mxu0
    %1983 = vmatprep.subr.bf16.mxu0 0
    %1984 = vmatpush1.bf16.msra.mxu0 %v1797
    %1985 = vmatprep.subr.bf16.mxu0 0
    %1986 = vmatpush1.bf16.msra.mxu0 %v1796
    %1987 = vmatprep.subr.bf16.mxu0 0
    %1988 = vmatpush1.bf16.msra.mxu0 %v1795
    %1989 = vmatprep.subr.bf16.mxu0 0
    %1990 = vmatpush1.bf16.msra.mxu0 %v1794
    %1991 = vmatprep.subr.bf16.mxu0 0
    %1992 = vmatpush1.bf16.msra.mxu0 %v1793
    %1993 = vmatprep.subr.bf16.mxu0 0
    %1994 = vmatpush1.bf16.msra.mxu0 %v1792
    %1995 = vmatprep.subr.bf16.mxu0 0
    %1996 = vmatpush1.bf16.msra.mxu0 %v1791
    %1997 = vmatprep.subr.bf16.mxu0 0
    %1998 = vmatpush1.bf16.msra.mxu0 %v1790
    %1999 = vmatprep.subr.bf16.mxu0 0
    %2000 = vmatpush2.bf16.msra.mxu0 0
    %2001 = vmatprep.subr.bf16.mxu0 0
    %2002 = vmatpush2.bf16.msra.mxu0 0
    %2003 = vmatprep.subr.bf16.mxu0 0
    %2004 = vmatpush2.bf16.msra.mxu0 0
    %2005 = vmatprep.subr.bf16.mxu0 0
    %2006 = vmatpush2.bf16.msra.mxu0 0
    %2007 = vmatprep.subr.bf16.mxu0 0
    %2008 = vmatpush2.bf16.msra.mxu0 0
    %2009 = vmatprep.subr.bf16.mxu0 0
    %2010 = vmatpush2.bf16.msra.mxu0 0
    %2011 = vmatprep.subr.bf16.mxu0 0
    %2012 = vmatpush2.bf16.msra.mxu0 0
    %2013 = vmatprep.subr.bf16.mxu0 0
    %2014 = vmatpush2.bf16.msra.mxu0 0
    %2015 = vmatprep.mubr.bf16.mxu0 0
    %2016 = vmatmul.mubr.bf16.gmra.mxu0 %v584
    %v2017 = vpop.f32.mrf.mxu0
    %v2018 = vadd.f32 %v1857, %v2017
    %v2019 = vpop.f32.mrf.mxu0
    %v2020 = vpop.f32.mrf.mxu0
    %v2021 = vadd.f32 %v1860, %v2020
    %v2022 = vpop.f32.mrf.mxu0
    %2023 = vmatprep.mubr.bf16.mxu0 0
    %2024 = vmatmul.mubr.bf16.gmra.mxu0 %v585
    %v2025 = vpop.f32.mrf.mxu0
    %v2026 = vadd.f32 %v1865, %v2025
    %v2027 = vpop.f32.mrf.mxu0
    %v2028 = vpop.f32.mrf.mxu0
    %v2029 = vadd.f32 %v1868, %v2028
    %v2030 = vpop.f32.mrf.mxu0
    %2031 = vmatprep.mubr.bf16.mxu0 0
    %2032 = vmatmul.mubr.bf16.gmra.mxu0 %v586
    %v2033 = vpop.f32.mrf.mxu0
    %v2034 = vadd.f32 %v1873, %v2033
    %v2035 = vpop.f32.mrf.mxu0
    %v2036 = vpop.f32.mrf.mxu0
    %v2037 = vadd.f32 %v1876, %v2036
    %v2038 = vpop.f32.mrf.mxu0
    %2039 = vmatprep.mubr.bf16.mxu0 0
    %2040 = vmatmul.mubr.bf16.gmra.mxu0 %v587
    %v2041 = vpop.f32.mrf.mxu0
    %v2042 = vadd.f32 %v1881, %v2041
    %v2043 = vpop.f32.mrf.mxu0
    %v2044 = vpop.f32.mrf.mxu0
    %v2045 = vadd.f32 %v1884, %v2044
    %v2046 = vpop.f32.mrf.mxu0
    %2047 = vmatprep.mubr.bf16.mxu0 0
    %2048 = vmatmul.mubr.bf16.gmra.mxu0 %v588
    %v2049 = vpop.f32.mrf.mxu0
    %v2050 = vadd.f32 %v1889, %v2049
    %v2051 = vpop.f32.mrf.mxu0
    %v2052 = vpop.f32.mrf.mxu0
    %v2053 = vadd.f32 %v1892, %v2052
    %v2054 = vpop.f32.mrf.mxu0
    %2055 = vmatprep.mubr.bf16.mxu0 0
    %2056 = vmatmul.mubr.bf16.gmra.mxu0 %v589
    %v2057 = vpop.f32.mrf.mxu0
    %v2058 = vadd.f32 %v1897, %v2057
    %v2059 = vpop.f32.mrf.mxu0
    %v2060 = vpop.f32.mrf.mxu0
    %v2061 = vadd.f32 %v1900, %v2060
    %v2062 = vpop.f32.mrf.mxu0
    %2063 = vmatprep.mubr.bf16.mxu0 0
    %2064 = vmatmul.mubr.bf16.gmra.mxu0 %v590
    %v2065 = vpop.f32.mrf.mxu0
    %v2066 = vadd.f32 %v1905, %v2065
    %v2067 = vpop.f32.mrf.mxu0
    %v2068 = vpop.f32.mrf.mxu0
    %v2069 = vadd.f32 %v1908, %v2068
    %v2070 = vpop.f32.mrf.mxu0
    %2071 = vmatprep.mubr.bf16.mxu0 0
    %2072 = vmatmul.mubr.bf16.gmra.mxu0 %v591
    %v2073 = vpop.f32.mrf.mxu0
    %v2074 = vadd.f32 %v1913, %v2073
    %v2075 = vpop.f32.mrf.mxu0
    %v2076 = vpop.f32.mrf.mxu0
    %v2077 = vadd.f32 %v1916, %v2076
    %v2078 = vpop.f32.mrf.mxu0
    %2079 = vmatprep.mubr.bf16.mxu0 0
    %2080 = vmatmul.mubr.bf16.gmra.mxu0 %v592
    %v2081 = vpop.f32.mrf.mxu0
    %v2082 = vadd.f32 %v1921, %v2081
    %v2083 = vpop.f32.mrf.mxu0
    %v2084 = vpop.f32.mrf.mxu0
    %v2085 = vadd.f32 %v1924, %v2084
    %v2086 = vpop.f32.mrf.mxu0
    %2087 = vmatprep.mubr.bf16.mxu0 0
    %2088 = vmatmul.mubr.bf16.gmra.mxu0 %v593
    %v2089 = vpop.f32.mrf.mxu0
    %v2090 = vadd.f32 %v1929, %v2089
    %v2091 = vpop.f32.mrf.mxu0
    %v2092 = vpop.f32.mrf.mxu0
    %v2093 = vadd.f32 %v1932, %v2092
    %v2094 = vpop.f32.mrf.mxu0
    %2095 = vmatprep.mubr.bf16.mxu0 0
    %2096 = vmatmul.mubr.bf16.gmra.mxu0 %v594
    %v2097 = vpop.f32.mrf.mxu0
    %v2098 = vadd.f32 %v1937, %v2097
    %v2099 = vpop.f32.mrf.mxu0
    %v2100 = vpop.f32.mrf.mxu0
    %v2101 = vadd.f32 %v1940, %v2100
    %v2102 = vpop.f32.mrf.mxu0
    %2103 = vmatprep.mubr.bf16.mxu0 0
    %2104 = vmatmul.mubr.bf16.gmra.mxu0 %v595
    %v2105 = vpop.f32.mrf.mxu0
    %v2106 = vadd.f32 %v1945, %v2105
    %v2107 = vpop.f32.mrf.mxu0
    %v2108 = vpop.f32.mrf.mxu0
    %v2109 = vadd.f32 %v1948, %v2108
    %v2110 = vpop.f32.mrf.mxu0
    %2111 = vmatprep.mubr.bf16.mxu0 0
    %2112 = vmatmul.mubr.bf16.gmra.mxu0 %v596
    %v2113 = vpop.f32.mrf.mxu0
    %v2114 = vadd.f32 %v1953, %v2113
    %v2115 = vpop.f32.mrf.mxu0
    %v2116 = vpop.f32.mrf.mxu0
    %v2117 = vadd.f32 %v1956, %v2116
    %v2118 = vpop.f32.mrf.mxu0
    %2119 = vmatprep.mubr.bf16.mxu0 0
    %2120 = vmatmul.mubr.bf16.gmra.mxu0 %v597
    %v2121 = vpop.f32.mrf.mxu0
    %v2122 = vadd.f32 %v1961, %v2121
    %v2123 = vpop.f32.mrf.mxu0
    %v2124 = vpop.f32.mrf.mxu0
    %v2125 = vadd.f32 %v1964, %v2124
    %v2126 = vpop.f32.mrf.mxu0
    %2127 = vmatprep.mubr.bf16.mxu0 0
    %2128 = vmatmul.mubr.bf16.gmra.mxu0 %v598
    %v2129 = vpop.f32.mrf.mxu0
    %v2130 = vadd.f32 %v1969, %v2129
    %v2131 = vpop.f32.mrf.mxu0
    %v2132 = vpop.f32.mrf.mxu0
    %v2133 = vadd.f32 %v1972, %v2132
    %v2134 = vpop.f32.mrf.mxu0
    %2135 = vmatprep.mubr.bf16.mxu0 0
    %2136 = vmatmul.mubr.bf16.gmra.mxu0 %v599
    %v2137 = vpop.f32.mrf.mxu0
    %v2138 = vadd.f32 %v1977, %v2137
    %v2139 = vpop.f32.mrf.mxu0
    %v2140 = vpop.f32.mrf.mxu0
    %v2141 = vadd.f32 %v1980, %v2140
    %v2142 = vpop.f32.mrf.mxu0
    %2143 = vdwg.mxu0
    %v2144 = vadd.f32 %v1503, %v2018
    %v2145 = vadd.f32 %v1506, %v2021
    %v2146 = vadd.f32 %v1511, %v2026
    %v2147 = vadd.f32 %v1514, %v2029
    %v2148 = vadd.f32 %v1519, %v2034
    %v2149 = vadd.f32 %v1522, %v2037
    %v2150 = vadd.f32 %v1527, %v2042
    %v2151 = vadd.f32 %v1530, %v2045
    %v2152 = vadd.f32 %v1535, %v2050
    %v2153 = vadd.f32 %v1538, %v2053
    %v2154 = vadd.f32 %v1543, %v2058
    %v2155 = vadd.f32 %v1546, %v2061
    %v2156 = vadd.f32 %v1551, %v2066
    %v2157 = vadd.f32 %v1554, %v2069
    %v2158 = vadd.f32 %v1559, %v2074
    %v2159 = vadd.f32 %v1562, %v2077
    %v2160 = vadd.f32 %v1567, %v2082
    %v2161 = vadd.f32 %v1570, %v2085
    %v2162 = vadd.f32 %v1575, %v2090
    %v2163 = vadd.f32 %v1578, %v2093
    %v2164 = vadd.f32 %v1583, %v2098
    %v2165 = vadd.f32 %v1586, %v2101
    %v2166 = vadd.f32 %v1591, %v2106
    %v2167 = vadd.f32 %v1594, %v2109
    %v2168 = vadd.f32 %v1599, %v2114
    %v2169 = vadd.f32 %v1602, %v2117
    %v2170 = vadd.f32 %v1607, %v2122
    %v2171 = vadd.f32 %v1610, %v2125
    %v2172 = vadd.f32 %v1615, %v2130
    %v2173 = vadd.f32 %v1618, %v2133
    %v2174 = vadd.f32 %v1623, %v2138
    %v2175 = vadd.f32 %v1626, %v2141
    %v2176 = vld [vmem:[%s2] sm:$0x1]
    %v2178 = vlaneseq
    %v2179 = vshrl.u32 %v2178, 7
    %v2180 = vsub.s32 0, %v2179
    %v2181 = vrot.slane %v2176, %v2180
    %v2183 = vadd.f32 %v2144, %v2181
    %v2184 = vadd.f32 %v2145, %v2181
    %v2185 = vadd.f32 %v2146, %v2181
    %v2186 = vadd.f32 %v2147, %v2181
    %v2187 = vadd.f32 %v2148, %v2181
    %v2188 = vadd.f32 %v2149, %v2181
    %v2189 = vadd.f32 %v2150, %v2181
    %v2190 = vadd.f32 %v2151, %v2181
    %v2191 = vadd.f32 %v2152, %v2181
    %v2192 = vadd.f32 %v2153, %v2181
    %v2193 = vadd.f32 %v2154, %v2181
    %v2194 = vadd.f32 %v2155, %v2181
    %v2195 = vadd.f32 %v2156, %v2181
    %v2196 = vadd.f32 %v2157, %v2181
    %v2197 = vadd.f32 %v2158, %v2181
    %v2198 = vadd.f32 %v2159, %v2181
    %v2199 = vadd.f32 %v2160, %v2181
    %v2200 = vadd.f32 %v2161, %v2181
    %v2201 = vadd.f32 %v2162, %v2181
    %v2202 = vadd.f32 %v2163, %v2181
    %v2203 = vadd.f32 %v2164, %v2181
    %v2204 = vadd.f32 %v2165, %v2181
    %v2205 = vadd.f32 %v2166, %v2181
    %v2206 = vadd.f32 %v2167, %v2181
    %v2207 = vadd.f32 %v2168, %v2181
    %v2208 = vadd.f32 %v2169, %v2181
    %v2209 = vadd.f32 %v2170, %v2181
    %v2210 = vadd.f32 %v2171, %v2181
    %v2211 = vadd.f32 %v2172, %v2181
    %v2212 = vadd.f32 %v2173, %v2181
    %v2213 = vadd.f32 %v2174, %v2181
    %v2214 = vadd.f32 %v2175, %v2181
    %v2215 = vpack.c.bf16 %v2184, %v2183
    %v2216 = vpack.c.bf16 %v2186, %v2185
    %v2217 = vpack.c.bf16 %v2188, %v2187
    %v2218 = vpack.c.bf16 %v2190, %v2189
    %v2219 = vpack.c.bf16 %v2192, %v2191
    %v2220 = vpack.c.bf16 %v2194, %v2193
    %v2221 = vpack.c.bf16 %v2196, %v2195
    %v2222 = vpack.c.bf16 %v2198, %v2197
    %v2223 = vpack.c.bf16 %v2200, %v2199
    %v2224 = vpack.c.bf16 %v2202, %v2201
    %v2225 = vpack.c.bf16 %v2204, %v2203
    %v2226 = vpack.c.bf16 %v2206, %v2205
    %v2227 = vpack.c.bf16 %v2208, %v2207
    %v2228 = vpack.c.bf16 %v2210, %v2209
    %v2229 = vpack.c.bf16 %v2212, %v2211
    %v2230 = vpack.c.bf16 %v2214, %v2213
    %v2247 = vunpack.c.l.b16 %v2215
    %v2248 = vunpack.c.h.b16 %v2215
    %v2249 = vunpack.c.l.b16 %v2216
    %v2250 = vunpack.c.h.b16 %v2216
    %v2251 = vunpack.c.l.b16 %v2217
    %v2252 = vunpack.c.h.b16 %v2217
    %v2253 = vunpack.c.l.b16 %v2218
    %v2254 = vunpack.c.h.b16 %v2218
    %v2255 = vunpack.c.l.b16 %v2219
    %v2256 = vunpack.c.h.b16 %v2219
    %v2257 = vunpack.c.l.b16 %v2220
    %v2258 = vunpack.c.h.b16 %v2220
    %v2259 = vunpack.c.l.b16 %v2221
    %v2260 = vunpack.c.h.b16 %v2221
    %v2261 = vunpack.c.l.b16 %v2222
    %v2262 = vunpack.c.h.b16 %v2222
    %v2263 = vunpack.c.l.b16 %v2223
    %v2264 = vunpack.c.h.b16 %v2223
    %v2265 = vunpack.c.l.b16 %v2224
    %v2266 = vunpack.c.h.b16 %v2224
    %v2267 = vunpack.c.l.b16 %v2225
    %v2268 = vunpack.c.h.b16 %v2225
    %v2269 = vunpack.c.l.b16 %v2226
    %v2270 = vunpack.c.h.b16 %v2226
    %v2271 = vunpack.c.l.b16 %v2227
    %v2272 = vunpack.c.h.b16 %v2227
    %v2273 = vunpack.c.l.b16 %v2228
    %v2274 = vunpack.c.h.b16 %v2228
    %v2275 = vunpack.c.l.b16 %v2229
    %v2276 = vunpack.c.h.b16 %v2229
    %v2277 = vunpack.c.l.b16 %v2230
    %v2278 = vunpack.c.h.b16 %v2230
    %v2279 = vpack.c.b16 %v2247, %v2247
    %v2280 = vpack.c.b16 %v2248, %v2248
    %v2281 = vpack.c.b16 %v2249, %v2249
    %v2282 = vpack.c.b16 %v2250, %v2250
    %v2283 = vpack.c.b16 %v2251, %v2251
    %v2284 = vpack.c.b16 %v2252, %v2252
    %v2285 = vpack.c.b16 %v2253, %v2253
    %v2286 = vpack.c.b16 %v2254, %v2254
    %v2287 = vpack.c.b16 %v2255, %v2255
    %v2288 = vpack.c.b16 %v2256, %v2256
    %v2289 = vpack.c.b16 %v2257, %v2257
    %v2290 = vpack.c.b16 %v2258, %v2258
    %v2291 = vpack.c.b16 %v2259, %v2259
    %v2292 = vpack.c.b16 %v2260, %v2260
    %v2293 = vpack.c.b16 %v2261, %v2261
    %v2294 = vpack.c.b16 %v2262, %v2262
    %v2295 = vpack.c.b16 %v2263, %v2263
    %v2296 = vpack.c.b16 %v2264, %v2264
    %v2297 = vpack.c.b16 %v2265, %v2265
    %v2298 = vpack.c.b16 %v2266, %v2266
    %v2299 = vpack.c.b16 %v2267, %v2267
    %v2300 = vpack.c.b16 %v2268, %v2268
    %v2301 = vpack.c.b16 %v2269, %v2269
    %v2302 = vpack.c.b16 %v2270, %v2270
    %v2303 = vpack.c.b16 %v2271, %v2271
    %v2304 = vpack.c.b16 %v2272, %v2272
    %v2305 = vpack.c.b16 %v2273, %v2273
    %v2306 = vpack.c.b16 %v2274, %v2274
    %v2307 = vpack.c.b16 %v2275, %v2275
    %v2308 = vpack.c.b16 %v2276, %v2276
    %v2309 = vpack.c.b16 %v2277, %v2277
    %v2310 = vpack.c.b16 %v2278, %v2278
    %2343 = vst [vmem:[%s6] sm:$0xf] %v2279
    %2344 = vst [vmem:[%s6 + $0x4] sm:$0xf] %v2280
    %2345 = vst [vmem:[%s6 + $0x8] sm:$0xf] %v2281
    %2346 = vst [vmem:[%s6 + $0xc] sm:$0xf] %v2282
    %2347 = vst [vmem:[%s6 + $0x10] sm:$0xf] %v2283
    %2348 = vst [vmem:[%s6 + $0x14] sm:$0xf] %v2284
    %2349 = vst [vmem:[%s6 + $0x18] sm:$0xf] %v2285
    %2350 = vst [vmem:[%s6 + $0x1c] sm:$0xf] %v2286
    %2351 = vst [vmem:[%s6 + $0x20] sm:$0xf] %v2287
    %2352 = vst [vmem:[%s6 + $0x24] sm:$0xf] %v2288
    %2353 = vst [vmem:[%s6 + $0x28] sm:$0xf] %v2289
    %2354 = vst [vmem:[%s6 + $0x2c] sm:$0xf] %v2290
    %2355 = vst [vmem:[%s6 + $0x30] sm:$0xf] %v2291
    %2356 = vst [vmem:[%s6 + $0x34] sm:$0xf] %v2292
    %2357 = vst [vmem:[%s6 + $0x38] sm:$0xf] %v2293
    %2358 = vst [vmem:[%s6 + $0x3c] sm:$0xf] %v2294
    %2359 = vst [vmem:[%s6 + $0x40] sm:$0xf] %v2295
    %2360 = vst [vmem:[%s6 + $0x44] sm:$0xf] %v2296
    %2361 = vst [vmem:[%s6 + $0x48] sm:$0xf] %v2297
    %2362 = vst [vmem:[%s6 + $0x4c] sm:$0xf] %v2298
    %2363 = vst [vmem:[%s6 + $0x50] sm:$0xf] %v2299
    %2364 = vst [vmem:[%s6 + $0x54] sm:$0xf] %v2300
    %2365 = vst [vmem:[%s6 + $0x58] sm:$0xf] %v2301
    %2366 = vst [vmem:[%s6 + $0x5c] sm:$0xf] %v2302
    %2367 = vst [vmem:[%s6 + $0x60] sm:$0xf] %v2303
    %2368 = vst [vmem:[%s6 + $0x64] sm:$0xf] %v2304
    %2369 = vst [vmem:[%s6 + $0x68] sm:$0xf] %v2305
    %2370 = vst [vmem:[%s6 + $0x6c] sm:$0xf] %v2306
    %2371 = vst [vmem:[%s6 + $0x70] sm:$0xf] %v2307
    %2372 = vst [vmem:[%s6 + $0x74] sm:$0xf] %v2308
    %2373 = vst [vmem:[%s6 + $0x78] sm:$0xf] %v2309
    %2374 = vst [vmem:[%s6 + $0x7c] sm:$0xf] %v2310
    %v2375 = vadd.f32 %v2183, %v2184
    %v2376 = vadd.f32 %v2375, %v2185
    %v2377 = vadd.f32 %v2376, %v2186
    %v2378 = vadd.f32 %v2377, %v2187
    %v2379 = vadd.f32 %v2378, %v2188
    %v2380 = vadd.f32 %v2379, %v2189
    %v2381 = vadd.f32 %v2380, %v2190
    %v2382 = vadd.f32 %v2381, %v2191
    %v2383 = vadd.f32 %v2382, %v2192
    %v2384 = vadd.f32 %v2383, %v2193
    %v2385 = vadd.f32 %v2384, %v2194
    %v2386 = vadd.f32 %v2385, %v2195
    %v2387 = vadd.f32 %v2386, %v2196
    %v2388 = vadd.f32 %v2387, %v2197
    %v2389 = vadd.f32 %v2388, %v2198
    %v2390 = vadd.f32 %v2389, %v2199
    %v2391 = vadd.f32 %v2390, %v2200
    %v2392 = vadd.f32 %v2391, %v2201
    %v2393 = vadd.f32 %v2392, %v2202
    %v2394 = vadd.f32 %v2393, %v2203
    %v2395 = vadd.f32 %v2394, %v2204
    %v2396 = vadd.f32 %v2395, %v2205
    %v2397 = vadd.f32 %v2396, %v2206
    %v2398 = vadd.f32 %v2397, %v2207
    %v2399 = vadd.f32 %v2398, %v2208
    %v2400 = vadd.f32 %v2399, %v2209
    %v2401 = vadd.f32 %v2400, %v2210
    %v2402 = vadd.f32 %v2401, %v2211
    %v2403 = vadd.f32 %v2402, %v2212
    %v2404 = vadd.f32 %v2403, %v2213
    %v2405 = vadd.f32 %v2404, %v2214
    %v2406 = vrot.slane %v2405, 4
    %v2407 = vadd.f32 %v2405, %v2406
    %v2408 = vrot.slane %v2407, 2
    %v2409 = vadd.f32 %v2407, %v2408
    %v2410 = vrot.slane %v2409, 1
    %v2411 = vadd.f32 %v2409, %v2410
    %v2412 = vmul.f32 %v2183, %v2183
    %v2413 = vmul.f32 %v2184, %v2184
    %v2414 = vmul.f32 %v2185, %v2185
    %v2415 = vmul.f32 %v2186, %v2186
    %v2416 = vmul.f32 %v2187, %v2187
    %v2417 = vmul.f32 %v2188, %v2188
    %v2418 = vmul.f32 %v2189, %v2189
    %v2419 = vmul.f32 %v2190, %v2190
    %v2420 = vmul.f32 %v2191, %v2191
    %v2421 = vmul.f32 %v2192, %v2192
    %v2422 = vmul.f32 %v2193, %v2193
    %v2423 = vmul.f32 %v2194, %v2194
    %v2424 = vmul.f32 %v2195, %v2195
    %v2425 = vmul.f32 %v2196, %v2196
    %v2426 = vmul.f32 %v2197, %v2197
    %v2427 = vmul.f32 %v2198, %v2198
    %v2428 = vmul.f32 %v2199, %v2199
    %v2429 = vmul.f32 %v2200, %v2200
    %v2430 = vmul.f32 %v2201, %v2201
    %v2431 = vmul.f32 %v2202, %v2202
    %v2432 = vmul.f32 %v2203, %v2203
    %v2433 = vmul.f32 %v2204, %v2204
    %v2434 = vmul.f32 %v2205, %v2205
    %v2435 = vmul.f32 %v2206, %v2206
    %v2436 = vmul.f32 %v2207, %v2207
    %v2437 = vmul.f32 %v2208, %v2208
    %v2438 = vmul.f32 %v2209, %v2209
    %v2439 = vmul.f32 %v2210, %v2210
    %v2440 = vmul.f32 %v2211, %v2211
    %v2441 = vmul.f32 %v2212, %v2212
    %v2442 = vmul.f32 %v2213, %v2213
    %v2443 = vmul.f32 %v2214, %v2214
    %v2444 = vadd.f32 %v2412, %v2413
    %v2445 = vadd.f32 %v2444, %v2414
    %v2446 = vadd.f32 %v2445, %v2415
    %v2447 = vadd.f32 %v2446, %v2416
    %v2448 = vadd.f32 %v2447, %v2417
    %v2449 = vadd.f32 %v2448, %v2418
    %v2450 = vadd.f32 %v2449, %v2419
    %v2451 = vadd.f32 %v2450, %v2420
    %v2452 = vadd.f32 %v2451, %v2421
    %v2453 = vadd.f32 %v2452, %v2422
    %v2454 = vadd.f32 %v2453, %v2423
    %v2455 = vadd.f32 %v2454, %v2424
    %v2456 = vadd.f32 %v2455, %v2425
    %v2457 = vadd.f32 %v2456, %v2426
    %v2458 = vadd.f32 %v2457, %v2427
    %v2459 = vadd.f32 %v2458, %v2428
    %v2460 = vadd.f32 %v2459, %v2429
    %v2461 = vadd.f32 %v2460, %v2430
    %v2462 = vadd.f32 %v2461, %v2431
    %v2463 = vadd.f32 %v2462, %v2432
    %v2464 = vadd.f32 %v2463, %v2433
    %v2465 = vadd.f32 %v2464, %v2434
    %v2466 = vadd.f32 %v2465, %v2435
    %v2467 = vadd.f32 %v2466, %v2436
    %v2468 = vadd.f32 %v2467, %v2437
    %v2469 = vadd.f32 %v2468, %v2438
    %v2470 = vadd.f32 %v2469, %v2439
    %v2471 = vadd.f32 %v2470, %v2440
    %v2472 = vadd.f32 %v2471, %v2441
    %v2473 = vadd.f32 %v2472, %v2442
    %v2474 = vadd.f32 %v2473, %v2443
    %v2475 = vrot.slane %v2474, 4
    %v2476 = vadd.f32 %v2474, %v2475
    %v2477 = vrot.slane %v2476, 2
    %v2478 = vadd.f32 %v2476, %v2477
    %v2479 = vrot.slane %v2478, 1
    %v2480 = vadd.f32 %v2478, %v2479
    %vm2481 = vcmask 1040384
    %v2482 = vsel %vm2481, %v2411, %v2480
    %2483 = vst [vmem:[%s7] sm:$0x3] %v2482
    // Predicated region
    $region34: #{resnet_gen_shared.6} parent=1 // pred_check
      _
    $region35: #{resnet_gen_shared.6} parent=1 // pred_check_branch
      %2485 = sbr.rel (0) target = $region37
    $region36: #{resnet_gen_shared.6} parent=1 // pred_region
      _
    $region37: #{resnet_gen_shared.6} parent=1 // pred_fallthru
      _
    // Predicated region
    $region38: #{resnet_gen_shared.6} parent=1 // pred_check
      _
    $region39: #{resnet_gen_shared.6} parent=1 // pred_check_branch
      %2487 = sbr.rel (0) target = $region41
    $region40: #{resnet_gen_shared.6} parent=1 // pred_region
      _
    $region41: #{resnet_gen_shared.6} parent=1 // pred_fallthru
      _
    // Predicated region
    $region42: #{resnet_gen_shared.6} parent=1 // pred_check
      _
    $region43: #{resnet_gen_shared.6} parent=1 // pred_check_branch
      %2489 = sbr.rel (0) target = $region45
    $region44: #{resnet_gen_shared.6} parent=1 // pred_region
      _
    $region45: #{resnet_gen_shared.6} parent=1 // pred_fallthru
      _
    // Predicated region
    $region46: #{resnet_gen_shared.6} parent=1 // pred_check
      _
    $region47: #{resnet_gen_shared.6} parent=1 // pred_check_branch
      %2491 = sbr.rel (0) target = $region49
    $region48: #{resnet_gen_shared.6} parent=1 // pred_region
      _
    $region49: #{resnet_gen_shared.6} parent=1 // pred_fallthru
      _
    %2492 = vsyncpa [#allocation3], 1
    %2493 = vsyncpa [#allocation5], 1

// kernel: resnet_gen_shared.7
$region0: #{resnet_gen_shared.7}
  #allocation0 [shape = 'u32[]', space=smem, size = 0x4, offset = 0x4, fixed_abs, tag = 'smem constant byte address 0x4 - core index']
  #allocation1 [shape = 'u32[144,128]{1,0:T(1,128)}', space=vmem, size = 0x12000, scoped, tag = 'internal scratch']
  %s0 = inlined_call_operand.vmem [shape: bf16[1,16,16,128], index: 0, kind: input, shape index: {}]
  %s1 = inlined_call_operand.vmem [shape: bf16[3,384,128], index: 1, kind: input, shape index: {}]
  %s2 = inlined_call_operand.vmem [shape: f32[1,1,128], index: 2, kind: input, shape index: {}]
  %s3 = inlined_call_operand.vmem [shape: f32[1,1,128], index: 3, kind: input, shape index: {}, may-alias: {3,5}]
  %s4 = inlined_call_operand.vmem [shape: f32[1,1,128], index: 4, kind: input, shape index: {}]
  %s5 = inlined_call_operand.vmem [shape: f32[1,1,128], index: 5, kind: input, shape index: {}, may-alias: {3,5}]
  %s6 = inlined_call_operand.vmem [shape: bf16[1,16,16,128], index: 6, kind: output, shape index: {0}]
  %s7 = inlined_call_operand.vmem [shape: f32[1,1,2,128], index: 7, kind: output, shape index: {1}]
  %8 = xla_tuple %s6, %s7
  %s9 = sld [smem:[#allocation0]]
  $region42: #{resnet_gen_shared.7} parent=0
    _
  %s11 = ssub.s32 1, %s9
  %s12 = scalar_select 0, %s11, %s9
  // Predicated region
  $region2: #{resnet_gen_shared.7} parent=0 // pred_check
    _
  $region3: #{resnet_gen_shared.7} parent=0 // pred_check_branch
    %14 = sbr.rel (0) target = $region5
  $region4: #{resnet_gen_shared.7} parent=0 // pred_region
    _
  $region5: #{resnet_gen_shared.7} parent=0 // pred_fallthru
    _
  // Predicated region
  $region6: #{resnet_gen_shared.7} parent=0 // pred_check
    _
  $region7: #{resnet_gen_shared.7} parent=0 // pred_check_branch
    %16 = sbr.rel (0) target = $region9
  $region8: #{resnet_gen_shared.7} parent=0 // pred_region
    _
  $region9: #{resnet_gen_shared.7} parent=0 // pred_fallthru
    _
  // Predicated region
  $region10: #{resnet_gen_shared.7} parent=0 // pred_check
    _
  $region11: #{resnet_gen_shared.7} parent=0 // pred_check_branch
    %18 = sbr.rel (0) target = $region13
  $region12: #{resnet_gen_shared.7} parent=0 // pred_region
    _
  $region13: #{resnet_gen_shared.7} parent=0 // pred_fallthru
    _
  // Predicated region
  $region14: #{resnet_gen_shared.7} parent=0 // pred_check
    _
  $region15: #{resnet_gen_shared.7} parent=0 // pred_check_branch
    %20 = sbr.rel (0) target = $region17
  $region16: #{resnet_gen_shared.7} parent=0 // pred_region
    _
  $region17: #{resnet_gen_shared.7} parent=0 // pred_fallthru
    _
  // Predicated region
  $region18: #{resnet_gen_shared.7} parent=0 // pred_check
    _
  $region19: #{resnet_gen_shared.7} parent=0 // pred_check_branch
    %22 = sbr.rel (0) target = $region21
  $region20: #{resnet_gen_shared.7} parent=0 // pred_region
    _
  $region21: #{resnet_gen_shared.7} parent=0 // pred_fallthru
    _
  // Predicated region
  $region22: #{resnet_gen_shared.7} parent=0 // pred_check
    _
  $region23: #{resnet_gen_shared.7} parent=0 // pred_check_branch
    %24 = sbr.rel (0) target = $region25
  $region24: #{resnet_gen_shared.7} parent=0 // pred_region
    _
  $region25: #{resnet_gen_shared.7} parent=0 // pred_fallthru
    _
  %s26 = smul.u32 0, 16
  %s27 = ssub.s32 %s26, 1
  %s28 = sshra.s32 %s27, 31
  %s29 = sadd.s32 %s27, %s28
  %s30 = sxor.u32 %s29, %s28
  %s31 = sadd.s32 %s26, 16
  %s32 = ssub.s32 14, %s26
  %p33 = scmp.lt.s32.totalorder %s31, %s32
  %s34 = scalar_select %p33, %s31, %s32
  %s35 = smul.u32 %s30, 2
  %s36 = smul.addr %s35, 4
  %s37 = scalar_lea.vmem %s0, %s36
  %v38 = vld [vmem:[%s37] sm:$0xf]
  %v39 = vld [vmem:[%s37 + $0x4] sm:$0xf]
  %s40 = smul.u32 %s26, 2
  %s41 = smul.addr %s40, 4
  %s42 = scalar_lea.vmem %s0, %s41
  %v43 = vld [vmem:[%s42] sm:$0xf]
  %v44 = vld [vmem:[%s42 + $0x4] sm:$0xf]
  %v45 = vld [vmem:[%s42 + $0x8] sm:$0xf]
  %v46 = vld [vmem:[%s42 + $0xc] sm:$0xf]
  %v47 = vld [vmem:[%s42 + $0x10] sm:$0xf]
  %v48 = vld [vmem:[%s42 + $0x14] sm:$0xf]
  %v49 = vld [vmem:[%s42 + $0x18] sm:$0xf]
  %v50 = vld [vmem:[%s42 + $0x1c] sm:$0xf]
  %v51 = vld [vmem:[%s42 + $0x20] sm:$0xf]
  %v52 = vld [vmem:[%s42 + $0x24] sm:$0xf]
  %v53 = vld [vmem:[%s42 + $0x28] sm:$0xf]
  %v54 = vld [vmem:[%s42 + $0x2c] sm:$0xf]
  %v55 = vld [vmem:[%s42 + $0x30] sm:$0xf]
  %v56 = vld [vmem:[%s42 + $0x34] sm:$0xf]
  %v57 = vld [vmem:[%s42 + $0x38] sm:$0xf]
  %v58 = vld [vmem:[%s42 + $0x3c] sm:$0xf]
  %v59 = vld [vmem:[%s42 + $0x40] sm:$0xf]
  %v60 = vld [vmem:[%s42 + $0x44] sm:$0xf]
  %v61 = vld [vmem:[%s42 + $0x48] sm:$0xf]
  %v62 = vld [vmem:[%s42 + $0x4c] sm:$0xf]
  %v63 = vld [vmem:[%s42 + $0x50] sm:$0xf]
  %v64 = vld [vmem:[%s42 + $0x54] sm:$0xf]
  %v65 = vld [vmem:[%s42 + $0x58] sm:$0xf]
  %v66 = vld [vmem:[%s42 + $0x5c] sm:$0xf]
  %v67 = vld [vmem:[%s42 + $0x60] sm:$0xf]
  %v68 = vld [vmem:[%s42 + $0x64] sm:$0xf]
  %v69 = vld [vmem:[%s42 + $0x68] sm:$0xf]
  %v70 = vld [vmem:[%s42 + $0x6c] sm:$0xf]
  %v71 = vld [vmem:[%s42 + $0x70] sm:$0xf]
  %v72 = vld [vmem:[%s42 + $0x74] sm:$0xf]
  %v73 = vld [vmem:[%s42 + $0x78] sm:$0xf]
  %v74 = vld [vmem:[%s42 + $0x7c] sm:$0xf]
  %s75 = smul.u32 %s34, 2
  %s76 = smul.addr %s75, 4
  %s77 = scalar_lea.vmem %s0, %s76
  %v78 = vld [vmem:[%s77] sm:$0xf]
  %v79 = vld [vmem:[%s77 + $0x4] sm:$0xf]
  %v80 = vunpack.c.l.bf16 %v38
  %v81 = vunpack.c.l.bf16 %v39
  %v82 = vunpack.c.l.bf16 %v43
  %v83 = vunpack.c.l.bf16 %v44
  %v84 = vunpack.c.l.bf16 %v45
  %v85 = vunpack.c.l.bf16 %v46
  %v86 = vunpack.c.l.bf16 %v47
  %v87 = vunpack.c.l.bf16 %v48
  %v88 = vunpack.c.l.bf16 %v49
  %v89 = vunpack.c.l.bf16 %v50
  %v90 = vunpack.c.l.bf16 %v51
  %v91 = vunpack.c.l.bf16 %v52
  %v92 = vunpack.c.l.bf16 %v53
  %v93 = vunpack.c.l.bf16 %v54
  %v94 = vunpack.c.l.bf16 %v55
  %v95 = vunpack.c.l.bf16 %v56
  %v96 = vunpack.c.l.bf16 %v57
  %v97 = vunpack.c.l.bf16 %v58
  %v98 = vunpack.c.l.bf16 %v59
  %v99 = vunpack.c.l.bf16 %v60
  %v100 = vunpack.c.l.bf16 %v61
  %v101 = vunpack.c.l.bf16 %v62
  %v102 = vunpack.c.l.bf16 %v63
  %v103 = vunpack.c.l.bf16 %v64
  %v104 = vunpack.c.l.bf16 %v65
  %v105 = vunpack.c.l.bf16 %v66
  %v106 = vunpack.c.l.bf16 %v67
  %v107 = vunpack.c.l.bf16 %v68
  %v108 = vunpack.c.l.bf16 %v69
  %v109 = vunpack.c.l.bf16 %v70
  %v110 = vunpack.c.l.bf16 %v71
  %v111 = vunpack.c.l.bf16 %v72
  %v112 = vunpack.c.l.bf16 %v73
  %v113 = vunpack.c.l.bf16 %v74
  %v114 = vunpack.c.l.bf16 %v78
  %v115 = vunpack.c.l.bf16 %v79
  %v116 = vld [vmem:[%s3] sm:$0x1]
  %v118 = vlaneseq
  %v119 = vshrl.u32 %v118, 7
  %v120 = vsub.s32 0, %v119
  %v121 = vrot.slane %v116, %v120
  %v123 = vmul.f32 %v80, %v121
  %v124 = vmul.f32 %v81, %v121
  %v125 = vmul.f32 %v82, %v121
  %v126 = vmul.f32 %v83, %v121
  %v127 = vmul.f32 %v84, %v121
  %v128 = vmul.f32 %v85, %v121
  %v129 = vmul.f32 %v86, %v121
  %v130 = vmul.f32 %v87, %v121
  %v131 = vmul.f32 %v88, %v121
  %v132 = vmul.f32 %v89, %v121
  %v133 = vmul.f32 %v90, %v121
  %v134 = vmul.f32 %v91, %v121
  %v135 = vmul.f32 %v92, %v121
  %v136 = vmul.f32 %v93, %v121
  %v137 = vmul.f32 %v94, %v121
  %v138 = vmul.f32 %v95, %v121
  %v139 = vmul.f32 %v96, %v121
  %v140 = vmul.f32 %v97, %v121
  %v141 = vmul.f32 %v98, %v121
  %v142 = vmul.f32 %v99, %v121
  %v143 = vmul.f32 %v100, %v121
  %v144 = vmul.f32 %v101, %v121
  %v145 = vmul.f32 %v102, %v121
  %v146 = vmul.f32 %v103, %v121
  %v147 = vmul.f32 %v104, %v121
  %v148 = vmul.f32 %v105, %v121
  %v149 = vmul.f32 %v106, %v121
  %v150 = vmul.f32 %v107, %v121
  %v151 = vmul.f32 %v108, %v121
  %v152 = vmul.f32 %v109, %v121
  %v153 = vmul.f32 %v110, %v121
  %v154 = vmul.f32 %v111, %v121
  %v155 = vmul.f32 %v112, %v121
  %v156 = vmul.f32 %v113, %v121
  %v157 = vmul.f32 %v114, %v121
  %v158 = vmul.f32 %v115, %v121
  %v159 = vld [vmem:[%s4] sm:$0x1]
  %v161 = vlaneseq
  %v162 = vshrl.u32 %v161, 7
  %v163 = vsub.s32 0, %v162
  %v164 = vrot.slane %v159, %v163
  %v166 = vadd.f32 %v123, %v164
  %v167 = vadd.f32 %v124, %v164
  %v168 = vadd.f32 %v125, %v164
  %v169 = vadd.f32 %v126, %v164
  %v170 = vadd.f32 %v127, %v164
  %v171 = vadd.f32 %v128, %v164
  %v172 = vadd.f32 %v129, %v164
  %v173 = vadd.f32 %v130, %v164
  %v174 = vadd.f32 %v131, %v164
  %v175 = vadd.f32 %v132, %v164
  %v176 = vadd.f32 %v133, %v164
  %v177 = vadd.f32 %v134, %v164
  %v178 = vadd.f32 %v135, %v164
  %v179 = vadd.f32 %v136, %v164
  %v180 = vadd.f32 %v137, %v164
  %v181 = vadd.f32 %v138, %v164
  %v182 = vadd.f32 %v139, %v164
  %v183 = vadd.f32 %v140, %v164
  %v184 = vadd.f32 %v141, %v164
  %v185 = vadd.f32 %v142, %v164
  %v186 = vadd.f32 %v143, %v164
  %v187 = vadd.f32 %v144, %v164
  %v188 = vadd.f32 %v145, %v164
  %v189 = vadd.f32 %v146, %v164
  %v190 = vadd.f32 %v147, %v164
  %v191 = vadd.f32 %v148, %v164
  %v192 = vadd.f32 %v149, %v164
  %v193 = vadd.f32 %v150, %v164
  %v194 = vadd.f32 %v151, %v164
  %v195 = vadd.f32 %v152, %v164
  %v196 = vadd.f32 %v153, %v164
  %v197 = vadd.f32 %v154, %v164
  %v198 = vadd.f32 %v155, %v164
  %v199 = vadd.f32 %v156, %v164
  %v200 = vadd.f32 %v157, %v164
  %v201 = vadd.f32 %v158, %v164
  %vm202 = vcmp.ge.f32.partialorder %v166, 0.0
  %vm203 = vcmp.ge.f32.partialorder %v167, 0.0
  %vm204 = vcmp.ge.f32.partialorder %v168, 0.0
  %vm205 = vcmp.ge.f32.partialorder %v169, 0.0
  %vm206 = vcmp.ge.f32.partialorder %v170, 0.0
  %vm207 = vcmp.ge.f32.partialorder %v171, 0.0
  %vm208 = vcmp.ge.f32.partialorder %v172, 0.0
  %vm209 = vcmp.ge.f32.partialorder %v173, 0.0
  %vm210 = vcmp.ge.f32.partialorder %v174, 0.0
  %vm211 = vcmp.ge.f32.partialorder %v175, 0.0
  %vm212 = vcmp.ge.f32.partialorder %v176, 0.0
  %vm213 = vcmp.ge.f32.partialorder %v177, 0.0
  %vm214 = vcmp.ge.f32.partialorder %v178, 0.0
  %vm215 = vcmp.ge.f32.partialorder %v179, 0.0
  %vm216 = vcmp.ge.f32.partialorder %v180, 0.0
  %vm217 = vcmp.ge.f32.partialorder %v181, 0.0
  %vm218 = vcmp.ge.f32.partialorder %v182, 0.0
  %vm219 = vcmp.ge.f32.partialorder %v183, 0.0
  %vm220 = vcmp.ge.f32.partialorder %v184, 0.0
  %vm221 = vcmp.ge.f32.partialorder %v185, 0.0
  %vm222 = vcmp.ge.f32.partialorder %v186, 0.0
  %vm223 = vcmp.ge.f32.partialorder %v187, 0.0
  %vm224 = vcmp.ge.f32.partialorder %v188, 0.0
  %vm225 = vcmp.ge.f32.partialorder %v189, 0.0
  %vm226 = vcmp.ge.f32.partialorder %v190, 0.0
  %vm227 = vcmp.ge.f32.partialorder %v191, 0.0
  %vm228 = vcmp.ge.f32.partialorder %v192, 0.0
  %vm229 = vcmp.ge.f32.partialorder %v193, 0.0
  %vm230 = vcmp.ge.f32.partialorder %v194, 0.0
  %vm231 = vcmp.ge.f32.partialorder %v195, 0.0
  %vm232 = vcmp.ge.f32.partialorder %v196, 0.0
  %vm233 = vcmp.ge.f32.partialorder %v197, 0.0
  %vm234 = vcmp.ge.f32.partialorder %v198, 0.0
  %vm235 = vcmp.ge.f32.partialorder %v199, 0.0
  %vm236 = vcmp.ge.f32.partialorder %v200, 0.0
  %vm237 = vcmp.ge.f32.partialorder %v201, 0.0
  %v238 = vld [vmem:[%s5] sm:$0x1]
  %v240 = vlaneseq
  %v241 = vshrl.u32 %v240, 7
  %v242 = vsub.s32 0, %v241
  %v243 = vrot.slane %v238, %v242
  %v245 = vmul.f32 %v243, %v166
  %v246 = vmul.f32 %v243, %v167
  %v247 = vmul.f32 %v243, %v168
  %v248 = vmul.f32 %v243, %v169
  %v249 = vmul.f32 %v243, %v170
  %v250 = vmul.f32 %v243, %v171
  %v251 = vmul.f32 %v243, %v172
  %v252 = vmul.f32 %v243, %v173
  %v253 = vmul.f32 %v243, %v174
  %v254 = vmul.f32 %v243, %v175
  %v255 = vmul.f32 %v243, %v176
  %v256 = vmul.f32 %v243, %v177
  %v257 = vmul.f32 %v243, %v178
  %v258 = vmul.f32 %v243, %v179
  %v259 = vmul.f32 %v243, %v180
  %v260 = vmul.f32 %v243, %v181
  %v261 = vmul.f32 %v243, %v182
  %v262 = vmul.f32 %v243, %v183
  %v263 = vmul.f32 %v243, %v184
  %v264 = vmul.f32 %v243, %v185
  %v265 = vmul.f32 %v243, %v186
  %v266 = vmul.f32 %v243, %v187
  %v267 = vmul.f32 %v243, %v188
  %v268 = vmul.f32 %v243, %v189
  %v269 = vmul.f32 %v243, %v190
  %v270 = vmul.f32 %v243, %v191
  %v271 = vmul.f32 %v243, %v192
  %v272 = vmul.f32 %v243, %v193
  %v273 = vmul.f32 %v243, %v194
  %v274 = vmul.f32 %v243, %v195
  %v275 = vmul.f32 %v243, %v196
  %v276 = vmul.f32 %v243, %v197
  %v277 = vmul.f32 %v243, %v198
  %v278 = vmul.f32 %v243, %v199
  %v279 = vmul.f32 %v243, %v200
  %v280 = vmul.f32 %v243, %v201
  %v281 = vsel %vm202, %v166, %v245
  %v282 = vsel %vm203, %v167, %v246
  %v283 = vsel %vm204, %v168, %v247
  %v284 = vsel %vm205, %v169, %v248
  %v285 = vsel %vm206, %v170, %v249
  %v286 = vsel %vm207, %v171, %v250
  %v287 = vsel %vm208, %v172, %v251
  %v288 = vsel %vm209, %v173, %v252
  %v289 = vsel %vm210, %v174, %v253
  %v290 = vsel %vm211, %v175, %v254
  %v291 = vsel %vm212, %v176, %v255
  %v292 = vsel %vm213, %v177, %v256
  %v293 = vsel %vm214, %v178, %v257
  %v294 = vsel %vm215, %v179, %v258
  %v295 = vsel %vm216, %v180, %v259
  %v296 = vsel %vm217, %v181, %v260
  %v297 = vsel %vm218, %v182, %v261
  %v298 = vsel %vm219, %v183, %v262
  %v299 = vsel %vm220, %v184, %v263
  %v300 = vsel %vm221, %v185, %v264
  %v301 = vsel %vm222, %v186, %v265
  %v302 = vsel %vm223, %v187, %v266
  %v303 = vsel %vm224, %v188, %v267
  %v304 = vsel %vm225, %v189, %v268
  %v305 = vsel %vm226, %v190, %v269
  %v306 = vsel %vm227, %v191, %v270
  %v307 = vsel %vm228, %v192, %v271
  %v308 = vsel %vm229, %v193, %v272
  %v309 = vsel %vm230, %v194, %v273
  %v310 = vsel %vm231, %v195, %v274
  %v311 = vsel %vm232, %v196, %v275
  %v312 = vsel %vm233, %v197, %v276
  %v313 = vsel %vm234, %v198, %v277
  %v314 = vsel %vm235, %v199, %v278
  %v315 = vsel %vm236, %v200, %v279
  %v316 = vsel %vm237, %v201, %v280
  %v317 = vpack.c.bf16 %v282, %v281
  %v318 = vpack.c.bf16 %v284, %v283
  %v319 = vpack.c.bf16 %v286, %v285
  %v320 = vpack.c.bf16 %v288, %v287
  %v321 = vpack.c.bf16 %v290, %v289
  %v322 = vpack.c.bf16 %v292, %v291
  %v323 = vpack.c.bf16 %v294, %v293
  %v324 = vpack.c.bf16 %v296, %v295
  %v325 = vpack.c.bf16 %v298, %v297
  %v326 = vpack.c.bf16 %v300, %v299
  %v327 = vpack.c.bf16 %v302, %v301
  %v328 = vpack.c.bf16 %v304, %v303
  %v329 = vpack.c.bf16 %v306, %v305
  %v330 = vpack.c.bf16 %v308, %v307
  %v331 = vpack.c.bf16 %v310, %v309
  %v332 = vpack.c.bf16 %v312, %v311
  %v333 = vpack.c.bf16 %v314, %v313
  %v334 = vpack.c.bf16 %v316, %v315
  %v336 = vshrl.u32 %v317, 16
  %v339 = vshrl.u32 %v318, 16
  %v342 = vshrl.u32 %v319, 16
  %v345 = vshrl.u32 %v320, 16
  %v348 = vshrl.u32 %v321, 16
  %v351 = vshrl.u32 %v322, 16
  %v354 = vshrl.u32 %v323, 16
  %v357 = vshrl.u32 %v324, 16
  %v360 = vshrl.u32 %v325, 16
  %v363 = vshrl.u32 %v326, 16
  %v366 = vshrl.u32 %v327, 16
  %v369 = vshrl.u32 %v328, 16
  %v372 = vshrl.u32 %v329, 16
  %v375 = vshrl.u32 %v330, 16
  %v378 = vshrl.u32 %v331, 16
  %v381 = vshrl.u32 %v332, 16
  %v384 = vshrl.u32 %v333, 16
  %v387 = vshrl.u32 %v334, 16
  %v407 = vrot.slane %v336, 7
  %v408 = vshll.u32 %v317, 16
  %v410 = vor.u32 %v407, %v408
  %v411 = vrot.slane %v339, 7
  %v412 = vshll.u32 %v318, 16
  %v414 = vor.u32 %v411, %v412
  %v415 = vrot.slane %v342, 7
  %v416 = vshll.u32 %v319, 16
  %v418 = vor.u32 %v415, %v416
  %v419 = vrot.slane %v345, 7
  %v420 = vshll.u32 %v320, 16
  %v422 = vor.u32 %v419, %v420
  %v423 = vrot.slane %v348, 7
  %v424 = vshll.u32 %v321, 16
  %v426 = vor.u32 %v423, %v424
  %v427 = vrot.slane %v351, 7
  %v428 = vshll.u32 %v322, 16
  %v430 = vor.u32 %v427, %v428
  %v431 = vrot.slane %v354, 7
  %v432 = vshll.u32 %v323, 16
  %v434 = vor.u32 %v431, %v432
  %v435 = vrot.slane %v357, 7
  %v436 = vshll.u32 %v324, 16
  %v438 = vor.u32 %v435, %v436
  %v439 = vrot.slane %v360, 7
  %v440 = vshll.u32 %v325, 16
  %v442 = vor.u32 %v439, %v440
  %v443 = vrot.slane %v363, 7
  %v444 = vshll.u32 %v326, 16
  %v446 = vor.u32 %v443, %v444
  %v447 = vrot.slane %v366, 7
  %v448 = vshll.u32 %v327, 16
  %v450 = vor.u32 %v447, %v448
  %v451 = vrot.slane %v369, 7
  %v452 = vshll.u32 %v328, 16
  %v454 = vor.u32 %v451, %v452
  %v455 = vrot.slane %v372, 7
  %v456 = vshll.u32 %v329, 16
  %v458 = vor.u32 %v455, %v456
  %v459 = vrot.slane %v375, 7
  %v460 = vshll.u32 %v330, 16
  %v462 = vor.u32 %v459, %v460
  %v463 = vrot.slane %v378, 7
  %v464 = vshll.u32 %v331, 16
  %v466 = vor.u32 %v463, %v464
  %v467 = vrot.slane %v381, 7
  %v468 = vshll.u32 %v332, 16
  %v470 = vor.u32 %v467, %v468
  %v471 = vrot.slane %v384, 7
  %v472 = vshll.u32 %v333, 16
  %v474 = vor.u32 %v471, %v472
  %v475 = vrot.slane %v387, 7
  %v476 = vshll.u32 %v334, 16
  %v478 = vor.u32 %v475, %v476
  %vm497 = vcmask 1040384
  %vm498 = vsmask.f32 256
  %vm499 = vmand %vm497, %vm498
  %v500 = vsel %vm499, %v336, %v410
  %v501 = vsel %vm499, %v339, %v414
  %v502 = vsel %vm499, %v342, %v418
  %v503 = vsel %vm499, %v345, %v422
  %v504 = vsel %vm499, %v348, %v426
  %v505 = vsel %vm499, %v351, %v430
  %v506 = vsel %vm499, %v354, %v434
  %v507 = vsel %vm499, %v357, %v438
  %v508 = vsel %vm499, %v360, %v442
  %v509 = vsel %vm499, %v363, %v446
  %v510 = vsel %vm499, %v366, %v450
  %v511 = vsel %vm499, %v369, %v454
  %v512 = vsel %vm499, %v372, %v458
  %v513 = vsel %vm499, %v375, %v462
  %v514 = vsel %vm499, %v378, %v466
  %v515 = vsel %vm499, %v381, %v470
  %v516 = vsel %vm499, %v384, %v474
  %v517 = vsel %vm499, %v387, %v478
  %v518 = vrot.slane %v408, 1
  %v519 = vor.u32 %v336, %v518
  %v520 = vrot.slane %v412, 1
  %v521 = vor.u32 %v339, %v520
  %v522 = vrot.slane %v416, 1
  %v523 = vor.u32 %v342, %v522
  %v524 = vrot.slane %v420, 1
  %v525 = vor.u32 %v345, %v524
  %v526 = vrot.slane %v424, 1
  %v527 = vor.u32 %v348, %v526
  %v528 = vrot.slane %v428, 1
  %v529 = vor.u32 %v351, %v528
  %v530 = vrot.slane %v432, 1
  %v531 = vor.u32 %v354, %v530
  %v532 = vrot.slane %v436, 1
  %v533 = vor.u32 %v357, %v532
  %v534 = vrot.slane %v440, 1
  %v535 = vor.u32 %v360, %v534
  %v536 = vrot.slane %v444, 1
  %v537 = vor.u32 %v363, %v536
  %v538 = vrot.slane %v448, 1
  %v539 = vor.u32 %v366, %v538
  %v540 = vrot.slane %v452, 1
  %v541 = vor.u32 %v369, %v540
  %v542 = vrot.slane %v456, 1
  %v543 = vor.u32 %v372, %v542
  %v544 = vrot.slane %v460, 1
  %v545 = vor.u32 %v375, %v544
  %v546 = vrot.slane %v464, 1
  %v547 = vor.u32 %v378, %v546
  %v548 = vrot.slane %v468, 1
  %v549 = vor.u32 %v381, %v548
  %v550 = vrot.slane %v472, 1
  %v551 = vor.u32 %v384, %v550
  %v552 = vrot.slane %v476, 1
  %v553 = vor.u32 %v387, %v552
  %vm590 = vcmask 1047552
  %vm591 = vsmask.f32 7424
  %vm592 = vmand %vm590, %vm591
  %v593 = vsel %vm592, %v519, %v408
  %v594 = vsel %vm592, %v521, %v412
  %v595 = vsel %vm592, %v523, %v416
  %v596 = vsel %vm592, %v525, %v420
  %v597 = vsel %vm592, %v527, %v424
  %v598 = vsel %vm592, %v529, %v428
  %v599 = vsel %vm592, %v531, %v432
  %v600 = vsel %vm592, %v533, %v436
  %v601 = vsel %vm592, %v535, %v440
  %v602 = vsel %vm592, %v537, %v444
  %v603 = vsel %vm592, %v539, %v448
  %v604 = vsel %vm592, %v541, %v452
  %v605 = vsel %vm592, %v543, %v456
  %v606 = vsel %vm592, %v545, %v460
  %v607 = vsel %vm592, %v547, %v464
  %v608 = vsel %vm592, %v549, %v468
  %v609 = vsel %vm592, %v551, %v472
  %v610 = vsel %vm592, %v553, %v476
  %v611 = vld [vmem:[%s1] sm:$0xf]
  %v612 = vld [vmem:[%s1 + $0x4] sm:$0xf]
  %v613 = vld [vmem:[%s1 + $0x8] sm:$0xf]
  %v614 = vld [vmem:[%s1 + $0xc] sm:$0xf]
  %v615 = vld [vmem:[%s1 + $0x10] sm:$0xf]
  %v616 = vld [vmem:[%s1 + $0x14] sm:$0xf]
  %v617 = vld [vmem:[%s1 + $0x18] sm:$0xf]
  %v618 = vld [vmem:[%s1 + $0x1c] sm:$0xf]
  %v619 = vld [vmem:[%s1 + $0x20] sm:$0xf]
  %v620 = vld [vmem:[%s1 + $0x24] sm:$0xf]
  %v621 = vld [vmem:[%s1 + $0x28] sm:$0xf]
  %v622 = vld [vmem:[%s1 + $0x2c] sm:$0xf]
  %v623 = vld [vmem:[%s1 + $0x30] sm:$0xf]
  %v624 = vld [vmem:[%s1 + $0x34] sm:$0xf]
  %v625 = vld [vmem:[%s1 + $0x38] sm:$0xf]
  %v626 = vld [vmem:[%s1 + $0x3c] sm:$0xf]
  %v627 = vld [vmem:[%s1 + $0x40] sm:$0xf]
  %v628 = vld [vmem:[%s1 + $0x44] sm:$0xf]
  %v629 = vld [vmem:[%s1 + $0x48] sm:$0xf]
  %v630 = vld [vmem:[%s1 + $0x4c] sm:$0xf]
  %v631 = vld [vmem:[%s1 + $0x50] sm:$0xf]
  %v632 = vld [vmem:[%s1 + $0x54] sm:$0xf]
  %v633 = vld [vmem:[%s1 + $0x58] sm:$0xf]
  %v634 = vld [vmem:[%s1 + $0x5c] sm:$0xf]
  %v635 = vld [vmem:[%s1 + $0x60] sm:$0xf]
  %v636 = vld [vmem:[%s1 + $0x64] sm:$0xf]
  %v637 = vld [vmem:[%s1 + $0x68] sm:$0xf]
  %v638 = vld [vmem:[%s1 + $0x6c] sm:$0xf]
  %v639 = vld [vmem:[%s1 + $0x70] sm:$0xf]
  %v640 = vld [vmem:[%s1 + $0x74] sm:$0xf]
  %v641 = vld [vmem:[%s1 + $0x78] sm:$0xf]
  %v642 = vld [vmem:[%s1 + $0x7c] sm:$0xf]
  %v643 = vld [vmem:[%s1 + $0x80] sm:$0xf]
  %v644 = vld [vmem:[%s1 + $0x84] sm:$0xf]
  %v645 = vld [vmem:[%s1 + $0x88] sm:$0xf]
  %v646 = vld [vmem:[%s1 + $0x8c] sm:$0xf]
  %v647 = vld [vmem:[%s1 + $0x90] sm:$0xf]
  %v648 = vld [vmem:[%s1 + $0x94] sm:$0xf]
  %v649 = vld [vmem:[%s1 + $0x98] sm:$0xf]
  %v650 = vld [vmem:[%s1 + $0x9c] sm:$0xf]
  %v651 = vld [vmem:[%s1 + $0xa0] sm:$0xf]
  %v652 = vld [vmem:[%s1 + $0xa4] sm:$0xf]
  %v653 = vld [vmem:[%s1 + $0xa8] sm:$0xf]
  %v654 = vld [vmem:[%s1 + $0xac] sm:$0xf]
  %v655 = vld [vmem:[%s1 + $0xb0] sm:$0xf]
  %v656 = vld [vmem:[%s1 + $0xb4] sm:$0xf]
  %v657 = vld [vmem:[%s1 + $0xb8] sm:$0xf]
  %v658 = vld [vmem:[%s1 + $0xbc] sm:$0xf]
  %s659 = scalar_lea.vmem %s1, 192
  %v660 = vld [vmem:[%s659] sm:$0xf]
  %v661 = vld [vmem:[%s659 + $0x4] sm:$0xf]
  %v662 = vld [vmem:[%s659 + $0x8] sm:$0xf]
  %v663 = vld [vmem:[%s659 + $0xc] sm:$0xf]
  %v664 = vld [vmem:[%s659 + $0x10] sm:$0xf]
  %v665 = vld [vmem:[%s659 + $0x14] sm:$0xf]
  %v666 = vld [vmem:[%s659 + $0x18] sm:$0xf]
  %v667 = vld [vmem:[%s659 + $0x1c] sm:$0xf]
  %v668 = vld [vmem:[%s659 + $0x20] sm:$0xf]
  %v669 = vld [vmem:[%s659 + $0x24] sm:$0xf]
  %v670 = vld [vmem:[%s659 + $0x28] sm:$0xf]
  %v671 = vld [vmem:[%s659 + $0x2c] sm:$0xf]
  %v672 = vld [vmem:[%s659 + $0x30] sm:$0xf]
  %v673 = vld [vmem:[%s659 + $0x34] sm:$0xf]
  %v674 = vld [vmem:[%s659 + $0x38] sm:$0xf]
  %v675 = vld [vmem:[%s659 + $0x3c] sm:$0xf]
  %v676 = vld [vmem:[%s659 + $0x40] sm:$0xf]
  %v677 = vld [vmem:[%s659 + $0x44] sm:$0xf]
  %v678 = vld [vmem:[%s659 + $0x48] sm:$0xf]
  %v679 = vld [vmem:[%s659 + $0x4c] sm:$0xf]
  %v680 = vld [vmem:[%s659 + $0x50] sm:$0xf]
  %v681 = vld [vmem:[%s659 + $0x54] sm:$0xf]
  %v682 = vld [vmem:[%s659 + $0x58] sm:$0xf]
  %v683 = vld [vmem:[%s659 + $0x5c] sm:$0xf]
  %v684 = vld [vmem:[%s659 + $0x60] sm:$0xf]
  %v685 = vld [vmem:[%s659 + $0x64] sm:$0xf]
  %v686 = vld [vmem:[%s659 + $0x68] sm:$0xf]
  %v687 = vld [vmem:[%s659 + $0x6c] sm:$0xf]
  %v688 = vld [vmem:[%s659 + $0x70] sm:$0xf]
  %v689 = vld [vmem:[%s659 + $0x74] sm:$0xf]
  %v690 = vld [vmem:[%s659 + $0x78] sm:$0xf]
  %v691 = vld [vmem:[%s659 + $0x7c] sm:$0xf]
  %v692 = vld [vmem:[%s659 + $0x80] sm:$0xf]
  %v693 = vld [vmem:[%s659 + $0x84] sm:$0xf]
  %v694 = vld [vmem:[%s659 + $0x88] sm:$0xf]
  %v695 = vld [vmem:[%s659 + $0x8c] sm:$0xf]
  %v696 = vld [vmem:[%s659 + $0x90] sm:$0xf]
  %v697 = vld [vmem:[%s659 + $0x94] sm:$0xf]
  %v698 = vld [vmem:[%s659 + $0x98] sm:$0xf]
  %v699 = vld [vmem:[%s659 + $0x9c] sm:$0xf]
  %v700 = vld [vmem:[%s659 + $0xa0] sm:$0xf]
  %v701 = vld [vmem:[%s659 + $0xa4] sm:$0xf]
  %v702 = vld [vmem:[%s659 + $0xa8] sm:$0xf]
  %v703 = vld [vmem:[%s659 + $0xac] sm:$0xf]
  %v704 = vld [vmem:[%s659 + $0xb0] sm:$0xf]
  %v705 = vld [vmem:[%s659 + $0xb4] sm:$0xf]
  %v706 = vld [vmem:[%s659 + $0xb8] sm:$0xf]
  %v707 = vld [vmem:[%s659 + $0xbc] sm:$0xf]
  %v756 = vunpack.c.l.b16 %v660
  %v757 = vunpack.c.l.b16 %v661
  %v758 = vunpack.c.l.b16 %v662
  %v759 = vunpack.c.l.b16 %v663
  %v760 = vunpack.c.l.b16 %v664
  %v761 = vunpack.c.l.b16 %v665
  %v762 = vunpack.c.l.b16 %v666
  %v763 = vunpack.c.l.b16 %v667
  %v764 = vunpack.c.l.b16 %v668
  %v765 = vunpack.c.l.b16 %v669
  %v766 = vunpack.c.l.b16 %v670
  %v767 = vunpack.c.l.b16 %v671
  %v768 = vunpack.c.l.b16 %v672
  %v769 = vunpack.c.l.b16 %v673
  %v770 = vunpack.c.l.b16 %v674
  %v771 = vunpack.c.l.b16 %v675
  %v772 = vunpack.c.l.b16 %v676
  %v773 = vunpack.c.l.b16 %v677
  %v774 = vunpack.c.l.b16 %v678
  %v775 = vunpack.c.l.b16 %v679
  %v776 = vunpack.c.l.b16 %v680
  %v777 = vunpack.c.l.b16 %v681
  %v778 = vunpack.c.l.b16 %v682
  %v779 = vunpack.c.l.b16 %v683
  %v780 = vunpack.c.l.b16 %v684
  %v781 = vunpack.c.l.b16 %v685
  %v782 = vunpack.c.l.b16 %v686
  %v783 = vunpack.c.l.b16 %v687
  %v784 = vunpack.c.l.b16 %v688
  %v785 = vunpack.c.l.b16 %v689
  %v786 = vunpack.c.l.b16 %v690
  %v787 = vunpack.c.l.b16 %v691
  %v788 = vunpack.c.l.b16 %v692
  %v789 = vunpack.c.l.b16 %v693
  %v790 = vunpack.c.l.b16 %v694
  %v791 = vunpack.c.l.b16 %v695
  %v792 = vunpack.c.l.b16 %v696
  %v793 = vunpack.c.l.b16 %v697
  %v794 = vunpack.c.l.b16 %v698
  %v795 = vunpack.c.l.b16 %v699
  %v796 = vunpack.c.l.b16 %v700
  %v797 = vunpack.c.l.b16 %v701
  %v798 = vunpack.c.l.b16 %v702
  %v799 = vunpack.c.l.b16 %v703
  %v800 = vunpack.c.l.b16 %v704
  %v801 = vunpack.c.l.b16 %v705
  %v802 = vunpack.c.l.b16 %v706
  %v803 = vunpack.c.l.b16 %v707
  %v804 = vpack.c.b16 %v757, %v756
  %v805 = vpack.c.b16 %v759, %v758
  %v806 = vpack.c.b16 %v761, %v760
  %v807 = vpack.c.b16 %v763, %v762
  %v808 = vpack.c.b16 %v765, %v764
  %v809 = vpack.c.b16 %v767, %v766
  %v810 = vpack.c.b16 %v769, %v768
  %v811 = vpack.c.b16 %v771, %v770
  %v812 = vpack.c.b16 %v773, %v772
  %v813 = vpack.c.b16 %v775, %v774
  %v814 = vpack.c.b16 %v777, %v776
  %v815 = vpack.c.b16 %v779, %v778
  %v816 = vpack.c.b16 %v781, %v780
  %v817 = vpack.c.b16 %v783, %v782
  %v818 = vpack.c.b16 %v785, %v784
  %v819 = vpack.c.b16 %v787, %v786
  %v820 = vpack.c.b16 %v789, %v788
  %v821 = vpack.c.b16 %v791, %v790
  %v822 = vpack.c.b16 %v793, %v792
  %v823 = vpack.c.b16 %v795, %v794
  %v824 = vpack.c.b16 %v797, %v796
  %v825 = vpack.c.b16 %v799, %v798
  %v826 = vpack.c.b16 %v801, %v800
  %v827 = vpack.c.b16 %v803, %v802
  %852 = vmatprep.subr.bf16.mxu0 0
  %853 = vmatpush1.bf16.msra.mxu0 %v811
  %854 = vmatprep.subr.bf16.mxu0 0
  %855 = vmatpush1.bf16.msra.mxu0 %v810
  %856 = vmatprep.subr.bf16.mxu0 0
  %857 = vmatpush1.bf16.msra.mxu0 %v809
  %858 = vmatprep.subr.bf16.mxu0 0
  %859 = vmatpush1.bf16.msra.mxu0 %v808
  %860 = vmatprep.subr.bf16.mxu0 0
  %861 = vmatpush1.bf16.msra.mxu0 %v807
  %862 = vmatprep.subr.bf16.mxu0 0
  %863 = vmatpush1.bf16.msra.mxu0 %v806
  %864 = vmatprep.subr.bf16.mxu0 0
  %865 = vmatpush1.bf16.msra.mxu0 %v805
  %866 = vmatprep.subr.bf16.mxu0 0
  %867 = vmatpush1.bf16.msra.mxu0 %v804
  %868 = vmatprep.subr.bf16.mxu0 0
  %869 = vmatpush2.bf16.msra.mxu0 %v819
  %870 = vmatprep.subr.bf16.mxu0 0
  %871 = vmatpush2.bf16.msra.mxu0 %v818
  %872 = vmatprep.subr.bf16.mxu0 0
  %873 = vmatpush2.bf16.msra.mxu0 %v817
  %874 = vmatprep.subr.bf16.mxu0 0
  %875 = vmatpush2.bf16.msra.mxu0 %v816
  %876 = vmatprep.subr.bf16.mxu0 0
  %877 = vmatpush2.bf16.msra.mxu0 %v815
  %878 = vmatprep.subr.bf16.mxu0 0
  %879 = vmatpush2.bf16.msra.mxu0 %v814
  %880 = vmatprep.subr.bf16.mxu0 0
  %881 = vmatpush2.bf16.msra.mxu0 %v813
  %882 = vmatprep.subr.bf16.mxu0 0
  %883 = vmatpush2.bf16.msra.mxu0 %v812
  %884 = vmatprep.mubr.bf16.mxu0 %v318
  %885 = vmatmul.mubr.bf16.gmra.mxu0 %v501
  %v886 = vpop.f32.mrf.mxu0
  %v887 = vadd.f32 0.0, %v886
  %v888 = vpop.f32.mrf.mxu0
  %v889 = vpop.f32.mrf.mxu0
  %v890 = vadd.f32 0.0, %v889
  %v891 = vpop.f32.mrf.mxu0
  %892 = vmatprep.mubr.bf16.mxu0 %v319
  %893 = vmatmul.mubr.bf16.gmra.mxu0 %v502
  %v894 = vpop.f32.mrf.mxu0
  %v895 = vadd.f32 0.0, %v894
  %v896 = vpop.f32.mrf.mxu0
  %v897 = vpop.f32.mrf.mxu0
  %v898 = vadd.f32 0.0, %v897
  %v899 = vpop.f32.mrf.mxu0
  %900 = vmatprep.mubr.bf16.mxu0 %v320
  %901 = vmatmul.mubr.bf16.gmra.mxu0 %v503
  %v902 = vpop.f32.mrf.mxu0
  %v903 = vadd.f32 0.0, %v902
  %v904 = vpop.f32.mrf.mxu0
  %v905 = vpop.f32.mrf.mxu0
  %v906 = vadd.f32 0.0, %v905
  %v907 = vpop.f32.mrf.mxu0
  %908 = vmatprep.mubr.bf16.mxu0 %v321
  %909 = vmatmul.mubr.bf16.gmra.mxu0 %v504
  %v910 = vpop.f32.mrf.mxu0
  %v911 = vadd.f32 0.0, %v910
  %v912 = vpop.f32.mrf.mxu0
  %v913 = vpop.f32.mrf.mxu0
  %v914 = vadd.f32 0.0, %v913
  %v915 = vpop.f32.mrf.mxu0
  %916 = vmatprep.mubr.bf16.mxu0 %v322
  %917 = vmatmul.mubr.bf16.gmra.mxu0 %v505
  %v918 = vpop.f32.mrf.mxu0
  %v919 = vadd.f32 0.0, %v918
  %v920 = vpop.f32.mrf.mxu0
  %v921 = vpop.f32.mrf.mxu0
  %v922 = vadd.f32 0.0, %v921
  %v923 = vpop.f32.mrf.mxu0
  %924 = vmatprep.mubr.bf16.mxu0 %v323
  %925 = vmatmul.mubr.bf16.gmra.mxu0 %v506
  %v926 = vpop.f32.mrf.mxu0
  %v927 = vadd.f32 0.0, %v926
  %v928 = vpop.f32.mrf.mxu0
  %v929 = vpop.f32.mrf.mxu0
  %v930 = vadd.f32 0.0, %v929
  %v931 = vpop.f32.mrf.mxu0
  %932 = vmatprep.mubr.bf16.mxu0 %v324
  %933 = vmatmul.mubr.bf16.gmra.mxu0 %v507
  %v934 = vpop.f32.mrf.mxu0
  %v935 = vadd.f32 0.0, %v934
  %v936 = vpop.f32.mrf.mxu0
  %v937 = vpop.f32.mrf.mxu0
  %v938 = vadd.f32 0.0, %v937
  %v939 = vpop.f32.mrf.mxu0
  %940 = vmatprep.mubr.bf16.mxu0 %v325
  %941 = vmatmul.mubr.bf16.gmra.mxu0 %v508
  %v942 = vpop.f32.mrf.mxu0
  %v943 = vadd.f32 0.0, %v942
  %v944 = vpop.f32.mrf.mxu0
  %v945 = vpop.f32.mrf.mxu0
  %v946 = vadd.f32 0.0, %v945
  %v947 = vpop.f32.mrf.mxu0
  %948 = vmatprep.mubr.bf16.mxu0 %v326
  %949 = vmatmul.mubr.bf16.gmra.mxu0 %v509
  %v950 = vpop.f32.mrf.mxu0
  %v951 = vadd.f32 0.0, %v950
  %v952 = vpop.f32.mrf.mxu0
  %v953 = vpop.f32.mrf.mxu0
  %v954 = vadd.f32 0.0, %v953
  %v955 = vpop.f32.mrf.mxu0
  %956 = vmatprep.mubr.bf16.mxu0 %v327
  %957 = vmatmul.mubr.bf16.gmra.mxu0 %v510
  %v958 = vpop.f32.mrf.mxu0
  %v959 = vadd.f32 0.0, %v958
  %v960 = vpop.f32.mrf.mxu0
  %v961 = vpop.f32.mrf.mxu0
  %v962 = vadd.f32 0.0, %v961
  %v963 = vpop.f32.mrf.mxu0
  %964 = vmatprep.mubr.bf16.mxu0 %v328
  %965 = vmatmul.mubr.bf16.gmra.mxu0 %v511
  %v966 = vpop.f32.mrf.mxu0
  %v967 = vadd.f32 0.0, %v966
  %v968 = vpop.f32.mrf.mxu0
  %v969 = vpop.f32.mrf.mxu0
  %v970 = vadd.f32 0.0, %v969
  %v971 = vpop.f32.mrf.mxu0
  %972 = vmatprep.mubr.bf16.mxu0 %v329
  %973 = vmatmul.mubr.bf16.gmra.mxu0 %v512
  %v974 = vpop.f32.mrf.mxu0
  %v975 = vadd.f32 0.0, %v974
  %v976 = vpop.f32.mrf.mxu0
  %v977 = vpop.f32.mrf.mxu0
  %v978 = vadd.f32 0.0, %v977
  %v979 = vpop.f32.mrf.mxu0
  %980 = vmatprep.mubr.bf16.mxu0 %v330
  %981 = vmatmul.mubr.bf16.gmra.mxu0 %v513
  %v982 = vpop.f32.mrf.mxu0
  %v983 = vadd.f32 0.0, %v982
  %v984 = vpop.f32.mrf.mxu0
  %v985 = vpop.f32.mrf.mxu0
  %v986 = vadd.f32 0.0, %v985
  %v987 = vpop.f32.mrf.mxu0
  %988 = vmatprep.mubr.bf16.mxu0 %v331
  %989 = vmatmul.mubr.bf16.gmra.mxu0 %v514
  %v990 = vpop.f32.mrf.mxu0
  %v991 = vadd.f32 0.0, %v990
  %v992 = vpop.f32.mrf.mxu0
  %v993 = vpop.f32.mrf.mxu0
  %v994 = vadd.f32 0.0, %v993
  %v995 = vpop.f32.mrf.mxu0
  %996 = vmatprep.mubr.bf16.mxu0 %v332
  %997 = vmatmul.mubr.bf16.gmra.mxu0 %v515
  %v998 = vpop.f32.mrf.mxu0
  %v999 = vadd.f32 0.0, %v998
  %v1000 = vpop.f32.mrf.mxu0
  %v1001 = vpop.f32.mrf.mxu0
  %v1002 = vadd.f32 0.0, %v1001
  %v1003 = vpop.f32.mrf.mxu0
  %1004 = vmatprep.mubr.bf16.mxu0 %v333
  %1005 = vmatmul.mubr.bf16.gmra.mxu0 %v516
  %v1006 = vpop.f32.mrf.mxu0
  %v1007 = vadd.f32 0.0, %v1006
  %v1008 = vpop.f32.mrf.mxu0
  %v1009 = vpop.f32.mrf.mxu0
  %v1010 = vadd.f32 0.0, %v1009
  %v1011 = vpop.f32.mrf.mxu0
  %1012 = vdwg.mxu0
  %1013 = vmatprep.subr.bf16.mxu0 0
  %1014 = vmatpush1.bf16.msra.mxu0 %v827
  %1015 = vmatprep.subr.bf16.mxu0 0
  %1016 = vmatpush1.bf16.msra.mxu0 %v826
  %1017 = vmatprep.subr.bf16.mxu0 0
  %1018 = vmatpush1.bf16.msra.mxu0 %v825
  %1019 = vmatprep.subr.bf16.mxu0 0
  %1020 = vmatpush1.bf16.msra.mxu0 %v824
  %1021 = vmatprep.subr.bf16.mxu0 0
  %1022 = vmatpush1.bf16.msra.mxu0 %v823
  %1023 = vmatprep.subr.bf16.mxu0 0
  %1024 = vmatpush1.bf16.msra.mxu0 %v822
  %1025 = vmatprep.subr.bf16.mxu0 0
  %1026 = vmatpush1.bf16.msra.mxu0 %v821
  %1027 = vmatprep.subr.bf16.mxu0 0
  %1028 = vmatpush1.bf16.msra.mxu0 %v820
  %1029 = vmatprep.subr.bf16.mxu0 0
  %1030 = vmatpush2.bf16.msra.mxu0 0
  %1031 = vmatprep.subr.bf16.mxu0 0
  %1032 = vmatpush2.bf16.msra.mxu0 0
  %1033 = vmatprep.subr.bf16.mxu0 0
  %1034 = vmatpush2.bf16.msra.mxu0 0
  %1035 = vmatprep.subr.bf16.mxu0 0
  %1036 = vmatpush2.bf16.msra.mxu0 0
  %1037 = vmatprep.subr.bf16.mxu0 0
  %1038 = vmatpush2.bf16.msra.mxu0 0
  %1039 = vmatprep.subr.bf16.mxu0 0
  %1040 = vmatpush2.bf16.msra.mxu0 0
  %1041 = vmatprep.subr.bf16.mxu0 0
  %1042 = vmatpush2.bf16.msra.mxu0 0
  %1043 = vmatprep.subr.bf16.mxu0 0
  %1044 = vmatpush2.bf16.msra.mxu0 0
  %1045 = vmatprep.mubr.bf16.mxu0 0
  %1046 = vmatmul.mubr.bf16.gmra.mxu0 %v594
  %v1047 = vpop.f32.mrf.mxu0
  %v1048 = vadd.f32 %v887, %v1047
  %v1049 = vpop.f32.mrf.mxu0
  %v1050 = vpop.f32.mrf.mxu0
  %v1051 = vadd.f32 %v890, %v1050
  %v1052 = vpop.f32.mrf.mxu0
  %1053 = vmatprep.mubr.bf16.mxu0 0
  %1054 = vmatmul.mubr.bf16.gmra.mxu0 %v595
  %v1055 = vpop.f32.mrf.mxu0
  %v1056 = vadd.f32 %v895, %v1055
  %v1057 = vpop.f32.mrf.mxu0
  %v1058 = vpop.f32.mrf.mxu0
  %v1059 = vadd.f32 %v898, %v1058
  %v1060 = vpop.f32.mrf.mxu0
  %1061 = vmatprep.mubr.bf16.mxu0 0
  %1062 = vmatmul.mubr.bf16.gmra.mxu0 %v596
  %v1063 = vpop.f32.mrf.mxu0
  %v1064 = vadd.f32 %v903, %v1063
  %v1065 = vpop.f32.mrf.mxu0
  %v1066 = vpop.f32.mrf.mxu0
  %v1067 = vadd.f32 %v906, %v1066
  %v1068 = vpop.f32.mrf.mxu0
  %1069 = vmatprep.mubr.bf16.mxu0 0
  %1070 = vmatmul.mubr.bf16.gmra.mxu0 %v597
  %v1071 = vpop.f32.mrf.mxu0
  %v1072 = vadd.f32 %v911, %v1071
  %v1073 = vpop.f32.mrf.mxu0
  %v1074 = vpop.f32.mrf.mxu0
  %v1075 = vadd.f32 %v914, %v1074
  %v1076 = vpop.f32.mrf.mxu0
  %1077 = vmatprep.mubr.bf16.mxu0 0
  %1078 = vmatmul.mubr.bf16.gmra.mxu0 %v598
  %v1079 = vpop.f32.mrf.mxu0
  %v1080 = vadd.f32 %v919, %v1079
  %v1081 = vpop.f32.mrf.mxu0
  %v1082 = vpop.f32.mrf.mxu0
  %v1083 = vadd.f32 %v922, %v1082
  %v1084 = vpop.f32.mrf.mxu0
  %1085 = vmatprep.mubr.bf16.mxu0 0
  %1086 = vmatmul.mubr.bf16.gmra.mxu0 %v599
  %v1087 = vpop.f32.mrf.mxu0
  %v1088 = vadd.f32 %v927, %v1087
  %v1089 = vpop.f32.mrf.mxu0
  %v1090 = vpop.f32.mrf.mxu0
  %v1091 = vadd.f32 %v930, %v1090
  %v1092 = vpop.f32.mrf.mxu0
  %1093 = vmatprep.mubr.bf16.mxu0 0
  %1094 = vmatmul.mubr.bf16.gmra.mxu0 %v600
  %v1095 = vpop.f32.mrf.mxu0
  %v1096 = vadd.f32 %v935, %v1095
  %v1097 = vpop.f32.mrf.mxu0
  %v1098 = vpop.f32.mrf.mxu0
  %v1099 = vadd.f32 %v938, %v1098
  %v1100 = vpop.f32.mrf.mxu0
  %1101 = vmatprep.mubr.bf16.mxu0 0
  %1102 = vmatmul.mubr.bf16.gmra.mxu0 %v601
  %v1103 = vpop.f32.mrf.mxu0
  %v1104 = vadd.f32 %v943, %v1103
  %v1105 = vpop.f32.mrf.mxu0
  %v1106 = vpop.f32.mrf.mxu0
  %v1107 = vadd.f32 %v946, %v1106
  %v1108 = vpop.f32.mrf.mxu0
  %1109 = vmatprep.mubr.bf16.mxu0 0
  %1110 = vmatmul.mubr.bf16.gmra.mxu0 %v602
  %v1111 = vpop.f32.mrf.mxu0
  %v1112 = vadd.f32 %v951, %v1111
  %v1113 = vpop.f32.mrf.mxu0
  %v1114 = vpop.f32.mrf.mxu0
  %v1115 = vadd.f32 %v954, %v1114
  %v1116 = vpop.f32.mrf.mxu0
  %1117 = vmatprep.mubr.bf16.mxu0 0
  %1118 = vmatmul.mubr.bf16.gmra.mxu0 %v603
  %v1119 = vpop.f32.mrf.mxu0
  %v1120 = vadd.f32 %v959, %v1119
  %v1121 = vpop.f32.mrf.mxu0
  %v1122 = vpop.f32.mrf.mxu0
  %v1123 = vadd.f32 %v962, %v1122
  %v1124 = vpop.f32.mrf.mxu0
  %1125 = vmatprep.mubr.bf16.mxu0 0
  %1126 = vmatmul.mubr.bf16.gmra.mxu0 %v604
  %v1127 = vpop.f32.mrf.mxu0
  %v1128 = vadd.f32 %v967, %v1127
  %v1129 = vpop.f32.mrf.mxu0
  %v1130 = vpop.f32.mrf.mxu0
  %v1131 = vadd.f32 %v970, %v1130
  %v1132 = vpop.f32.mrf.mxu0
  %1133 = vmatprep.mubr.bf16.mxu0 0
  %1134 = vmatmul.mubr.bf16.gmra.mxu0 %v605
  %v1135 = vpop.f32.mrf.mxu0
  %v1136 = vadd.f32 %v975, %v1135
  %v1137 = vpop.f32.mrf.mxu0
  %v1138 = vpop.f32.mrf.mxu0
  %v1139 = vadd.f32 %v978, %v1138
  %v1140 = vpop.f32.mrf.mxu0
  %1141 = vmatprep.mubr.bf16.mxu0 0
  %1142 = vmatmul.mubr.bf16.gmra.mxu0 %v606
  %v1143 = vpop.f32.mrf.mxu0
  %v1144 = vadd.f32 %v983, %v1143
  %v1145 = vpop.f32.mrf.mxu0
  %v1146 = vpop.f32.mrf.mxu0
  %v1147 = vadd.f32 %v986, %v1146
  %v1148 = vpop.f32.mrf.mxu0
  %1149 = vmatprep.mubr.bf16.mxu0 0
  %1150 = vmatmul.mubr.bf16.gmra.mxu0 %v607
  %v1151 = vpop.f32.mrf.mxu0
  %v1152 = vadd.f32 %v991, %v1151
  %v1153 = vpop.f32.mrf.mxu0
  %v1154 = vpop.f32.mrf.mxu0
  %v1155 = vadd.f32 %v994, %v1154
  %v1156 = vpop.f32.mrf.mxu0
  %1157 = vmatprep.mubr.bf16.mxu0 0
  %1158 = vmatmul.mubr.bf16.gmra.mxu0 %v608
  %v1159 = vpop.f32.mrf.mxu0
  %v1160 = vadd.f32 %v999, %v1159
  %v1161 = vpop.f32.mrf.mxu0
  %v1162 = vpop.f32.mrf.mxu0
  %v1163 = vadd.f32 %v1002, %v1162
  %v1164 = vpop.f32.mrf.mxu0
  %1165 = vmatprep.mubr.bf16.mxu0 0
  %1166 = vmatmul.mubr.bf16.gmra.mxu0 %v609
  %v1167 = vpop.f32.mrf.mxu0
  %v1168 = vadd.f32 %v1007, %v1167
  %v1169 = vpop.f32.mrf.mxu0
  %v1170 = vpop.f32.mrf.mxu0
  %v1171 = vadd.f32 %v1010, %v1170
  %v1172 = vpop.f32.mrf.mxu0
  %1173 = vdwg.mxu0
  %v1222 = vunpack.c.l.b16 %v611
  %v1223 = vunpack.c.l.b16 %v612
  %v1224 = vunpack.c.l.b16 %v613
  %v1225 = vunpack.c.l.b16 %v614
  %v1226 = vunpack.c.l.b16 %v615
  %v1227 = vunpack.c.l.b16 %v616
  %v1228 = vunpack.c.l.b16 %v617
  %v1229 = vunpack.c.l.b16 %v618
  %v1230 = vunpack.c.l.b16 %v619
  %v1231 = vunpack.c.l.b16 %v620
  %v1232 = vunpack.c.l.b16 %v621
  %v1233 = vunpack.c.l.b16 %v622
  %v1234 = vunpack.c.l.b16 %v623
  %v1235 = vunpack.c.l.b16 %v624
  %v1236 = vunpack.c.l.b16 %v625
  %v1237 = vunpack.c.l.b16 %v626
  %v1238 = vunpack.c.l.b16 %v627
  %v1239 = vunpack.c.l.b16 %v628
  %v1240 = vunpack.c.l.b16 %v629
  %v1241 = vunpack.c.l.b16 %v630
  %v1242 = vunpack.c.l.b16 %v631
  %v1243 = vunpack.c.l.b16 %v632
  %v1244 = vunpack.c.l.b16 %v633
  %v1245 = vunpack.c.l.b16 %v634
  %v1246 = vunpack.c.l.b16 %v635
  %v1247 = vunpack.c.l.b16 %v636
  %v1248 = vunpack.c.l.b16 %v637
  %v1249 = vunpack.c.l.b16 %v638
  %v1250 = vunpack.c.l.b16 %v639
  %v1251 = vunpack.c.l.b16 %v640
  %v1252 = vunpack.c.l.b16 %v641
  %v1253 = vunpack.c.l.b16 %v642
  %v1254 = vunpack.c.l.b16 %v643
  %v1255 = vunpack.c.l.b16 %v644
  %v1256 = vunpack.c.l.b16 %v645
  %v1257 = vunpack.c.l.b16 %v646
  %v1258 = vunpack.c.l.b16 %v647
  %v1259 = vunpack.c.l.b16 %v648
  %v1260 = vunpack.c.l.b16 %v649
  %v1261 = vunpack.c.l.b16 %v650
  %v1262 = vunpack.c.l.b16 %v651
  %v1263 = vunpack.c.l.b16 %v652
  %v1264 = vunpack.c.l.b16 %v653
  %v1265 = vunpack.c.l.b16 %v654
  %v1266 = vunpack.c.l.b16 %v655
  %v1267 = vunpack.c.l.b16 %v656
  %v1268 = vunpack.c.l.b16 %v657
  %v1269 = vunpack.c.l.b16 %v658
  %v1270 = vpack.c.b16 %v1223, %v1222
  %v1271 = vpack.c.b16 %v1225, %v1224
  %v1272 = vpack.c.b16 %v1227, %v1226
  %v1273 = vpack.c.b16 %v1229, %v1228
  %v1274 = vpack.c.b16 %v1231, %v1230
  %v1275 = vpack.c.b16 %v1233, %v1232
  %v1276 = vpack.c.b16 %v1235, %v1234
  %v1277 = vpack.c.b16 %v1237, %v1236
  %v1278 = vpack.c.b16 %v1239, %v1238
  %v1279 = vpack.c.b16 %v1241, %v1240
  %v1280 = vpack.c.b16 %v1243, %v1242
  %v1281 = vpack.c.b16 %v1245, %v1244
  %v1282 = vpack.c.b16 %v1247, %v1246
  %v1283 = vpack.c.b16 %v1249, %v1248
  %v1284 = vpack.c.b16 %v1251, %v1250
  %v1285 = vpack.c.b16 %v1253, %v1252
  %v1286 = vpack.c.b16 %v1255, %v1254
  %v1287 = vpack.c.b16 %v1257, %v1256
  %v1288 = vpack.c.b16 %v1259, %v1258
  %v1289 = vpack.c.b16 %v1261, %v1260
  %v1290 = vpack.c.b16 %v1263, %v1262
  %v1291 = vpack.c.b16 %v1265, %v1264
  %v1292 = vpack.c.b16 %v1267, %v1266
  %v1293 = vpack.c.b16 %v1269, %v1268
  %1318 = vmatprep.subr.bf16.mxu0 0
  %1319 = vmatpush1.bf16.msra.mxu0 %v1277
  %1320 = vmatprep.subr.bf16.mxu0 0
  %1321 = vmatpush1.bf16.msra.mxu0 %v1276
  %1322 = vmatprep.subr.bf16.mxu0 0
  %1323 = vmatpush1.bf16.msra.mxu0 %v1275
  %1324 = vmatprep.subr.bf16.mxu0 0
  %1325 = vmatpush1.bf16.msra.mxu0 %v1274
  %1326 = vmatprep.subr.bf16.mxu0 0
  %1327 = vmatpush1.bf16.msra.mxu0 %v1273
  %1328 = vmatprep.subr.bf16.mxu0 0
  %1329 = vmatpush1.bf16.msra.mxu0 %v1272
  %1330 = vmatprep.subr.bf16.mxu0 0
  %1331 = vmatpush1.bf16.msra.mxu0 %v1271
  %1332 = vmatprep.subr.bf16.mxu0 0
  %1333 = vmatpush1.bf16.msra.mxu0 %v1270
  %1334 = vmatprep.subr.bf16.mxu0 0
  %1335 = vmatpush2.bf16.msra.mxu0 %v1285
  %1336 = vmatprep.subr.bf16.mxu0 0
  %1337 = vmatpush2.bf16.msra.mxu0 %v1284
  %1338 = vmatprep.subr.bf16.mxu0 0
  %1339 = vmatpush2.bf16.msra.mxu0 %v1283
  %1340 = vmatprep.subr.bf16.mxu0 0
  %1341 = vmatpush2.bf16.msra.mxu0 %v1282
  %1342 = vmatprep.subr.bf16.mxu0 0
  %1343 = vmatpush2.bf16.msra.mxu0 %v1281
  %1344 = vmatprep.subr.bf16.mxu0 0
  %1345 = vmatpush2.bf16.msra.mxu0 %v1280
  %1346 = vmatprep.subr.bf16.mxu0 0
  %1347 = vmatpush2.bf16.msra.mxu0 %v1279
  %1348 = vmatprep.subr.bf16.mxu0 0
  %1349 = vmatpush2.bf16.msra.mxu0 %v1278
  %1350 = vmatprep.mubr.bf16.mxu0 %v317
  %1351 = vmatmul.mubr.bf16.gmra.mxu0 %v500
  %v1352 = vpop.f32.mrf.mxu0
  %v1353 = vadd.f32 %v1048, %v1352
  %v1354 = vpop.f32.mrf.mxu0
  %v1355 = vpop.f32.mrf.mxu0
  %v1356 = vadd.f32 %v1051, %v1355
  %v1357 = vpop.f32.mrf.mxu0
  %1358 = vmatprep.mubr.bf16.mxu0 %v318
  %1359 = vmatmul.mubr.bf16.gmra.mxu0 %v501
  %v1360 = vpop.f32.mrf.mxu0
  %v1361 = vadd.f32 %v1056, %v1360
  %v1362 = vpop.f32.mrf.mxu0
  %v1363 = vpop.f32.mrf.mxu0
  %v1364 = vadd.f32 %v1059, %v1363
  %v1365 = vpop.f32.mrf.mxu0
  %1366 = vmatprep.mubr.bf16.mxu0 %v319
  %1367 = vmatmul.mubr.bf16.gmra.mxu0 %v502
  %v1368 = vpop.f32.mrf.mxu0
  %v1369 = vadd.f32 %v1064, %v1368
  %v1370 = vpop.f32.mrf.mxu0
  %v1371 = vpop.f32.mrf.mxu0
  %v1372 = vadd.f32 %v1067, %v1371
  %v1373 = vpop.f32.mrf.mxu0
  %1374 = vmatprep.mubr.bf16.mxu0 %v320
  %1375 = vmatmul.mubr.bf16.gmra.mxu0 %v503
  %v1376 = vpop.f32.mrf.mxu0
  %v1377 = vadd.f32 %v1072, %v1376
  %v1378 = vpop.f32.mrf.mxu0
  %v1379 = vpop.f32.mrf.mxu0
  %v1380 = vadd.f32 %v1075, %v1379
  %v1381 = vpop.f32.mrf.mxu0
  %1382 = vmatprep.mubr.bf16.mxu0 %v321
  %1383 = vmatmul.mubr.bf16.gmra.mxu0 %v504
  %v1384 = vpop.f32.mrf.mxu0
  %v1385 = vadd.f32 %v1080, %v1384
  %v1386 = vpop.f32.mrf.mxu0
  %v1387 = vpop.f32.mrf.mxu0
  %v1388 = vadd.f32 %v1083, %v1387
  %v1389 = vpop.f32.mrf.mxu0
  %1390 = vmatprep.mubr.bf16.mxu0 %v322
  %1391 = vmatmul.mubr.bf16.gmra.mxu0 %v505
  %v1392 = vpop.f32.mrf.mxu0
  %v1393 = vadd.f32 %v1088, %v1392
  %v1394 = vpop.f32.mrf.mxu0
  %v1395 = vpop.f32.mrf.mxu0
  %v1396 = vadd.f32 %v1091, %v1395
  %v1397 = vpop.f32.mrf.mxu0
  %1398 = vmatprep.mubr.bf16.mxu0 %v323
  %1399 = vmatmul.mubr.bf16.gmra.mxu0 %v506
  %v1400 = vpop.f32.mrf.mxu0
  %v1401 = vadd.f32 %v1096, %v1400
  %v1402 = vpop.f32.mrf.mxu0
  %v1403 = vpop.f32.mrf.mxu0
  %v1404 = vadd.f32 %v1099, %v1403
  %v1405 = vpop.f32.mrf.mxu0
  %1406 = vmatprep.mubr.bf16.mxu0 %v324
  %1407 = vmatmul.mubr.bf16.gmra.mxu0 %v507
  %v1408 = vpop.f32.mrf.mxu0
  %v1409 = vadd.f32 %v1104, %v1408
  %v1410 = vpop.f32.mrf.mxu0
  %v1411 = vpop.f32.mrf.mxu0
  %v1412 = vadd.f32 %v1107, %v1411
  %v1413 = vpop.f32.mrf.mxu0
  %1414 = vmatprep.mubr.bf16.mxu0 %v325
  %1415 = vmatmul.mubr.bf16.gmra.mxu0 %v508
  %v1416 = vpop.f32.mrf.mxu0
  %v1417 = vadd.f32 %v1112, %v1416
  %v1418 = vpop.f32.mrf.mxu0
  %v1419 = vpop.f32.mrf.mxu0
  %v1420 = vadd.f32 %v1115, %v1419
  %v1421 = vpop.f32.mrf.mxu0
  %1422 = vmatprep.mubr.bf16.mxu0 %v326
  %1423 = vmatmul.mubr.bf16.gmra.mxu0 %v509
  %v1424 = vpop.f32.mrf.mxu0
  %v1425 = vadd.f32 %v1120, %v1424
  %v1426 = vpop.f32.mrf.mxu0
  %v1427 = vpop.f32.mrf.mxu0
  %v1428 = vadd.f32 %v1123, %v1427
  %v1429 = vpop.f32.mrf.mxu0
  %1430 = vmatprep.mubr.bf16.mxu0 %v327
  %1431 = vmatmul.mubr.bf16.gmra.mxu0 %v510
  %v1432 = vpop.f32.mrf.mxu0
  %v1433 = vadd.f32 %v1128, %v1432
  %v1434 = vpop.f32.mrf.mxu0
  %v1435 = vpop.f32.mrf.mxu0
  %v1436 = vadd.f32 %v1131, %v1435
  %v1437 = vpop.f32.mrf.mxu0
  %1438 = vmatprep.mubr.bf16.mxu0 %v328
  %1439 = vmatmul.mubr.bf16.gmra.mxu0 %v511
  %v1440 = vpop.f32.mrf.mxu0
  %v1441 = vadd.f32 %v1136, %v1440
  %v1442 = vpop.f32.mrf.mxu0
  %v1443 = vpop.f32.mrf.mxu0
  %v1444 = vadd.f32 %v1139, %v1443
  %v1445 = vpop.f32.mrf.mxu0
  %1446 = vmatprep.mubr.bf16.mxu0 %v329
  %1447 = vmatmul.mubr.bf16.gmra.mxu0 %v512
  %v1448 = vpop.f32.mrf.mxu0
  %v1449 = vadd.f32 %v1144, %v1448
  %v1450 = vpop.f32.mrf.mxu0
  %v1451 = vpop.f32.mrf.mxu0
  %v1452 = vadd.f32 %v1147, %v1451
  %v1453 = vpop.f32.mrf.mxu0
  %1454 = vmatprep.mubr.bf16.mxu0 %v330
  %1455 = vmatmul.mubr.bf16.gmra.mxu0 %v513
  %v1456 = vpop.f32.mrf.mxu0
  %v1457 = vadd.f32 %v1152, %v1456
  %v1458 = vpop.f32.mrf.mxu0
  %v1459 = vpop.f32.mrf.mxu0
  %v1460 = vadd.f32 %v1155, %v1459
  %v1461 = vpop.f32.mrf.mxu0
  %1462 = vmatprep.mubr.bf16.mxu0 %v331
  %1463 = vmatmul.mubr.bf16.gmra.mxu0 %v514
  %v1464 = vpop.f32.mrf.mxu0
  %v1465 = vadd.f32 %v1160, %v1464
  %v1466 = vpop.f32.mrf.mxu0
  %v1467 = vpop.f32.mrf.mxu0
  %v1468 = vadd.f32 %v1163, %v1467
  %v1469 = vpop.f32.mrf.mxu0
  %1470 = vmatprep.mubr.bf16.mxu0 %v332
  %1471 = vmatmul.mubr.bf16.gmra.mxu0 %v515
  %v1472 = vpop.f32.mrf.mxu0
  %v1473 = vadd.f32 %v1168, %v1472
  %v1474 = vpop.f32.mrf.mxu0
  %v1475 = vpop.f32.mrf.mxu0
  %v1476 = vadd.f32 %v1171, %v1475
  %v1477 = vpop.f32.mrf.mxu0
  %1478 = vdwg.mxu0
  %1479 = vmatprep.subr.bf16.mxu0 0
  %1480 = vmatpush1.bf16.msra.mxu0 %v1293
  %1481 = vmatprep.subr.bf16.mxu0 0
  %1482 = vmatpush1.bf16.msra.mxu0 %v1292
  %1483 = vmatprep.subr.bf16.mxu0 0
  %1484 = vmatpush1.bf16.msra.mxu0 %v1291
  %1485 = vmatprep.subr.bf16.mxu0 0
  %1486 = vmatpush1.bf16.msra.mxu0 %v1290
  %1487 = vmatprep.subr.bf16.mxu0 0
  %1488 = vmatpush1.bf16.msra.mxu0 %v1289
  %1489 = vmatprep.subr.bf16.mxu0 0
  %1490 = vmatpush1.bf16.msra.mxu0 %v1288
  %1491 = vmatprep.subr.bf16.mxu0 0
  %1492 = vmatpush1.bf16.msra.mxu0 %v1287
  %1493 = vmatprep.subr.bf16.mxu0 0
  %1494 = vmatpush1.bf16.msra.mxu0 %v1286
  %1495 = vmatprep.subr.bf16.mxu0 0
  %1496 = vmatpush2.bf16.msra.mxu0 0
  %1497 = vmatprep.subr.bf16.mxu0 0
  %1498 = vmatpush2.bf16.msra.mxu0 0
  %1499 = vmatprep.subr.bf16.mxu0 0
  %1500 = vmatpush2.bf16.msra.mxu0 0
  %1501 = vmatprep.subr.bf16.mxu0 0
  %1502 = vmatpush2.bf16.msra.mxu0 0
  %1503 = vmatprep.subr.bf16.mxu0 0
  %1504 = vmatpush2.bf16.msra.mxu0 0
  %1505 = vmatprep.subr.bf16.mxu0 0
  %1506 = vmatpush2.bf16.msra.mxu0 0
  %1507 = vmatprep.subr.bf16.mxu0 0
  %1508 = vmatpush2.bf16.msra.mxu0 0
  %1509 = vmatprep.subr.bf16.mxu0 0
  %1510 = vmatpush2.bf16.msra.mxu0 0
  %1511 = vmatprep.mubr.bf16.mxu0 0
  %1512 = vmatmul.mubr.bf16.gmra.mxu0 %v593
  %v1513 = vpop.f32.mrf.mxu0
  %v1514 = vadd.f32 %v1353, %v1513
  %v1515 = vpop.f32.mrf.mxu0
  %v1516 = vpop.f32.mrf.mxu0
  %v1517 = vadd.f32 %v1356, %v1516
  %v1518 = vpop.f32.mrf.mxu0
  %1519 = vmatprep.mubr.bf16.mxu0 0
  %1520 = vmatmul.mubr.bf16.gmra.mxu0 %v594
  %v1521 = vpop.f32.mrf.mxu0
  %v1522 = vadd.f32 %v1361, %v1521
  %v1523 = vpop.f32.mrf.mxu0
  %v1524 = vpop.f32.mrf.mxu0
  %v1525 = vadd.f32 %v1364, %v1524
  %v1526 = vpop.f32.mrf.mxu0
  %1527 = vmatprep.mubr.bf16.mxu0 0
  %1528 = vmatmul.mubr.bf16.gmra.mxu0 %v595
  %v1529 = vpop.f32.mrf.mxu0
  %v1530 = vadd.f32 %v1369, %v1529
  %v1531 = vpop.f32.mrf.mxu0
  %v1532 = vpop.f32.mrf.mxu0
  %v1533 = vadd.f32 %v1372, %v1532
  %v1534 = vpop.f32.mrf.mxu0
  %1535 = vmatprep.mubr.bf16.mxu0 0
  %1536 = vmatmul.mubr.bf16.gmra.mxu0 %v596
  %v1537 = vpop.f32.mrf.mxu0
  %v1538 = vadd.f32 %v1377, %v1537
  %v1539 = vpop.f32.mrf.mxu0
  %v1540 = vpop.f32.mrf.mxu0
  %v1541 = vadd.f32 %v1380, %v1540
  %v1542 = vpop.f32.mrf.mxu0
  %1543 = vmatprep.mubr.bf16.mxu0 0
  %1544 = vmatmul.mubr.bf16.gmra.mxu0 %v597
  %v1545 = vpop.f32.mrf.mxu0
  %v1546 = vadd.f32 %v1385, %v1545
  %v1547 = vpop.f32.mrf.mxu0
  %v1548 = vpop.f32.mrf.mxu0
  %v1549 = vadd.f32 %v1388, %v1548
  %v1550 = vpop.f32.mrf.mxu0
  %1551 = vmatprep.mubr.bf16.mxu0 0
  %1552 = vmatmul.mubr.bf16.gmra.mxu0 %v598
  %v1553 = vpop.f32.mrf.mxu0
  %v1554 = vadd.f32 %v1393, %v1553
  %v1555 = vpop.f32.mrf.mxu0
  %v1556 = vpop.f32.mrf.mxu0
  %v1557 = vadd.f32 %v1396, %v1556
  %v1558 = vpop.f32.mrf.mxu0
  %1559 = vmatprep.mubr.bf16.mxu0 0
  %1560 = vmatmul.mubr.bf16.gmra.mxu0 %v599
  %v1561 = vpop.f32.mrf.mxu0
  %v1562 = vadd.f32 %v1401, %v1561
  %v1563 = vpop.f32.mrf.mxu0
  %v1564 = vpop.f32.mrf.mxu0
  %v1565 = vadd.f32 %v1404, %v1564
  %v1566 = vpop.f32.mrf.mxu0
  %1567 = vmatprep.mubr.bf16.mxu0 0
  %1568 = vmatmul.mubr.bf16.gmra.mxu0 %v600
  %v1569 = vpop.f32.mrf.mxu0
  %v1570 = vadd.f32 %v1409, %v1569
  %v1571 = vpop.f32.mrf.mxu0
  %v1572 = vpop.f32.mrf.mxu0
  %v1573 = vadd.f32 %v1412, %v1572
  %v1574 = vpop.f32.mrf.mxu0
  %1575 = vmatprep.mubr.bf16.mxu0 0
  %1576 = vmatmul.mubr.bf16.gmra.mxu0 %v601
  %v1577 = vpop.f32.mrf.mxu0
  %v1578 = vadd.f32 %v1417, %v1577
  %v1579 = vpop.f32.mrf.mxu0
  %v1580 = vpop.f32.mrf.mxu0
  %v1581 = vadd.f32 %v1420, %v1580
  %v1582 = vpop.f32.mrf.mxu0
  %1583 = vmatprep.mubr.bf16.mxu0 0
  %1584 = vmatmul.mubr.bf16.gmra.mxu0 %v602
  %v1585 = vpop.f32.mrf.mxu0
  %v1586 = vadd.f32 %v1425, %v1585
  %v1587 = vpop.f32.mrf.mxu0
  %v1588 = vpop.f32.mrf.mxu0
  %v1589 = vadd.f32 %v1428, %v1588
  %v1590 = vpop.f32.mrf.mxu0
  %1591 = vmatprep.mubr.bf16.mxu0 0
  %1592 = vmatmul.mubr.bf16.gmra.mxu0 %v603
  %v1593 = vpop.f32.mrf.mxu0
  %v1594 = vadd.f32 %v1433, %v1593
  %v1595 = vpop.f32.mrf.mxu0
  %v1596 = vpop.f32.mrf.mxu0
  %v1597 = vadd.f32 %v1436, %v1596
  %v1598 = vpop.f32.mrf.mxu0
  %1599 = vmatprep.mubr.bf16.mxu0 0
  %1600 = vmatmul.mubr.bf16.gmra.mxu0 %v604
  %v1601 = vpop.f32.mrf.mxu0
  %v1602 = vadd.f32 %v1441, %v1601
  %v1603 = vpop.f32.mrf.mxu0
  %v1604 = vpop.f32.mrf.mxu0
  %v1605 = vadd.f32 %v1444, %v1604
  %v1606 = vpop.f32.mrf.mxu0
  %1607 = vmatprep.mubr.bf16.mxu0 0
  %1608 = vmatmul.mubr.bf16.gmra.mxu0 %v605
  %v1609 = vpop.f32.mrf.mxu0
  %v1610 = vadd.f32 %v1449, %v1609
  %v1611 = vpop.f32.mrf.mxu0
  %v1612 = vpop.f32.mrf.mxu0
  %v1613 = vadd.f32 %v1452, %v1612
  %v1614 = vpop.f32.mrf.mxu0
  %1615 = vmatprep.mubr.bf16.mxu0 0
  %1616 = vmatmul.mubr.bf16.gmra.mxu0 %v606
  %v1617 = vpop.f32.mrf.mxu0
  %v1618 = vadd.f32 %v1457, %v1617
  %v1619 = vpop.f32.mrf.mxu0
  %v1620 = vpop.f32.mrf.mxu0
  %v1621 = vadd.f32 %v1460, %v1620
  %v1622 = vpop.f32.mrf.mxu0
  %1623 = vmatprep.mubr.bf16.mxu0 0
  %1624 = vmatmul.mubr.bf16.gmra.mxu0 %v607
  %v1625 = vpop.f32.mrf.mxu0
  %v1626 = vadd.f32 %v1465, %v1625
  %v1627 = vpop.f32.mrf.mxu0
  %v1628 = vpop.f32.mrf.mxu0
  %v1629 = vadd.f32 %v1468, %v1628
  %v1630 = vpop.f32.mrf.mxu0
  %1631 = vmatprep.mubr.bf16.mxu0 0
  %1632 = vmatmul.mubr.bf16.gmra.mxu0 %v608
  %v1633 = vpop.f32.mrf.mxu0
  %v1634 = vadd.f32 %v1473, %v1633
  %v1635 = vpop.f32.mrf.mxu0
  %v1636 = vpop.f32.mrf.mxu0
  %v1637 = vadd.f32 %v1476, %v1636
  %v1638 = vpop.f32.mrf.mxu0
  %1639 = vdwg.mxu0
  %s1640 = scalar_lea.vmem %s1, 384
  %v1641 = vld [vmem:[%s1640] sm:$0xf]
  %v1642 = vld [vmem:[%s1640 + $0x4] sm:$0xf]
  %v1643 = vld [vmem:[%s1640 + $0x8] sm:$0xf]
  %v1644 = vld [vmem:[%s1640 + $0xc] sm:$0xf]
  %v1645 = vld [vmem:[%s1640 + $0x10] sm:$0xf]
  %v1646 = vld [vmem:[%s1640 + $0x14] sm:$0xf]
  %v1647 = vld [vmem:[%s1640 + $0x18] sm:$0xf]
  %v1648 = vld [vmem:[%s1640 + $0x1c] sm:$0xf]
  %v1649 = vld [vmem:[%s1640 + $0x20] sm:$0xf]
  %v1650 = vld [vmem:[%s1640 + $0x24] sm:$0xf]
  %v1651 = vld [vmem:[%s1640 + $0x28] sm:$0xf]
  %v1652 = vld [vmem:[%s1640 + $0x2c] sm:$0xf]
  %v1653 = vld [vmem:[%s1640 + $0x30] sm:$0xf]
  %v1654 = vld [vmem:[%s1640 + $0x34] sm:$0xf]
  %v1655 = vld [vmem:[%s1640 + $0x38] sm:$0xf]
  %v1656 = vld [vmem:[%s1640 + $0x3c] sm:$0xf]
  %v1657 = vld [vmem:[%s1640 + $0x40] sm:$0xf]
  %v1658 = vld [vmem:[%s1640 + $0x44] sm:$0xf]
  %v1659 = vld [vmem:[%s1640 + $0x48] sm:$0xf]
  %v1660 = vld [vmem:[%s1640 + $0x4c] sm:$0xf]
  %v1661 = vld [vmem:[%s1640 + $0x50] sm:$0xf]
  %v1662 = vld [vmem:[%s1640 + $0x54] sm:$0xf]
  %v1663 = vld [vmem:[%s1640 + $0x58] sm:$0xf]
  %v1664 = vld [vmem:[%s1640 + $0x5c] sm:$0xf]
  %v1665 = vld [vmem:[%s1640 + $0x60] sm:$0xf]
  %v1666 = vld [vmem:[%s1640 + $0x64] sm:$0xf]
  %v1667 = vld [vmem:[%s1640 + $0x68] sm:$0xf]
  %v1668 = vld [vmem:[%s1640 + $0x6c] sm:$0xf]
  %v1669 = vld [vmem:[%s1640 + $0x70] sm:$0xf]
  %v1670 = vld [vmem:[%s1640 + $0x74] sm:$0xf]
  %v1671 = vld [vmem:[%s1640 + $0x78] sm:$0xf]
  %v1672 = vld [vmem:[%s1640 + $0x7c] sm:$0xf]
  %v1673 = vld [vmem:[%s1640 + $0x80] sm:$0xf]
  %v1674 = vld [vmem:[%s1640 + $0x84] sm:$0xf]
  %v1675 = vld [vmem:[%s1640 + $0x88] sm:$0xf]
  %v1676 = vld [vmem:[%s1640 + $0x8c] sm:$0xf]
  %v1677 = vld [vmem:[%s1640 + $0x90] sm:$0xf]
  %v1678 = vld [vmem:[%s1640 + $0x94] sm:$0xf]
  %v1679 = vld [vmem:[%s1640 + $0x98] sm:$0xf]
  %v1680 = vld [vmem:[%s1640 + $0x9c] sm:$0xf]
  %v1681 = vld [vmem:[%s1640 + $0xa0] sm:$0xf]
  %v1682 = vld [vmem:[%s1640 + $0xa4] sm:$0xf]
  %v1683 = vld [vmem:[%s1640 + $0xa8] sm:$0xf]
  %v1684 = vld [vmem:[%s1640 + $0xac] sm:$0xf]
  %v1685 = vld [vmem:[%s1640 + $0xb0] sm:$0xf]
  %v1686 = vld [vmem:[%s1640 + $0xb4] sm:$0xf]
  %v1687 = vld [vmem:[%s1640 + $0xb8] sm:$0xf]
  %v1688 = vld [vmem:[%s1640 + $0xbc] sm:$0xf]
  %v1737 = vunpack.c.l.b16 %v1641
  %v1738 = vunpack.c.l.b16 %v1642
  %v1739 = vunpack.c.l.b16 %v1643
  %v1740 = vunpack.c.l.b16 %v1644
  %v1741 = vunpack.c.l.b16 %v1645
  %v1742 = vunpack.c.l.b16 %v1646
  %v1743 = vunpack.c.l.b16 %v1647
  %v1744 = vunpack.c.l.b16 %v1648
  %v1745 = vunpack.c.l.b16 %v1649
  %v1746 = vunpack.c.l.b16 %v1650
  %v1747 = vunpack.c.l.b16 %v1651
  %v1748 = vunpack.c.l.b16 %v1652
  %v1749 = vunpack.c.l.b16 %v1653
  %v1750 = vunpack.c.l.b16 %v1654
  %v1751 = vunpack.c.l.b16 %v1655
  %v1752 = vunpack.c.l.b16 %v1656
  %v1753 = vunpack.c.l.b16 %v1657
  %v1754 = vunpack.c.l.b16 %v1658
  %v1755 = vunpack.c.l.b16 %v1659
  %v1756 = vunpack.c.l.b16 %v1660
  %v1757 = vunpack.c.l.b16 %v1661
  %v1758 = vunpack.c.l.b16 %v1662
  %v1759 = vunpack.c.l.b16 %v1663
  %v1760 = vunpack.c.l.b16 %v1664
  %v1761 = vunpack.c.l.b16 %v1665
  %v1762 = vunpack.c.l.b16 %v1666
  %v1763 = vunpack.c.l.b16 %v1667
  %v1764 = vunpack.c.l.b16 %v1668
  %v1765 = vunpack.c.l.b16 %v1669
  %v1766 = vunpack.c.l.b16 %v1670
  %v1767 = vunpack.c.l.b16 %v1671
  %v1768 = vunpack.c.l.b16 %v1672
  %v1769 = vunpack.c.l.b16 %v1673
  %v1770 = vunpack.c.l.b16 %v1674
  %v1771 = vunpack.c.l.b16 %v1675
  %v1772 = vunpack.c.l.b16 %v1676
  %v1773 = vunpack.c.l.b16 %v1677
  %v1774 = vunpack.c.l.b16 %v1678
  %v1775 = vunpack.c.l.b16 %v1679
  %v1776 = vunpack.c.l.b16 %v1680
  %v1777 = vunpack.c.l.b16 %v1681
  %v1778 = vunpack.c.l.b16 %v1682
  %v1779 = vunpack.c.l.b16 %v1683
  %v1780 = vunpack.c.l.b16 %v1684
  %v1781 = vunpack.c.l.b16 %v1685
  %v1782 = vunpack.c.l.b16 %v1686
  %v1783 = vunpack.c.l.b16 %v1687
  %v1784 = vunpack.c.l.b16 %v1688
  %v1785 = vpack.c.b16 %v1738, %v1737
  %v1786 = vpack.c.b16 %v1740, %v1739
  %v1787 = vpack.c.b16 %v1742, %v1741
  %v1788 = vpack.c.b16 %v1744, %v1743
  %v1789 = vpack.c.b16 %v1746, %v1745
  %v1790 = vpack.c.b16 %v1748, %v1747
  %v1791 = vpack.c.b16 %v1750, %v1749
  %v1792 = vpack.c.b16 %v1752, %v1751
  %v1793 = vpack.c.b16 %v1754, %v1753
  %v1794 = vpack.c.b16 %v1756, %v1755
  %v1795 = vpack.c.b16 %v1758, %v1757
  %v1796 = vpack.c.b16 %v1760, %v1759
  %v1797 = vpack.c.b16 %v1762, %v1761
  %v1798 = vpack.c.b16 %v1764, %v1763
  %v1799 = vpack.c.b16 %v1766, %v1765
  %v1800 = vpack.c.b16 %v1768, %v1767
  %v1801 = vpack.c.b16 %v1770, %v1769
  %v1802 = vpack.c.b16 %v1772, %v1771
  %v1803 = vpack.c.b16 %v1774, %v1773
  %v1804 = vpack.c.b16 %v1776, %v1775
  %v1805 = vpack.c.b16 %v1778, %v1777
  %v1806 = vpack.c.b16 %v1780, %v1779
  %v1807 = vpack.c.b16 %v1782, %v1781
  %v1808 = vpack.c.b16 %v1784, %v1783
  %1833 = vmatprep.subr.bf16.mxu0 0
  %1834 = vmatpush1.bf16.msra.mxu0 %v1792
  %1835 = vmatprep.subr.bf16.mxu0 0
  %1836 = vmatpush1.bf16.msra.mxu0 %v1791
  %1837 = vmatprep.subr.bf16.mxu0 0
  %1838 = vmatpush1.bf16.msra.mxu0 %v1790
  %1839 = vmatprep.subr.bf16.mxu0 0
  %1840 = vmatpush1.bf16.msra.mxu0 %v1789
  %1841 = vmatprep.subr.bf16.mxu0 0
  %1842 = vmatpush1.bf16.msra.mxu0 %v1788
  %1843 = vmatprep.subr.bf16.mxu0 0
  %1844 = vmatpush1.bf16.msra.mxu0 %v1787
  %1845 = vmatprep.subr.bf16.mxu0 0
  %1846 = vmatpush1.bf16.msra.mxu0 %v1786
  %1847 = vmatprep.subr.bf16.mxu0 0
  %1848 = vmatpush1.bf16.msra.mxu0 %v1785
  %1849 = vmatprep.subr.bf16.mxu0 0
  %1850 = vmatpush2.bf16.msra.mxu0 %v1800
  %1851 = vmatprep.subr.bf16.mxu0 0
  %1852 = vmatpush2.bf16.msra.mxu0 %v1799
  %1853 = vmatprep.subr.bf16.mxu0 0
  %1854 = vmatpush2.bf16.msra.mxu0 %v1798
  %1855 = vmatprep.subr.bf16.mxu0 0
  %1856 = vmatpush2.bf16.msra.mxu0 %v1797
  %1857 = vmatprep.subr.bf16.mxu0 0
  %1858 = vmatpush2.bf16.msra.mxu0 %v1796
  %1859 = vmatprep.subr.bf16.mxu0 0
  %1860 = vmatpush2.bf16.msra.mxu0 %v1795
  %1861 = vmatprep.subr.bf16.mxu0 0
  %1862 = vmatpush2.bf16.msra.mxu0 %v1794
  %1863 = vmatprep.subr.bf16.mxu0 0
  %1864 = vmatpush2.bf16.msra.mxu0 %v1793
  %1865 = vmatprep.mubr.bf16.mxu0 %v319
  %1866 = vmatmul.mubr.bf16.gmra.mxu0 %v502
  %v1867 = vpop.f32.mrf.mxu0
  %v1868 = vadd.f32 0.0, %v1867
  %v1869 = vpop.f32.mrf.mxu0
  %v1870 = vpop.f32.mrf.mxu0
  %v1871 = vadd.f32 0.0, %v1870
  %v1872 = vpop.f32.mrf.mxu0
  %1873 = vmatprep.mubr.bf16.mxu0 %v320
  %1874 = vmatmul.mubr.bf16.gmra.mxu0 %v503
  %v1875 = vpop.f32.mrf.mxu0
  %v1876 = vadd.f32 0.0, %v1875
  %v1877 = vpop.f32.mrf.mxu0
  %v1878 = vpop.f32.mrf.mxu0
  %v1879 = vadd.f32 0.0, %v1878
  %v1880 = vpop.f32.mrf.mxu0
  %1881 = vmatprep.mubr.bf16.mxu0 %v321
  %1882 = vmatmul.mubr.bf16.gmra.mxu0 %v504
  %v1883 = vpop.f32.mrf.mxu0
  %v1884 = vadd.f32 0.0, %v1883
  %v1885 = vpop.f32.mrf.mxu0
  %v1886 = vpop.f32.mrf.mxu0
  %v1887 = vadd.f32 0.0, %v1886
  %v1888 = vpop.f32.mrf.mxu0
  %1889 = vmatprep.mubr.bf16.mxu0 %v322
  %1890 = vmatmul.mubr.bf16.gmra.mxu0 %v505
  %v1891 = vpop.f32.mrf.mxu0
  %v1892 = vadd.f32 0.0, %v1891
  %v1893 = vpop.f32.mrf.mxu0
  %v1894 = vpop.f32.mrf.mxu0
  %v1895 = vadd.f32 0.0, %v1894
  %v1896 = vpop.f32.mrf.mxu0
  %1897 = vmatprep.mubr.bf16.mxu0 %v323
  %1898 = vmatmul.mubr.bf16.gmra.mxu0 %v506
  %v1899 = vpop.f32.mrf.mxu0
  %v1900 = vadd.f32 0.0, %v1899
  %v1901 = vpop.f32.mrf.mxu0
  %v1902 = vpop.f32.mrf.mxu0
  %v1903 = vadd.f32 0.0, %v1902
  %v1904 = vpop.f32.mrf.mxu0
  %1905 = vmatprep.mubr.bf16.mxu0 %v324
  %1906 = vmatmul.mubr.bf16.gmra.mxu0 %v507
  %v1907 = vpop.f32.mrf.mxu0
  %v1908 = vadd.f32 0.0, %v1907
  %v1909 = vpop.f32.mrf.mxu0
  %v1910 = vpop.f32.mrf.mxu0
  %v1911 = vadd.f32 0.0, %v1910
  %v1912 = vpop.f32.mrf.mxu0
  %1913 = vmatprep.mubr.bf16.mxu0 %v325
  %1914 = vmatmul.mubr.bf16.gmra.mxu0 %v508
  %v1915 = vpop.f32.mrf.mxu0
  %v1916 = vadd.f32 0.0, %v1915
  %v1917 = vpop.f32.mrf.mxu0
  %v1918 = vpop.f32.mrf.mxu0
  %v1919 = vadd.f32 0.0, %v1918
  %v1920 = vpop.f32.mrf.mxu0
  %1921 = vmatprep.mubr.bf16.mxu0 %v326
  %1922 = vmatmul.mubr.bf16.gmra.mxu0 %v509
  %v1923 = vpop.f32.mrf.mxu0
  %v1924 = vadd.f32 0.0, %v1923
  %v1925 = vpop.f32.mrf.mxu0
  %v1926 = vpop.f32.mrf.mxu0
  %v1927 = vadd.f32 0.0, %v1926
  %v1928 = vpop.f32.mrf.mxu0
  %1929 = vmatprep.mubr.bf16.mxu0 %v327
  %1930 = vmatmul.mubr.bf16.gmra.mxu0 %v510
  %v1931 = vpop.f32.mrf.mxu0
  %v1932 = vadd.f32 0.0, %v1931
  %v1933 = vpop.f32.mrf.mxu0
  %v1934 = vpop.f32.mrf.mxu0
  %v1935 = vadd.f32 0.0, %v1934
  %v1936 = vpop.f32.mrf.mxu0
  %1937 = vmatprep.mubr.bf16.mxu0 %v328
  %1938 = vmatmul.mubr.bf16.gmra.mxu0 %v511
  %v1939 = vpop.f32.mrf.mxu0
  %v1940 = vadd.f32 0.0, %v1939
  %v1941 = vpop.f32.mrf.mxu0
  %v1942 = vpop.f32.mrf.mxu0
  %v1943 = vadd.f32 0.0, %v1942
  %v1944 = vpop.f32.mrf.mxu0
  %1945 = vmatprep.mubr.bf16.mxu0 %v329
  %1946 = vmatmul.mubr.bf16.gmra.mxu0 %v512
  %v1947 = vpop.f32.mrf.mxu0
  %v1948 = vadd.f32 0.0, %v1947
  %v1949 = vpop.f32.mrf.mxu0
  %v1950 = vpop.f32.mrf.mxu0
  %v1951 = vadd.f32 0.0, %v1950
  %v1952 = vpop.f32.mrf.mxu0
  %1953 = vmatprep.mubr.bf16.mxu0 %v330
  %1954 = vmatmul.mubr.bf16.gmra.mxu0 %v513
  %v1955 = vpop.f32.mrf.mxu0
  %v1956 = vadd.f32 0.0, %v1955
  %v1957 = vpop.f32.mrf.mxu0
  %v1958 = vpop.f32.mrf.mxu0
  %v1959 = vadd.f32 0.0, %v1958
  %v1960 = vpop.f32.mrf.mxu0
  %1961 = vmatprep.mubr.bf16.mxu0 %v331
  %1962 = vmatmul.mubr.bf16.gmra.mxu0 %v514
  %v1963 = vpop.f32.mrf.mxu0
  %v1964 = vadd.f32 0.0, %v1963
  %v1965 = vpop.f32.mrf.mxu0
  %v1966 = vpop.f32.mrf.mxu0
  %v1967 = vadd.f32 0.0, %v1966
  %v1968 = vpop.f32.mrf.mxu0
  %1969 = vmatprep.mubr.bf16.mxu0 %v332
  %1970 = vmatmul.mubr.bf16.gmra.mxu0 %v515
  %v1971 = vpop.f32.mrf.mxu0
  %v1972 = vadd.f32 0.0, %v1971
  %v1973 = vpop.f32.mrf.mxu0
  %v1974 = vpop.f32.mrf.mxu0
  %v1975 = vadd.f32 0.0, %v1974
  %v1976 = vpop.f32.mrf.mxu0
  %1977 = vmatprep.mubr.bf16.mxu0 %v333
  %1978 = vmatmul.mubr.bf16.gmra.mxu0 %v516
  %v1979 = vpop.f32.mrf.mxu0
  %v1980 = vadd.f32 0.0, %v1979
  %v1981 = vpop.f32.mrf.mxu0
  %v1982 = vpop.f32.mrf.mxu0
  %v1983 = vadd.f32 0.0, %v1982
  %v1984 = vpop.f32.mrf.mxu0
  %1985 = vmatprep.mubr.bf16.mxu0 %v334
  %1986 = vmatmul.mubr.bf16.gmra.mxu0 %v517
  %v1987 = vpop.f32.mrf.mxu0
  %v1988 = vadd.f32 0.0, %v1987
  %v1989 = vpop.f32.mrf.mxu0
  %v1990 = vpop.f32.mrf.mxu0
  %v1991 = vadd.f32 0.0, %v1990
  %v1992 = vpop.f32.mrf.mxu0
  %1993 = vdwg.mxu0
  %1994 = vmatprep.subr.bf16.mxu0 0
  %1995 = vmatpush1.bf16.msra.mxu0 %v1808
  %1996 = vmatprep.subr.bf16.mxu0 0
  %1997 = vmatpush1.bf16.msra.mxu0 %v1807
  %1998 = vmatprep.subr.bf16.mxu0 0
  %1999 = vmatpush1.bf16.msra.mxu0 %v1806
  %2000 = vmatprep.subr.bf16.mxu0 0
  %2001 = vmatpush1.bf16.msra.mxu0 %v1805
  %2002 = vmatprep.subr.bf16.mxu0 0
  %2003 = vmatpush1.bf16.msra.mxu0 %v1804
  %2004 = vmatprep.subr.bf16.mxu0 0
  %2005 = vmatpush1.bf16.msra.mxu0 %v1803
  %2006 = vmatprep.subr.bf16.mxu0 0
  %2007 = vmatpush1.bf16.msra.mxu0 %v1802
  %2008 = vmatprep.subr.bf16.mxu0 0
  %2009 = vmatpush1.bf16.msra.mxu0 %v1801
  %2010 = vmatprep.subr.bf16.mxu0 0
  %2011 = vmatpush2.bf16.msra.mxu0 0
  %2012 = vmatprep.subr.bf16.mxu0 0
  %2013 = vmatpush2.bf16.msra.mxu0 0
  %2014 = vmatprep.subr.bf16.mxu0 0
  %2015 = vmatpush2.bf16.msra.mxu0 0
  %2016 = vmatprep.subr.bf16.mxu0 0
  %2017 = vmatpush2.bf16.msra.mxu0 0
  %2018 = vmatprep.subr.bf16.mxu0 0
  %2019 = vmatpush2.bf16.msra.mxu0 0
  %2020 = vmatprep.subr.bf16.mxu0 0
  %2021 = vmatpush2.bf16.msra.mxu0 0
  %2022 = vmatprep.subr.bf16.mxu0 0
  %2023 = vmatpush2.bf16.msra.mxu0 0
  %2024 = vmatprep.subr.bf16.mxu0 0
  %2025 = vmatpush2.bf16.msra.mxu0 0
  %2026 = vmatprep.mubr.bf16.mxu0 0
  %2027 = vmatmul.mubr.bf16.gmra.mxu0 %v595
  %v2028 = vpop.f32.mrf.mxu0
  %v2029 = vadd.f32 %v1868, %v2028
  %v2030 = vpop.f32.mrf.mxu0
  %v2031 = vpop.f32.mrf.mxu0
  %v2032 = vadd.f32 %v1871, %v2031
  %v2033 = vpop.f32.mrf.mxu0
  %2034 = vmatprep.mubr.bf16.mxu0 0
  %2035 = vmatmul.mubr.bf16.gmra.mxu0 %v596
  %v2036 = vpop.f32.mrf.mxu0
  %v2037 = vadd.f32 %v1876, %v2036
  %v2038 = vpop.f32.mrf.mxu0
  %v2039 = vpop.f32.mrf.mxu0
  %v2040 = vadd.f32 %v1879, %v2039
  %v2041 = vpop.f32.mrf.mxu0
  %2042 = vmatprep.mubr.bf16.mxu0 0
  %2043 = vmatmul.mubr.bf16.gmra.mxu0 %v597
  %v2044 = vpop.f32.mrf.mxu0
  %v2045 = vadd.f32 %v1884, %v2044
  %v2046 = vpop.f32.mrf.mxu0
  %v2047 = vpop.f32.mrf.mxu0
  %v2048 = vadd.f32 %v1887, %v2047
  %v2049 = vpop.f32.mrf.mxu0
  %2050 = vmatprep.mubr.bf16.mxu0 0
  %2051 = vmatmul.mubr.bf16.gmra.mxu0 %v598
  %v2052 = vpop.f32.mrf.mxu0
  %v2053 = vadd.f32 %v1892, %v2052
  %v2054 = vpop.f32.mrf.mxu0
  %v2055 = vpop.f32.mrf.mxu0
  %v2056 = vadd.f32 %v1895, %v2055
  %v2057 = vpop.f32.mrf.mxu0
  %2058 = vmatprep.mubr.bf16.mxu0 0
  %2059 = vmatmul.mubr.bf16.gmra.mxu0 %v599
  %v2060 = vpop.f32.mrf.mxu0
  %v2061 = vadd.f32 %v1900, %v2060
  %v2062 = vpop.f32.mrf.mxu0
  %v2063 = vpop.f32.mrf.mxu0
  %v2064 = vadd.f32 %v1903, %v2063
  %v2065 = vpop.f32.mrf.mxu0
  %2066 = vmatprep.mubr.bf16.mxu0 0
  %2067 = vmatmul.mubr.bf16.gmra.mxu0 %v600
  %v2068 = vpop.f32.mrf.mxu0
  %v2069 = vadd.f32 %v1908, %v2068
  %v2070 = vpop.f32.mrf.mxu0
  %v2071 = vpop.f32.mrf.mxu0
  %v2072 = vadd.f32 %v1911, %v2071
  %v2073 = vpop.f32.mrf.mxu0
  %2074 = vmatprep.mubr.bf16.mxu0 0
  %2075 = vmatmul.mubr.bf16.gmra.mxu0 %v601
  %v2076 = vpop.f32.mrf.mxu0
  %v2077 = vadd.f32 %v1916, %v2076
  %v2078 = vpop.f32.mrf.mxu0
  %v2079 = vpop.f32.mrf.mxu0
  %v2080 = vadd.f32 %v1919, %v2079
  %v2081 = vpop.f32.mrf.mxu0
  %2082 = vmatprep.mubr.bf16.mxu0 0
  %2083 = vmatmul.mubr.bf16.gmra.mxu0 %v602
  %v2084 = vpop.f32.mrf.mxu0
  %v2085 = vadd.f32 %v1924, %v2084
  %v2086 = vpop.f32.mrf.mxu0
  %v2087 = vpop.f32.mrf.mxu0
  %v2088 = vadd.f32 %v1927, %v2087
  %v2089 = vpop.f32.mrf.mxu0
  %2090 = vmatprep.mubr.bf16.mxu0 0
  %2091 = vmatmul.mubr.bf16.gmra.mxu0 %v603
  %v2092 = vpop.f32.mrf.mxu0
  %v2093 = vadd.f32 %v1932, %v2092
  %v2094 = vpop.f32.mrf.mxu0
  %v2095 = vpop.f32.mrf.mxu0
  %v2096 = vadd.f32 %v1935, %v2095
  %v2097 = vpop.f32.mrf.mxu0
  %2098 = vmatprep.mubr.bf16.mxu0 0
  %2099 = vmatmul.mubr.bf16.gmra.mxu0 %v604
  %v2100 = vpop.f32.mrf.mxu0
  %v2101 = vadd.f32 %v1940, %v2100
  %v2102 = vpop.f32.mrf.mxu0
  %v2103 = vpop.f32.mrf.mxu0
  %v2104 = vadd.f32 %v1943, %v2103
  %v2105 = vpop.f32.mrf.mxu0
  %2106 = vmatprep.mubr.bf16.mxu0 0
  %2107 = vmatmul.mubr.bf16.gmra.mxu0 %v605
  %v2108 = vpop.f32.mrf.mxu0
  %v2109 = vadd.f32 %v1948, %v2108
  %v2110 = vpop.f32.mrf.mxu0
  %v2111 = vpop.f32.mrf.mxu0
  %v2112 = vadd.f32 %v1951, %v2111
  %v2113 = vpop.f32.mrf.mxu0
  %2114 = vmatprep.mubr.bf16.mxu0 0
  %2115 = vmatmul.mubr.bf16.gmra.mxu0 %v606
  %v2116 = vpop.f32.mrf.mxu0
  %v2117 = vadd.f32 %v1956, %v2116
  %v2118 = vpop.f32.mrf.mxu0
  %v2119 = vpop.f32.mrf.mxu0
  %v2120 = vadd.f32 %v1959, %v2119
  %v2121 = vpop.f32.mrf.mxu0
  %2122 = vmatprep.mubr.bf16.mxu0 0
  %2123 = vmatmul.mubr.bf16.gmra.mxu0 %v607
  %v2124 = vpop.f32.mrf.mxu0
  %v2125 = vadd.f32 %v1964, %v2124
  %v2126 = vpop.f32.mrf.mxu0
  %v2127 = vpop.f32.mrf.mxu0
  %v2128 = vadd.f32 %v1967, %v2127
  %v2129 = vpop.f32.mrf.mxu0
  %2130 = vmatprep.mubr.bf16.mxu0 0
  %2131 = vmatmul.mubr.bf16.gmra.mxu0 %v608
  %v2132 = vpop.f32.mrf.mxu0
  %v2133 = vadd.f32 %v1972, %v2132
  %v2134 = vpop.f32.mrf.mxu0
  %v2135 = vpop.f32.mrf.mxu0
  %v2136 = vadd.f32 %v1975, %v2135
  %v2137 = vpop.f32.mrf.mxu0
  %2138 = vmatprep.mubr.bf16.mxu0 0
  %2139 = vmatmul.mubr.bf16.gmra.mxu0 %v609
  %v2140 = vpop.f32.mrf.mxu0
  %v2141 = vadd.f32 %v1980, %v2140
  %v2142 = vpop.f32.mrf.mxu0
  %v2143 = vpop.f32.mrf.mxu0
  %v2144 = vadd.f32 %v1983, %v2143
  %v2145 = vpop.f32.mrf.mxu0
  %2146 = vmatprep.mubr.bf16.mxu0 0
  %2147 = vmatmul.mubr.bf16.gmra.mxu0 %v610
  %v2148 = vpop.f32.mrf.mxu0
  %v2149 = vadd.f32 %v1988, %v2148
  %v2150 = vpop.f32.mrf.mxu0
  %v2151 = vpop.f32.mrf.mxu0
  %v2152 = vadd.f32 %v1991, %v2151
  %v2153 = vpop.f32.mrf.mxu0
  %2154 = vdwg.mxu0
  %v2155 = vadd.f32 %v1514, %v2029
  %v2156 = vadd.f32 %v1517, %v2032
  %v2157 = vadd.f32 %v1522, %v2037
  %v2158 = vadd.f32 %v1525, %v2040
  %v2159 = vadd.f32 %v1530, %v2045
  %v2160 = vadd.f32 %v1533, %v2048
  %v2161 = vadd.f32 %v1538, %v2053
  %v2162 = vadd.f32 %v1541, %v2056
  %v2163 = vadd.f32 %v1546, %v2061
  %v2164 = vadd.f32 %v1549, %v2064
  %v2165 = vadd.f32 %v1554, %v2069
  %v2166 = vadd.f32 %v1557, %v2072
  %v2167 = vadd.f32 %v1562, %v2077
  %v2168 = vadd.f32 %v1565, %v2080
  %v2169 = vadd.f32 %v1570, %v2085
  %v2170 = vadd.f32 %v1573, %v2088
  %v2171 = vadd.f32 %v1578, %v2093
  %v2172 = vadd.f32 %v1581, %v2096
  %v2173 = vadd.f32 %v1586, %v2101
  %v2174 = vadd.f32 %v1589, %v2104
  %v2175 = vadd.f32 %v1594, %v2109
  %v2176 = vadd.f32 %v1597, %v2112
  %v2177 = vadd.f32 %v1602, %v2117
  %v2178 = vadd.f32 %v1605, %v2120
  %v2179 = vadd.f32 %v1610, %v2125
  %v2180 = vadd.f32 %v1613, %v2128
  %v2181 = vadd.f32 %v1618, %v2133
  %v2182 = vadd.f32 %v1621, %v2136
  %v2183 = vadd.f32 %v1626, %v2141
  %v2184 = vadd.f32 %v1629, %v2144
  %v2185 = vadd.f32 %v1634, %v2149
  %v2186 = vadd.f32 %v1637, %v2152
  %v2187 = vld [vmem:[%s2] sm:$0x1]
  %v2189 = vlaneseq
  %v2190 = vshrl.u32 %v2189, 7
  %v2191 = vsub.s32 0, %v2190
  %v2192 = vrot.slane %v2187, %v2191
  %v2194 = vadd.f32 %v2155, %v2192
  %v2195 = vadd.f32 %v2156, %v2192
  %v2196 = vadd.f32 %v2157, %v2192
  %v2197 = vadd.f32 %v2158, %v2192
  %v2198 = vadd.f32 %v2159, %v2192
  %v2199 = vadd.f32 %v2160, %v2192
  %v2200 = vadd.f32 %v2161, %v2192
  %v2201 = vadd.f32 %v2162, %v2192
  %v2202 = vadd.f32 %v2163, %v2192
  %v2203 = vadd.f32 %v2164, %v2192
  %v2204 = vadd.f32 %v2165, %v2192
  %v2205 = vadd.f32 %v2166, %v2192
  %v2206 = vadd.f32 %v2167, %v2192
  %v2207 = vadd.f32 %v2168, %v2192
  %v2208 = vadd.f32 %v2169, %v2192
  %v2209 = vadd.f32 %v2170, %v2192
  %v2210 = vadd.f32 %v2171, %v2192
  %v2211 = vadd.f32 %v2172, %v2192
  %v2212 = vadd.f32 %v2173, %v2192
  %v2213 = vadd.f32 %v2174, %v2192
  %v2214 = vadd.f32 %v2175, %v2192
  %v2215 = vadd.f32 %v2176, %v2192
  %v2216 = vadd.f32 %v2177, %v2192
  %v2217 = vadd.f32 %v2178, %v2192
  %v2218 = vadd.f32 %v2179, %v2192
  %v2219 = vadd.f32 %v2180, %v2192
  %v2220 = vadd.f32 %v2181, %v2192
  %v2221 = vadd.f32 %v2182, %v2192
  %v2222 = vadd.f32 %v2183, %v2192
  %v2223 = vadd.f32 %v2184, %v2192
  %v2224 = vadd.f32 %v2185, %v2192
  %v2225 = vadd.f32 %v2186, %v2192
  %v2226 = vpack.c.bf16 %v2195, %v2194
  %v2227 = vpack.c.bf16 %v2197, %v2196
  %v2228 = vpack.c.bf16 %v2199, %v2198
  %v2229 = vpack.c.bf16 %v2201, %v2200
  %v2230 = vpack.c.bf16 %v2203, %v2202
  %v2231 = vpack.c.bf16 %v2205, %v2204
  %v2232 = vpack.c.bf16 %v2207, %v2206
  %v2233 = vpack.c.bf16 %v2209, %v2208
  %v2234 = vpack.c.bf16 %v2211, %v2210
  %v2235 = vpack.c.bf16 %v2213, %v2212
  %v2236 = vpack.c.bf16 %v2215, %v2214
  %v2237 = vpack.c.bf16 %v2217, %v2216
  %v2238 = vpack.c.bf16 %v2219, %v2218
  %v2239 = vpack.c.bf16 %v2221, %v2220
  %v2240 = vpack.c.bf16 %v2223, %v2222
  %v2241 = vpack.c.bf16 %v2225, %v2224
  %v2258 = vunpack.c.l.b16 %v2226
  %v2259 = vunpack.c.h.b16 %v2226
  %v2260 = vunpack.c.l.b16 %v2227
  %v2261 = vunpack.c.h.b16 %v2227
  %v2262 = vunpack.c.l.b16 %v2228
  %v2263 = vunpack.c.h.b16 %v2228
  %v2264 = vunpack.c.l.b16 %v2229
  %v2265 = vunpack.c.h.b16 %v2229
  %v2266 = vunpack.c.l.b16 %v2230
  %v2267 = vunpack.c.h.b16 %v2230
  %v2268 = vunpack.c.l.b16 %v2231
  %v2269 = vunpack.c.h.b16 %v2231
  %v2270 = vunpack.c.l.b16 %v2232
  %v2271 = vunpack.c.h.b16 %v2232
  %v2272 = vunpack.c.l.b16 %v2233
  %v2273 = vunpack.c.h.b16 %v2233
  %v2274 = vunpack.c.l.b16 %v2234
  %v2275 = vunpack.c.h.b16 %v2234
  %v2276 = vunpack.c.l.b16 %v2235
  %v2277 = vunpack.c.h.b16 %v2235
  %v2278 = vunpack.c.l.b16 %v2236
  %v2279 = vunpack.c.h.b16 %v2236
  %v2280 = vunpack.c.l.b16 %v2237
  %v2281 = vunpack.c.h.b16 %v2237
  %v2282 = vunpack.c.l.b16 %v2238
  %v2283 = vunpack.c.h.b16 %v2238
  %v2284 = vunpack.c.l.b16 %v2239
  %v2285 = vunpack.c.h.b16 %v2239
  %v2286 = vunpack.c.l.b16 %v2240
  %v2287 = vunpack.c.h.b16 %v2240
  %v2288 = vunpack.c.l.b16 %v2241
  %v2289 = vunpack.c.h.b16 %v2241
  %v2290 = vpack.c.b16 %v2258, %v2258
  %v2291 = vpack.c.b16 %v2259, %v2259
  %v2292 = vpack.c.b16 %v2260, %v2260
  %v2293 = vpack.c.b16 %v2261, %v2261
  %v2294 = vpack.c.b16 %v2262, %v2262
  %v2295 = vpack.c.b16 %v2263, %v2263
  %v2296 = vpack.c.b16 %v2264, %v2264
  %v2297 = vpack.c.b16 %v2265, %v2265
  %v2298 = vpack.c.b16 %v2266, %v2266
  %v2299 = vpack.c.b16 %v2267, %v2267
  %v2300 = vpack.c.b16 %v2268, %v2268
  %v2301 = vpack.c.b16 %v2269, %v2269
  %v2302 = vpack.c.b16 %v2270, %v2270
  %v2303 = vpack.c.b16 %v2271, %v2271
  %v2304 = vpack.c.b16 %v2272, %v2272
  %v2305 = vpack.c.b16 %v2273, %v2273
  %v2306 = vpack.c.b16 %v2274, %v2274
  %v2307 = vpack.c.b16 %v2275, %v2275
  %v2308 = vpack.c.b16 %v2276, %v2276
  %v2309 = vpack.c.b16 %v2277, %v2277
  %v2310 = vpack.c.b16 %v2278, %v2278
  %v2311 = vpack.c.b16 %v2279, %v2279
  %v2312 = vpack.c.b16 %v2280, %v2280
  %v2313 = vpack.c.b16 %v2281, %v2281
  %v2314 = vpack.c.b16 %v2282, %v2282
  %v2315 = vpack.c.b16 %v2283, %v2283
  %v2316 = vpack.c.b16 %v2284, %v2284
  %v2317 = vpack.c.b16 %v2285, %v2285
  %v2318 = vpack.c.b16 %v2286, %v2286
  %v2319 = vpack.c.b16 %v2287, %v2287
  %v2320 = vpack.c.b16 %v2288, %v2288
  %v2321 = vpack.c.b16 %v2289, %v2289
  %2354 = vst [vmem:[%s6] sm:$0xf] %v2290
  %2355 = vst [vmem:[%s6 + $0x4] sm:$0xf] %v2291
  %2356 = vst [vmem:[%s6 + $0x8] sm:$0xf] %v2292
  %2357 = vst [vmem:[%s6 + $0xc] sm:$0xf] %v2293
  %2358 = vst [vmem:[%s6 + $0x10] sm:$0xf] %v2294
  %2359 = vst [vmem:[%s6 + $0x14] sm:$0xf] %v2295
  %2360 = vst [vmem:[%s6 + $0x18] sm:$0xf] %v2296
  %2361 = vst [vmem:[%s6 + $0x1c] sm:$0xf] %v2297
  %2362 = vst [vmem:[%s6 + $0x20] sm:$0xf] %v2298
  %2363 = vst [vmem:[%s6 + $0x24] sm:$0xf] %v2299
  %2364 = vst [vmem:[%s6 + $0x28] sm:$0xf] %v2300
  %2365 = vst [vmem:[%s6 + $0x2c] sm:$0xf] %v2301
  %2366 = vst [vmem:[%s6 + $0x30] sm:$0xf] %v2302
  %2367 = vst [vmem:[%s6 + $0x34] sm:$0xf] %v2303
  %2368 = vst [vmem:[%s6 + $0x38] sm:$0xf] %v2304
  %2369 = vst [vmem:[%s6 + $0x3c] sm:$0xf] %v2305
  %2370 = vst [vmem:[%s6 + $0x40] sm:$0xf] %v2306
  %2371 = vst [vmem:[%s6 + $0x44] sm:$0xf] %v2307
  %2372 = vst [vmem:[%s6 + $0x48] sm:$0xf] %v2308
  %2373 = vst [vmem:[%s6 + $0x4c] sm:$0xf] %v2309
  %2374 = vst [vmem:[%s6 + $0x50] sm:$0xf] %v2310
  %2375 = vst [vmem:[%s6 + $0x54] sm:$0xf] %v2311
  %2376 = vst [vmem:[%s6 + $0x58] sm:$0xf] %v2312
  %2377 = vst [vmem:[%s6 + $0x5c] sm:$0xf] %v2313
  %2378 = vst [vmem:[%s6 + $0x60] sm:$0xf] %v2314
  %2379 = vst [vmem:[%s6 + $0x64] sm:$0xf] %v2315
  %2380 = vst [vmem:[%s6 + $0x68] sm:$0xf] %v2316
  %2381 = vst [vmem:[%s6 + $0x6c] sm:$0xf] %v2317
  %2382 = vst [vmem:[%s6 + $0x70] sm:$0xf] %v2318
  %2383 = vst [vmem:[%s6 + $0x74] sm:$0xf] %v2319
  %2384 = vst [vmem:[%s6 + $0x78] sm:$0xf] %v2320
  %2385 = vst [vmem:[%s6 + $0x7c] sm:$0xf] %v2321
  %v2386 = vadd.f32 %v2194, %v2195
  %v2387 = vadd.f32 %v2386, %v2196
  %v2388 = vadd.f32 %v2387, %v2197
  %v2389 = vadd.f32 %v2388, %v2198
  %v2390 = vadd.f32 %v2389, %v2199
  %v2391 = vadd.f32 %v2390, %v2200
  %v2392 = vadd.f32 %v2391, %v2201
  %v2393 = vadd.f32 %v2392, %v2202
  %v2394 = vadd.f32 %v2393, %v2203
  %v2395 = vadd.f32 %v2394, %v2204
  %v2396 = vadd.f32 %v2395, %v2205
  %v2397 = vadd.f32 %v2396, %v2206
  %v2398 = vadd.f32 %v2397, %v2207
  %v2399 = vadd.f32 %v2398, %v2208
  %v2400 = vadd.f32 %v2399, %v2209
  %v2401 = vadd.f32 %v2400, %v2210
  %v2402 = vadd.f32 %v2401, %v2211
  %v2403 = vadd.f32 %v2402, %v2212
  %v2404 = vadd.f32 %v2403, %v2213
  %v2405 = vadd.f32 %v2404, %v2214
  %v2406 = vadd.f32 %v2405, %v2215
  %v2407 = vadd.f32 %v2406, %v2216
  %v2408 = vadd.f32 %v2407, %v2217
  %v2409 = vadd.f32 %v2408, %v2218
  %v2410 = vadd.f32 %v2409, %v2219
  %v2411 = vadd.f32 %v2410, %v2220
  %v2412 = vadd.f32 %v2411, %v2221
  %v2413 = vadd.f32 %v2412, %v2222
  %v2414 = vadd.f32 %v2413, %v2223
  %v2415 = vadd.f32 %v2414, %v2224
  %v2416 = vadd.f32 %v2415, %v2225
  %v2417 = vrot.slane %v2416, 4
  %v2418 = vadd.f32 %v2416, %v2417
  %v2419 = vrot.slane %v2418, 2
  %v2420 = vadd.f32 %v2418, %v2419
  %v2421 = vrot.slane %v2420, 1
  %v2422 = vadd.f32 %v2420, %v2421
  %v2423 = vmul.f32 %v2194, %v2194
  %v2424 = vmul.f32 %v2195, %v2195
  %v2425 = vmul.f32 %v2196, %v2196
  %v2426 = vmul.f32 %v2197, %v2197
  %v2427 = vmul.f32 %v2198, %v2198
  %v2428 = vmul.f32 %v2199, %v2199
  %v2429 = vmul.f32 %v2200, %v2200
  %v2430 = vmul.f32 %v2201, %v2201
  %v2431 = vmul.f32 %v2202, %v2202
  %v2432 = vmul.f32 %v2203, %v2203
  %v2433 = vmul.f32 %v2204, %v2204
  %v2434 = vmul.f32 %v2205, %v2205
  %v2435 = vmul.f32 %v2206, %v2206
  %v2436 = vmul.f32 %v2207, %v2207
  %v2437 = vmul.f32 %v2208, %v2208
  %v2438 = vmul.f32 %v2209, %v2209
  %v2439 = vmul.f32 %v2210, %v2210
  %v2440 = vmul.f32 %v2211, %v2211
  %v2441 = vmul.f32 %v2212, %v2212
  %v2442 = vmul.f32 %v2213, %v2213
  %v2443 = vmul.f32 %v2214, %v2214
  %v2444 = vmul.f32 %v2215, %v2215
  %v2445 = vmul.f32 %v2216, %v2216
  %v2446 = vmul.f32 %v2217, %v2217
  %v2447 = vmul.f32 %v2218, %v2218
  %v2448 = vmul.f32 %v2219, %v2219
  %v2449 = vmul.f32 %v2220, %v2220
  %v2450 = vmul.f32 %v2221, %v2221
  %v2451 = vmul.f32 %v2222, %v2222
  %v2452 = vmul.f32 %v2223, %v2223
  %v2453 = vmul.f32 %v2224, %v2224
  %v2454 = vmul.f32 %v2225, %v2225
  %v2455 = vadd.f32 %v2423, %v2424
  %v2456 = vadd.f32 %v2455, %v2425
  %v2457 = vadd.f32 %v2456, %v2426
  %v2458 = vadd.f32 %v2457, %v2427
  %v2459 = vadd.f32 %v2458, %v2428
  %v2460 = vadd.f32 %v2459, %v2429
  %v2461 = vadd.f32 %v2460, %v2430
  %v2462 = vadd.f32 %v2461, %v2431
  %v2463 = vadd.f32 %v2462, %v2432
  %v2464 = vadd.f32 %v2463, %v2433
  %v2465 = vadd.f32 %v2464, %v2434
  %v2466 = vadd.f32 %v2465, %v2435
  %v2467 = vadd.f32 %v2466, %v2436
  %v2468 = vadd.f32 %v2467, %v2437
  %v2469 = vadd.f32 %v2468, %v2438
  %v2470 = vadd.f32 %v2469, %v2439
  %v2471 = vadd.f32 %v2470, %v2440
  %v2472 = vadd.f32 %v2471, %v2441
  %v2473 = vadd.f32 %v2472, %v2442
  %v2474 = vadd.f32 %v2473, %v2443
  %v2475 = vadd.f32 %v2474, %v2444
  %v2476 = vadd.f32 %v2475, %v2445
  %v2477 = vadd.f32 %v2476, %v2446
  %v2478 = vadd.f32 %v2477, %v2447
  %v2479 = vadd.f32 %v2478, %v2448
  %v2480 = vadd.f32 %v2479, %v2449
  %v2481 = vadd.f32 %v2480, %v2450
  %v2482 = vadd.f32 %v2481, %v2451
  %v2483 = vadd.f32 %v2482, %v2452
  %v2484 = vadd.f32 %v2483, %v2453
  %v2485 = vadd.f32 %v2484, %v2454
  %v2486 = vrot.slane %v2485, 4
  %v2487 = vadd.f32 %v2485, %v2486
  %v2488 = vrot.slane %v2487, 2
  %v2489 = vadd.f32 %v2487, %v2488
  %v2490 = vrot.slane %v2489, 1
  %v2491 = vadd.f32 %v2489, %v2490
  %vm2492 = vcmask 1040384
  %v2493 = vsel %vm2492, %v2422, %v2491
  %2494 = vst [vmem:[%s7] sm:$0x3] %v2493
  // Predicated region
  $region26: #{resnet_gen_shared.7} parent=0 // pred_check
    _
  $region27: #{resnet_gen_shared.7} parent=0 // pred_check_branch
    %2496 = sbr.rel (0) target = $region29
  $region28: #{resnet_gen_shared.7} parent=0 // pred_region
    _
  $region29: #{resnet_gen_shared.7} parent=0 // pred_fallthru
    _
  // Predicated region
  $region30: #{resnet_gen_shared.7} parent=0 // pred_check
    _
  $region31: #{resnet_gen_shared.7} parent=0 // pred_check_branch
    %2498 = sbr.rel (0) target = $region33
  $region32: #{resnet_gen_shared.7} parent=0 // pred_region
    _
  $region33: #{resnet_gen_shared.7} parent=0 // pred_fallthru
    _
  // Predicated region
  $region34: #{resnet_gen_shared.7} parent=0 // pred_check
    _
  $region35: #{resnet_gen_shared.7} parent=0 // pred_check_branch
    %2500 = sbr.rel (0) target = $region37
  $region36: #{resnet_gen_shared.7} parent=0 // pred_region
    _
  $region37: #{resnet_gen_shared.7} parent=0 // pred_fallthru
    _
  // Predicated region
  $region38: #{resnet_gen_shared.7} parent=0 // pred_check
    _
  $region39: #{resnet_gen_shared.7} parent=0 // pred_check_branch
    %2502 = sbr.rel (0) target = $region41
  $region40: #{resnet_gen_shared.7} parent=0 // pred_region
    _
  $region41: #{resnet_gen_shared.7} parent=0 // pred_fallthru
    _

</llo_original>
